<compile_context>
chip_gen: v7x
topology: tpu7x:2x2x1
jax: 0.10.0
libtpu: 0.0.40
codegen_flags: <defaults>
</compile_context>

<pallas_src>
import functools

import jax
import jax.numpy as jnp
from jax.experimental import pallas as pl
from jax.experimental.pallas import tpu as pltpu

LEAKY_SLOPE = 0.01   # nn.LeakyReLU default negative_slope
BN_EPS = 1e-5


def _leaky_relu(x):
    return jnp.where(x > 0, x, LEAKY_SLOPE * x)


def _round_up(n, m):
    return ((n + m - 1) // m) * m


# --------------------------------------------------------------------------------------
# Kernel (feature-major: activations are (features, batch) with batch on the lane axis)
# --------------------------------------------------------------------------------------
def _vae_kernel(in_dim, x_dim, z_dim, apply_sigmoid, bias_col,
                r_e1, r_dx, r_b, r_ml, r_hz, r_d, r_e,
                t_ref, x_ref, p_ref, o_ref):
    f32 = jnp.float32
    hi = jax.lax.Precision.HIGHEST

    def mm(w, a):                                     # tiny MXU matmuls; compute ~ free
        return jnp.dot(w, a, precision=hi, preferred_element_type=f32)

    t = t_ref[...].astype(f32)                        # (in_dim, TB) bf16 stream -> f32
    x = x_ref[...].astype(f32)                        # (x_dim, TB)

    bc = bias_col
    # ---- packed, VMEM-resident parameter slab (static slices, 8-aligned row offsets) ----
    w_e1 = p_ref[r_e1:r_e1 + 16, 0:in_dim]            # encoder Linear(in,16)^T
    b_e1 = p_ref[r_e1:r_e1 + 16, bc:bc + 1]
    w_dx = p_ref[r_dx:r_dx + 16, 0:x_dim]             # decoder x-branch of Linear(z+x,16)^T
    w_b = p_ref[r_b:r_b + 16, 0:16]                   # BN16-folded encoder Linear(16,16)^T
    b_b = p_ref[r_b:r_b + 16, bc:bc + 1]
    w_ml = p_ref[r_ml:r_ml + 2 * z_dim, 0:16]         # [mean | log_var] heads^T
    b_ml = p_ref[r_ml:r_ml + 2 * z_dim, bc:bc + 1]
    w_hz = p_ref[r_hz:r_hz + 16, 0:16]                # decoder z-branch folded via z = mean
    b_hz = p_ref[r_hz:r_hz + 16, bc:bc + 1]
    w_d = p_ref[r_d:r_d + 8, 0:16]                    # BN16-folded decoder Linear(16,8)^T
    b_d = p_ref[r_d:r_d + 8, bc:bc + 1]
    w_e = p_ref[r_e:r_e + in_dim, 0:8]                # BN8-folded decoder Linear(8,in)^T
    b_e = p_ref[r_e:r_e + in_dim, bc:bc + 1]

    # ---- encoder (eval: Dropout = identity, BN folded into the following Linear) ----
    h1 = _leaky_relu(mm(w_e1, t) + b_e1)              # (16, TB)
    h2 = _leaky_relu(mm(w_b, h1) + b_b)               # (16, TB)

    # ---- heads: [mean | log_var]; decoder z-branch folded through z = mean (eval) ----
    mean_lv = mm(w_ml, h2) + b_ml                     # (2*z_dim, TB)
    dz = mm(w_hz, h2) + b_hz                          # (16, TB)

    # ---- decoder (bias-free Linear(z+x,16) split: z-branch above, x-branch here) ----
    xd = mm(w_dx, x)                                  # (16, TB)
    d1 = _leaky_relu(dz + xd)
    d2 = _leaky_relu(mm(w_d, d1) + b_d)               # (8, TB)
    dec = mm(w_e, d2) + b_e                           # (in_dim, TB)
    if apply_sigmoid:                                 # target == 'D'
        dec = jax.nn.sigmoid(dec)

    # ---- lane-dense fused output slab [mean | log_var | decoded]: two contiguous
    #      sublane-row stores, no in-kernel concatenate ----
    o_ref[0:2 * z_dim, :] = mean_lv.astype(o_ref.dtype)
    o_ref[2 * z_dim:2 * z_dim + in_dim, :] = dec.astype(o_ref.dtype)


# --------------------------------------------------------------------------------------
# Parameter construction / folding / packing (wrapper side, runs once)
# --------------------------------------------------------------------------------------
def _fold_bn(gamma, beta, rmean, rvar, eps=BN_EPS):
    scale = gamma / jnp.sqrt(rvar + eps)
    shift = beta - rmean * scale
    return scale, shift


def init_raw_params(key, in_dim, z_dim, x_dim):
    """Deterministic synthetic parameters (weights stored as (in, out), biases 1-D)."""
    ks = iter(jax.random.split(key, 32))

    def w(shape, s=0.1):
        return (s * jax.random.normal(next(ks), shape)).astype(jnp.float32)

    zc = z_dim + x_dim
    p = {}
    # Encoder
    p["e_w1"], p["e_b1"] = w((in_dim, 16)), w((16,))
    p["e_bn1_g"] = 1.0 + w((16,)); p["e_bn1_b"] = w((16,))
    p["e_bn1_m"] = w((16,)); p["e_bn1_v"] = 1.0 + jnp.abs(w((16,)))
    p["e_w2"], p["e_b2"] = w((16, 16)), w((16,))
    p["mean_w"], p["mean_b"] = w((16, z_dim)), w((z_dim,))
    p["lv_w"], p["lv_b"] = w((16, z_dim)), w((z_dim,))
    # Decoder
    p["d_w1"] = w((zc, 16))                            # Linear(zc,16, bias=False)
    p["d_bn1_g"] = 1.0 + w((16,)); p["d_bn1_b"] = w((16,))
    p["d_bn1_m"] = w((16,)); p["d_bn1_v"] = 1.0 + jnp.abs(w((16,)))
    p["d_w2"], p["d_b2"] = w((16, 8)), w((8,))
    p["d_bn2_g"] = 1.0 + w((8,)); p["d_bn2_b"] = w((8,))
    p["d_bn2_m"] = w((8,)); p["d_bn2_v"] = 1.0 + jnp.abs(w((8,)))
    p["d_w3"], p["d_b3"] = w((8, in_dim)), w((in_dim,))
    return p


def pack_params(raw, in_dim, z_dim, x_dim):
    """Fold eval-mode BN / z=mean / concat algebra and pack the TRANSPOSED weights plus
    bias columns into a single f32 slab with 8-aligned row offsets."""
    # encoder BN(16) -> encoder Linear(16,16)
    s1, t1 = _fold_bn(raw["e_bn1_g"], raw["e_bn1_b"], raw["e_bn1_m"], raw["e_bn1_v"])
    w_b_io = raw["e_w2"] * s1[:, None]
    b_b = raw["e_b2"] + t1 @ raw["e_w2"]

    # decoder BN(16) -> Linear(16,8) ; decoder BN(8) -> Linear(8,in_dim)
    sd1, td1 = _fold_bn(raw["d_bn1_g"], raw["d_bn1_b"], raw["d_bn1_m"], raw["d_bn1_v"])
    w_d_io = raw["d_w2"] * sd1[:, None]
    b_d = raw["d_b2"] + td1 @ raw["d_w2"]
    sd2, td2 = _fold_bn(raw["d_bn2_g"], raw["d_bn2_b"], raw["d_bn2_m"], raw["d_bn2_v"])
    w_e_io = raw["d_w3"] * sd2[:, None]
    b_e = raw["d_b3"] + td2 @ raw["d_w3"]

    # decoder first (bias-free) linear on concat([z, x]): split z / x branches,
    # z-branch folded through z = mean (eval-mode sample()).
    d_w1_z = raw["d_w1"][:z_dim]                       # (z_dim, 16)
    d_w1_x = raw["d_w1"][z_dim:]                       # (x_dim, 16)
    w_hz_io = raw["mean_w"] @ d_w1_z                   # (16, 16)
    b_hz = raw["mean_b"] @ d_w1_z                      # (16,)

    # fused [mean | log_var] head
    w_ml_io = jnp.concatenate([raw["mean_w"], raw["lv_w"]], axis=1)   # (16, 2*z_dim)
    b_ml = jnp.concatenate([raw["mean_b"], raw["lv_b"]])              # (2*z_dim,)

    # ---- slab layout: all blocks start at sublane-aligned (multiple-of-8) rows ----
    r_e1 = 0
    r_dx = 16
    r_b = 32
    r_ml = 48
    r_hz = r_ml + _round_up(2 * z_dim, 8)
    r_d = r_hz + 16
    r_e = r_d + 8
    rows = r_e + _round_up(max(in_dim, 8), 8)

    bias_col = _round_up(max(16, in_dim, x_dim), 8)    # lane column holding bias vectors
    cols = _round_up(bias_col + 1, 128)

    slab = jnp.zeros((rows, cols), jnp.float32)

    def put_w(s, r, w_io):                              # store transposed (out, in)
        wt = w_io.T
        return s.at[r:r + wt.shape[0], 0:wt.shape[1]].set(wt)

    def put_b(s, r, b):
        return s.at[r:r + b.shape[0], bias_col:bias_col + 1].set(b[:, None])

    slab = put_w(slab, r_e1, raw["e_w1"]); slab = put_b(slab, r_e1, raw["e_b1"])
    slab = put_w(slab, r_dx, d_w1_x)                    # bias-free branch
    slab = put_w(slab, r_b, w_b_io);       slab = put_b(slab, r_b, b_b)
    slab = put_w(slab, r_ml, w_ml_io);     slab = put_b(slab, r_ml, b_ml)
    slab = put_w(slab, r_hz, w_hz_io);     slab = put_b(slab, r_hz, b_hz)
    slab = put_w(slab, r_d, w_d_io);       slab = put_b(slab, r_d, b_d)
    slab = put_w(slab, r_e, w_e_io);       slab = put_b(slab, r_e, b_e)

    offsets = dict(r_e1=r_e1, r_dx=r_dx, r_b=r_b, r_ml=r_ml, r_hz=r_hz,
                   r_d=r_d, r_e=r_e, bias_col=bias_col)
    return slab, offsets


# --------------------------------------------------------------------------------------
# Forward wrappers
# --------------------------------------------------------------------------------------
def vae_forward_feature_major(t_fm, x_fm, slab, offsets, *, z_dim, target="D",
                              block_batch=4096):
    """Core pallas call. Inputs feature-major: t_fm (in_dim, B), x_fm (x_dim, B).
    Returns the fused feature-major output slab (2*z_dim + in_dim, B)."""
    in_dim, b = t_fm.shape
    x_dim, bx = x_fm.shape
    assert bx == b
    out_w = 2 * z_dim + in_dim

    # Batch tile lives on the lane axis: multiple of 128 (or the full batch), capped so
    # the grid has >= 2 steps whenever possible (keeps both v7x TensorCores busy).
    if b <= 256:
        tb = b
    else:
        tb = min(_round_up(block_batch, 128), _round_up(pl.cdiv(b, 2), 128))
    grid = (pl.cdiv(b, tb),)

    kernel = functools.partial(
        _vae_kernel, in_dim, x_dim, z_dim, target == "D", offsets["bias_col"],
        offsets["r_e1"], offsets["r_dx"], offsets["r_b"], offsets["r_ml"],
        offsets["r_hz"], offsets["r_d"], offsets["r_e"])

    return pl.pallas_call(
        kernel,
        out_shape=jax.ShapeDtypeStruct((out_w, b), t_fm.dtype),
        grid_spec=pltpu.PrefetchScalarGridSpec(
            num_scalar_prefetch=0,
            grid=grid,
            in_specs=[
                pl.BlockSpec((in_dim, tb), lambda i: (0, i)),    # lane-dense activations
                pl.BlockSpec((x_dim, tb), lambda i: (0, i)),
                # Constant index_map -> slab stays VMEM-resident, never re-fetched.
                pl.BlockSpec(slab.shape, lambda i: (0, 0)),
            ],
            out_specs=pl.BlockSpec((out_w, tb), lambda i: (0, i)),  # lane-dense fused slab
        ),
        compiler_params=pltpu.CompilerParams(
            dimension_semantics=("parallel",)),                     # shard batch across TCs
    )(t_fm, x_fm, slab)


def vae_forward(target_arr, x_arr, slab, offsets, *, z_dim, target="D",
                block_batch=4096, stream_dtype=jnp.bfloat16):
    """Module-API adapter: takes (B, in_dim)/(B, x_dim) like the PyTorch module and
    returns (mean, log_var, decoded). The boundary transpose+cast ops are tiny and are
    avoidable entirely if the producer keeps activations feature-major / bf16."""
    t_fm = target_arr.T.astype(stream_dtype)
    x_fm = x_arr.T.astype(stream_dtype)
    out = vae_forward_feature_major(t_fm, x_fm, slab, offsets, z_dim=z_dim,
                                    target=target, block_batch=block_batch)
    # Feature-major splits are contiguous row slices (no narrow column gathers).
    mean = out[:z_dim].T.astype(jnp.float32)
    log_var = out[z_dim:2 * z_dim].T.astype(jnp.float32)
    decoded = out[2 * z_dim:].T.astype(jnp.float32)
    return mean, log_var, decoded


# --------------------------------------------------------------------------------------
# Pure-JAX reference (unfolded, mirrors the PyTorch graph in eval mode)
# --------------------------------------------------------------------------------------
def vae_reference(target_arr, x_arr, raw, *, target="D"):
    def bn(v, g, b_, m, var):
        return (v - m) / jnp.sqrt(var + BN_EPS) * g + b_

    with jax.default_matmul_precision("highest"):
        h = _leaky_relu(target_arr @ raw["e_w1"] + raw["e_b1"])
        h = bn(h, raw["e_bn1_g"], raw["e_bn1_b"], raw["e_bn1_m"], raw["e_bn1_v"])
        h = _leaky_relu(h @ raw["e_w2"] + raw["e_b2"])
        mean = h @ raw["mean_w"] + raw["mean_b"]
        log_var = h @ raw["lv_w"] + raw["lv_b"]
        z = mean                                        # eval-mode sample()
        zc = jnp.concatenate([z, x_arr], axis=-1)
        d = _leaky_relu(zc @ raw["d_w1"])
        d = bn(d, raw["d_bn1_g"], raw["d_bn1_b"], raw["d_bn1_m"], raw["d_bn1_v"])
        d = _leaky_relu(d @ raw["d_w2"] + raw["d_b2"])
        d = bn(d, raw["d_bn2_g"], raw["d_bn2_b"], raw["d_bn2_m"], raw["d_bn2_v"])
        d = d @ raw["d_w3"] + raw["d_b3"]
        if target == "D":
            d = jax.nn.sigmoid(d)
    return mean, log_var, d


if __name__ == "__main__":
    B, IN_DIM, Z_DIM, X_DIM = 512, 4, 3, 5
    TARGET = "D"

    key = jax.random.PRNGKey(0)
    k_t, k_x, k_p = jax.random.split(key, 3)
    target_in = jax.random.normal(k_t, (B, IN_DIM), dtype=jnp.float32)
    x_in = jax.random.normal(k_x, (B, X_DIM), dtype=jnp.float32)

    raw = init_raw_params(k_p, IN_DIM, Z_DIM, X_DIM)
    slab, offsets = pack_params(raw, IN_DIM, Z_DIM, X_DIM)

    mean, log_var, decoded = vae_forward(target_in, x_in, slab, offsets,
                                         z_dim=Z_DIM, target=TARGET)
    jax.block_until_ready((mean, log_var, decoded))

    # Reference on the bf16-quantized activation streams (isolates kernel error from the
    # intended stream quantization); kernel params / arithmetic are f32.
    t_q = target_in.astype(jnp.bfloat16).astype(jnp.float32)
    x_q = x_in.astype(jnp.bfloat16).astype(jnp.float32)
    mean_r, lv_r, dec_r = vae_reference(t_q, x_q, raw, target=TARGET)

    assert mean.shape == (B, Z_DIM)
    assert log_var.shape == (B, Z_DIM)
    assert decoded.shape == (B, IN_DIM)
    assert bool(jnp.all(jnp.isfinite(mean)))
    assert bool(jnp.all(jnp.isfinite(log_var)))
    assert bool(jnp.all((decoded >= 0.0) & (decoded <= 1.0)))      # sigmoid range (target='D')
    assert bool(jnp.allclose(mean, mean_r, atol=2e-3, rtol=2e-2))
    assert bool(jnp.allclose(log_var, lv_r, atol=2e-3, rtol=2e-2))
    assert bool(jnp.allclose(decoded, dec_r, atol=2e-3, rtol=2e-2))
    print("KERNEL_OK")
</pallas_src>

<mosaic_0001>
module attributes {stable_mosaic.version = 11 : i64} {
  func.func @_vae_kernel(%arg0: i32, %arg1: memref<4x256xbf16, #tpu.memory_space<vmem>>, %arg2: memref<5x256xbf16, #tpu.memory_space<vmem>>, %arg3: memref<88x128xf32, #tpu.memory_space<vmem>>, %arg4: memref<10x256xbf16, #tpu.memory_space<vmem>>) attributes {dimension_semantics = [#tpu.dimension_semantics<parallel>], iteration_bounds = array<i64: 2>, scalar_prefetch = 0 : i64, scratch_operands = 0 : i64, tpu.core_type = #tpu.core_type<tc>, window_params = [{transform_indices = @transform_0, window_bounds = array<i64: 4, 256>}, {transform_indices = @transform_1, window_bounds = array<i64: 5, 256>}, {pipeline_mode = #tpu.pipeline_mode<synchronous>, transform_indices = @transform_2, window_bounds = array<i64: 88, 128>}, {transform_indices = @transform_3, window_bounds = array<i64: 10, 256>}]} {
    %c0 = arith.constant 0 : index
    %c0_0 = arith.constant 0 : index
    %0 = vector.load %arg1[%c0, %c0_0] : memref<4x256xbf16, #tpu.memory_space<vmem>>, vector<4x256xbf16>
    %1 = arith.extf %0 : vector<4x256xbf16> to vector<4x256xf32>
    %c0_1 = arith.constant 0 : index
    %c0_2 = arith.constant 0 : index
    %2 = vector.load %arg2[%c0_1, %c0_2] : memref<5x256xbf16, #tpu.memory_space<vmem>>, vector<5x256xbf16>
    %3 = arith.extf %2 : vector<5x256xbf16> to vector<5x256xf32>
    %c0_3 = arith.constant 0 : index
    %c0_4 = arith.constant 0 : index
    %4 = vector.load %arg3[%c0_3, %c0_4] : memref<88x128xf32, #tpu.memory_space<vmem>>, vector<16x4xf32>
    %c0_5 = arith.constant 0 : index
    %c16 = arith.constant 16 : index
    %5 = vector.load %arg3[%c0_5, %c16] : memref<88x128xf32, #tpu.memory_space<vmem>>, vector<16x1xf32>
    %c16_6 = arith.constant 16 : index
    %c0_7 = arith.constant 0 : index
    %6 = vector.load %arg3[%c16_6, %c0_7] : memref<88x128xf32, #tpu.memory_space<vmem>>, vector<16x5xf32>
    %c32 = arith.constant 32 : index
    %c0_8 = arith.constant 0 : index
    %7 = vector.load %arg3[%c32, %c0_8] : memref<88x128xf32, #tpu.memory_space<vmem>>, vector<16x16xf32>
    %c32_9 = arith.constant 32 : index
    %c16_10 = arith.constant 16 : index
    %8 = vector.load %arg3[%c32_9, %c16_10] : memref<88x128xf32, #tpu.memory_space<vmem>>, vector<16x1xf32>
    %c48 = arith.constant 48 : index
    %c0_11 = arith.constant 0 : index
    %9 = vector.load %arg3[%c48, %c0_11] : memref<88x128xf32, #tpu.memory_space<vmem>>, vector<6x16xf32>
    %c48_12 = arith.constant 48 : index
    %c16_13 = arith.constant 16 : index
    %10 = vector.load %arg3[%c48_12, %c16_13] : memref<88x128xf32, #tpu.memory_space<vmem>>, vector<6x1xf32>
    %c56 = arith.constant 56 : index
    %c0_14 = arith.constant 0 : index
    %11 = vector.load %arg3[%c56, %c0_14] : memref<88x128xf32, #tpu.memory_space<vmem>>, vector<16x16xf32>
    %c56_15 = arith.constant 56 : index
    %c16_16 = arith.constant 16 : index
    %12 = vector.load %arg3[%c56_15, %c16_16] : memref<88x128xf32, #tpu.memory_space<vmem>>, vector<16x1xf32>
    %c72 = arith.constant 72 : index
    %c0_17 = arith.constant 0 : index
    %13 = vector.load %arg3[%c72, %c0_17] : memref<88x128xf32, #tpu.memory_space<vmem>>, vector<8x16xf32>
    %c72_18 = arith.constant 72 : index
    %c16_19 = arith.constant 16 : index
    %14 = vector.load %arg3[%c72_18, %c16_19] : memref<88x128xf32, #tpu.memory_space<vmem>>, vector<8x1xf32>
    %c80 = arith.constant 80 : index
    %c0_20 = arith.constant 0 : index
    %15 = vector.load %arg3[%c80, %c0_20] : memref<88x128xf32, #tpu.memory_space<vmem>>, vector<4x8xf32>
    %c80_21 = arith.constant 80 : index
    %c16_22 = arith.constant 16 : index
    %16 = vector.load %arg3[%c80_21, %c16_22] : memref<88x128xf32, #tpu.memory_space<vmem>>, vector<4x1xf32>
    %cst = arith.constant dense<0.000000e+00> : vector<16x256xf32>
    %17 = tpu.matmul %4, %1, %cst {dimension_numbers = #tpu.dot_dimension_numbers<[1], [0], [0], [1], [0, 0, 1, 1], [], []>, precision = #tpu.contract_precision<fp32>} : vector<16x4xf32>, vector<4x256xf32>, vector<16x256xf32> -> vector<16x256xf32>
    %18 = vector.broadcast %5 : vector<16x1xf32> to vector<16x256xf32>
    %19 = arith.addf %17, %18 : vector<16x256xf32>
    %cst_23 = arith.constant 0.000000e+00 : f32
    %20 = vector.broadcast %cst_23 : f32 to vector<16x256xf32>
    %21 = arith.cmpf ogt, %19, %20 : vector<16x256xf32>
    %cst_24 = arith.constant 0.00999999977 : f32
    %22 = vector.broadcast %cst_24 : f32 to vector<16x256xf32>
    %23 = arith.mulf %22, %19 : vector<16x256xf32>
    %24 = arith.select %21, %19, %23 : vector<16x256xi1>, vector<16x256xf32>
    %cst_25 = arith.constant dense<0.000000e+00> : vector<16x256xf32>
    %25 = tpu.matmul %7, %24, %cst_25 {dimension_numbers = #tpu.dot_dimension_numbers<[1], [0], [0], [1], [0, 0, 1, 1], [], []>, precision = #tpu.contract_precision<fp32>} : vector<16x16xf32>, vector<16x256xf32>, vector<16x256xf32> -> vector<16x256xf32>
    %26 = vector.broadcast %8 : vector<16x1xf32> to vector<16x256xf32>
    %27 = arith.addf %25, %26 : vector<16x256xf32>
    %cst_26 = arith.constant 0.000000e+00 : f32
    %28 = vector.broadcast %cst_26 : f32 to vector<16x256xf32>
    %29 = arith.cmpf ogt, %27, %28 : vector<16x256xf32>
    %cst_27 = arith.constant 0.00999999977 : f32
    %30 = vector.broadcast %cst_27 : f32 to vector<16x256xf32>
    %31 = arith.mulf %30, %27 : vector<16x256xf32>
    %32 = arith.select %29, %27, %31 : vector<16x256xi1>, vector<16x256xf32>
    %cst_28 = arith.constant dense<0.000000e+00> : vector<6x256xf32>
    %33 = tpu.matmul %9, %32, %cst_28 {dimension_numbers = #tpu.dot_dimension_numbers<[1], [0], [0], [1], [0, 0, 1, 1], [], []>, precision = #tpu.contract_precision<fp32>} : vector<6x16xf32>, vector<16x256xf32>, vector<6x256xf32> -> vector<6x256xf32>
    %34 = vector.broadcast %10 : vector<6x1xf32> to vector<6x256xf32>
    %35 = arith.addf %33, %34 : vector<6x256xf32>
    %cst_29 = arith.constant dense<0.000000e+00> : vector<16x256xf32>
    %36 = tpu.matmul %11, %32, %cst_29 {dimension_numbers = #tpu.dot_dimension_numbers<[1], [0], [0], [1], [0, 0, 1, 1], [], []>, precision = #tpu.contract_precision<fp32>} : vector<16x16xf32>, vector<16x256xf32>, vector<16x256xf32> -> vector<16x256xf32>
    %37 = vector.broadcast %12 : vector<16x1xf32> to vector<16x256xf32>
    %38 = arith.addf %36, %37 : vector<16x256xf32>
    %cst_30 = arith.constant dense<0.000000e+00> : vector<16x256xf32>
    %39 = tpu.matmul %6, %3, %cst_30 {dimension_numbers = #tpu.dot_dimension_numbers<[1], [0], [0], [1], [0, 0, 1, 1], [], []>, precision = #tpu.contract_precision<fp32>} : vector<16x5xf32>, vector<5x256xf32>, vector<16x256xf32> -> vector<16x256xf32>
    %40 = arith.addf %38, %39 : vector<16x256xf32>
    %cst_31 = arith.constant 0.000000e+00 : f32
    %41 = vector.broadcast %cst_31 : f32 to vector<16x256xf32>
    %42 = arith.cmpf ogt, %40, %41 : vector<16x256xf32>
    %cst_32 = arith.constant 0.00999999977 : f32
    %43 = vector.broadcast %cst_32 : f32 to vector<16x256xf32>
    %44 = arith.mulf %43, %40 : vector<16x256xf32>
    %45 = arith.select %42, %40, %44 : vector<16x256xi1>, vector<16x256xf32>
    %cst_33 = arith.constant dense<0.000000e+00> : vector<8x256xf32>
    %46 = tpu.matmul %13, %45, %cst_33 {dimension_numbers = #tpu.dot_dimension_numbers<[1], [0], [0], [1], [0, 0, 1, 1], [], []>, precision = #tpu.contract_precision<fp32>} : vector<8x16xf32>, vector<16x256xf32>, vector<8x256xf32> -> vector<8x256xf32>
    %47 = vector.broadcast %14 : vector<8x1xf32> to vector<8x256xf32>
    %48 = arith.addf %46, %47 : vector<8x256xf32>
    %cst_34 = arith.constant 0.000000e+00 : f32
    %49 = vector.broadcast %cst_34 : f32 to vector<8x256xf32>
    %50 = arith.cmpf ogt, %48, %49 : vector<8x256xf32>
    %cst_35 = arith.constant 0.00999999977 : f32
    %51 = vector.broadcast %cst_35 : f32 to vector<8x256xf32>
    %52 = arith.mulf %51, %48 : vector<8x256xf32>
    %53 = arith.select %50, %48, %52 : vector<8x256xi1>, vector<8x256xf32>
    %cst_36 = arith.constant dense<0.000000e+00> : vector<4x256xf32>
    %54 = tpu.matmul %15, %53, %cst_36 {dimension_numbers = #tpu.dot_dimension_numbers<[1], [0], [0], [1], [0, 0, 1, 1], [], []>, precision = #tpu.contract_precision<fp32>} : vector<4x8xf32>, vector<8x256xf32>, vector<4x256xf32> -> vector<4x256xf32>
    %55 = vector.broadcast %16 : vector<4x1xf32> to vector<4x256xf32>
    %56 = arith.addf %54, %55 : vector<4x256xf32>
    %57 = arith.negf %56 : vector<4x256xf32>
    %58 = math.exp %57 : vector<4x256xf32>
    %cst_37 = arith.constant 1.000000e+00 : f32
    %59 = vector.broadcast %cst_37 : f32 to vector<4x256xf32>
    %60 = arith.addf %59, %58 : vector<4x256xf32>
    %61 = arith.divf %59, %60 : vector<4x256xf32>
    %62 = arith.truncf %35 : vector<6x256xf32> to vector<6x256xbf16>
    %c0_38 = arith.constant 0 : index
    %c0_39 = arith.constant 0 : index
    %63 = vector.load %arg4[%c0_38, %c0_39] : memref<10x256xbf16, #tpu.memory_space<vmem>>, vector<6x256xbf16>
    tpu.vector_store %arg4[%c0_38, %c0_39], %62 {strides = array<i32>} : memref<10x256xbf16, #tpu.memory_space<vmem>>, vector<6x256xbf16>,
    %64 = arith.truncf %61 : vector<4x256xf32> to vector<4x256xbf16>
    %c6 = arith.constant 6 : index
    %c0_40 = arith.constant 0 : index
    %65 = vector.load %arg4[%c6, %c0_40] : memref<10x256xbf16, #tpu.memory_space<vmem>>, vector<4x256xbf16>
    tpu.vector_store %arg4[%c6, %c0_40], %64 {strides = array<i32>} : memref<10x256xbf16, #tpu.memory_space<vmem>>, vector<4x256xbf16>,
    return
  }
  func.func @transform_0(%arg0: i32) -> (i32, i32) {
    %c0_i32 = arith.constant 0 : i32
    %c0_i32_0 = arith.constant 0 : i32
    return %c0_i32, %arg0 : i32, i32
  }
  func.func @transform_1(%arg0: i32) -> (i32, i32) {
    %c0_i32 = arith.constant 0 : i32
    %c0_i32_0 = arith.constant 0 : i32
    return %c0_i32, %arg0 : i32, i32
  }
  func.func @transform_2(%arg0: i32) -> (i32, i32) {
    %c0_i32 = arith.constant 0 : i32
    %c0_i32_0 = arith.constant 0 : i32
    %c0_i32_1 = arith.constant 0 : i32
    return %c0_i32, %c0_i32_0 : i32, i32
  }
  func.func @transform_3(%arg0: i32) -> (i32, i32) {
    %c0_i32 = arith.constant 0 : i32
    %c0_i32_0 = arith.constant 0 : i32
    return %c0_i32, %arg0 : i32, i32
  }
}

</mosaic_0001>

<llo_original>
// kernel: tpu_custom_call.1
$region0: #{tpu_custom_call.1}
  #allocation0 [shape = 'u32[]', space=smem, size = 0x4, offset = 0x4, fixed_abs, tag = 'smem constant byte address 0x4 - core index']
  #allocation1 [shape = 'u32[144,128]{1,0:T(1,128)}', space=vmem, size = 0x12000, scoped, tag = 'internal scratch']
  %s0 = inlined_call_operand.hbm [shape: bf16[4,512], index: 0, kind: input, shape index: {}]
  %s1 = inlined_call_operand.hbm [shape: bf16[5,512], index: 1, kind: input, shape index: {}]
  %s2 = inlined_call_operand.hbm [shape: f32[88,128], index: 2, kind: input, shape index: {}]
  %s3 = inlined_call_operand.hbm [shape: bf16[10,512], index: 3, kind: output, shape index: {}]
  %s4 = sld [smem:[#allocation0]]
  $region57: #{tpu_custom_call.1} parent=0
    _
  %s6 = ssub.s32 1, %s4
  %s7 = scalar_select 0, %s6, %s4
  $region1: #{tpu_custom_call.1} parent=0
    #allocation2 [shape = 'u8[4096]{0}', space=vmem, size = 0x1000, scoped, tag = 'input window, operand 0']
    #allocation3 [shape = 's32[2]{0}', space=sflag, size = 0x8, scoped, tag = 'scoped memory for tpu_custom_call.1']
    #allocation4 [shape = 's32[2]{0}', space=sflag, size = 0x8, scoped, tag = 'scoped memory for tpu_custom_call.1']
    #allocation5 [shape = 'u8[8192]{0}', space=vmem, size = 0x2000, scoped, tag = 'input window, operand 1']
    #allocation6 [shape = 's32[2]{0}', space=sflag, size = 0x8, scoped, tag = 'scoped memory for tpu_custom_call.1']
    #allocation7 [shape = 'u8[45056]{0}', space=vmem, size = 0xb000, scoped, tag = 'input window, operand 2, single buffered']
    #allocation8 [shape = 'u8[16384]{0}', space=vmem, size = 0x4000, scoped, tag = 'output window, operand 0']
    %8 = vsyncpa [#allocation3], 0
    %s9 = scalar_lea.sflag [#allocation3], 1
    %10 = vsyncpa %s9, 0
    %11 = vsyncpa [#allocation6], 0
    %s12 = scalar_lea.sflag [#allocation6], 1
    %13 = vsyncpa %s12, 0
    %14 = vsyncpa [#allocation4], 0
    %s15 = scalar_lea.sflag [#allocation4], 1
    %16 = vsyncpa %s15, 0
    loop: start=0, step=1, limit=4
    $region2: #{tpu_custom_call.1} parent=1 // loop_pre_header
      _
    $region3: #{tpu_custom_call.1} parent=1 // loop_header
      %s18 = sphi 0, %s22
      %p19 = scmp.ge.s32.totalorder %s18, 4
      %s28 = sphi 0, %s30
      %s31 = sphi 0, %s28
      %s32 = sphi 0, %s31
      %s48 = sphi 0, %s32
      %s54 = sphi 0, %s56
      %s57 = sphi 0, %s54
      %s58 = sphi 0, %s57
      %s74 = sphi 0, %s58
      %s78 = sphi 0, %s78
      %s80 = sphi 0, %s78
      %s81 = sphi 0, %s80
      %s95 = sphi 0, %s81
      %s101 = sphi 0, %s103
      %s104 = sphi 0, %s101
      %s105 = sphi 0, %s104
      %s121 = sphi 0, %s105
    $region4: #{tpu_custom_call.1} parent=1 // loop_header_branch
      %21 = sbr.rel (%p19) target = $region8
    $region5: #{tpu_custom_call.1} parent=1 // loop_body
      %s23 = ssub.s32 %s18, 1
      %s24 = ssub.s32 %s18, 2
      %s25 = sadd.s32 %s18, 1
      %s26 = ssub.s32 %s18, %s25
      %p27 = scmp.eq.s32.totalorder %s26, 0
      %s29 = sadd.s32 %s28, 1
      %s30 = scalar_select %p27, %s28, %s29
      %p33 = pneg %p27
      %p34 = scmp.eq.s32.totalorder %s18, 1
      %p35 = por %p33, %p34
      %p36 = scmp.ne.s32.totalorder %s28, %s31
      %p37 = scmp.eq.s32.totalorder %s18, 0
      %p38 = por %p36, %p37
      %p39 = scmp.ne.s32.totalorder %s28, %s31
      %p40 = scmp.eq.s32.totalorder %s23, 1
      %p41 = por %p39, %p40
      %p42 = scmp.ne.s32.totalorder %s31, %s32
      %p43 = scmp.eq.s32.totalorder %s23, 0
      %p44 = por %p42, %p43
      %p45 = scmp.ne.s32.totalorder %s31, %s32
      %p46 = scmp.eq.s32.totalorder %s24, 1
      %p47 = por %p45, %p46
      %p49 = scmp.ne.s32.totalorder %s32, %s48
      %p50 = scmp.eq.s32.totalorder %s24, 0
      %p51 = por %p49, %p50
      %s52 = ssub.s32 %s18, %s25
      %p53 = scmp.eq.s32.totalorder %s52, 0
      %s55 = sadd.s32 %s54, 1
      %s56 = scalar_select %p53, %s54, %s55
      %p59 = pneg %p53
      %p60 = scmp.eq.s32.totalorder %s18, 1
      %p61 = por %p59, %p60
      %p62 = scmp.ne.s32.totalorder %s54, %s57
      %p63 = scmp.eq.s32.totalorder %s18, 0
      %p64 = por %p62, %p63
      %p65 = scmp.ne.s32.totalorder %s54, %s57
      %p66 = scmp.eq.s32.totalorder %s23, 1
      %p67 = por %p65, %p66
      %p68 = scmp.ne.s32.totalorder %s57, %s58
      %p69 = scmp.eq.s32.totalorder %s23, 0
      %p70 = por %p68, %p69
      %p71 = scmp.ne.s32.totalorder %s57, %s58
      %p72 = scmp.eq.s32.totalorder %s24, 1
      %p73 = por %p71, %p72
      %p75 = scmp.ne.s32.totalorder %s58, %s74
      %p76 = scmp.eq.s32.totalorder %s24, 0
      %p77 = por %p75, %p76
      %s79 = sadd.s32 %s78, 1
      %p82 = scmp.eq.s32.totalorder %s18, 1
      %p83 = scmp.ne.s32.totalorder %s78, %s80
      %p84 = scmp.eq.s32.totalorder %s18, 0
      %p85 = por %p83, %p84
      %p86 = scmp.ne.s32.totalorder %s78, %s80
      %p87 = scmp.eq.s32.totalorder %s23, 1
      %p88 = por %p86, %p87
      %p89 = scmp.ne.s32.totalorder %s80, %s81
      %p90 = scmp.eq.s32.totalorder %s23, 0
      %p91 = por %p89, %p90
      %p92 = scmp.ne.s32.totalorder %s80, %s81
      %p93 = scmp.eq.s32.totalorder %s24, 1
      %p94 = por %p92, %p93
      %p96 = scmp.ne.s32.totalorder %s81, %s95
      %p97 = scmp.eq.s32.totalorder %s24, 0
      %p98 = por %p96, %p97
      %s99 = ssub.s32 %s18, %s25
      %p100 = scmp.eq.s32.totalorder %s99, 0
      %s102 = sadd.s32 %s101, 1
      %s103 = scalar_select %p100, %s101, %s102
      %p106 = pneg %p100
      %p107 = scmp.eq.s32.totalorder %s18, 1
      %p108 = por %p106, %p107
      %p109 = scmp.ne.s32.totalorder %s101, %s104
      %p110 = scmp.eq.s32.totalorder %s18, 0
      %p111 = por %p109, %p110
      %p112 = scmp.ne.s32.totalorder %s101, %s104
      %p113 = scmp.eq.s32.totalorder %s23, 1
      %p114 = por %p112, %p113
      %p115 = scmp.ne.s32.totalorder %s104, %s105
      %p116 = scmp.eq.s32.totalorder %s23, 0
      %p117 = por %p115, %p116
      %p118 = scmp.ne.s32.totalorder %s104, %s105
      %p119 = scmp.eq.s32.totalorder %s24, 1
      %p120 = por %p118, %p119
      %p122 = scmp.ne.s32.totalorder %s105, %s121
      %p123 = scmp.eq.s32.totalorder %s24, 0
      %p124 = por %p122, %p123
      %p125 = scmp.le.s32.totalorder 1, %s18
      %p126 = scmp.lt.s32.totalorder %s18, 3
      %p127 = pnand %p125, %p126
      %p128 = pneg %p127
      // Predicated region
      $region9: #{tpu_custom_call.1} parent=5 // pred_check
        _
      $region10: #{tpu_custom_call.1} parent=5 // pred_check_branch
        %130 = sbr.rel (%p127) target = $region12
      $region11: #{tpu_custom_call.1} parent=5 // pred_region
        %s131 = ssub.s32 %s18, 1
        // Predicated region
        $region13: #{tpu_custom_call.1} parent=11 // pred_check
          %p132 = pneg %p91
        $region14: #{tpu_custom_call.1} parent=11 // pred_check_branch
          %134 = sbr.rel (%p132) target = $region16
        $region15: #{tpu_custom_call.1} parent=11 // pred_region
          %s136 = ssub.s32 1408, 1408
          %137 = vsyncadd [#allocation6], %s136
          %s138 = sshll.u32 [#allocation7], 4
          %s139 = int_to_ptr.vmem [resolvable:$true] %s138
          %144 = dma.hbm_to_vmem [thread:$0]  %s2, 1408, %s139, [#allocation6], 128, 128, 8
        $region16: #{tpu_custom_call.1} parent=11 // pred_fallthru
          _
      $region12: #{tpu_custom_call.1} parent=5 // pred_fallthru
        _
      %p145 = scmp.lt.s32.totalorder %s18, 2
      // Predicated region
      $region17: #{tpu_custom_call.1} parent=5 // pred_check
        %p146 = pneg %p145
      $region18: #{tpu_custom_call.1} parent=5 // pred_check_branch
        %148 = sbr.rel (%p146) target = $region20
      $region19: #{tpu_custom_call.1} parent=5 // pred_region
        // Predicated region
        $region21: #{tpu_custom_call.1} parent=19 // pred_check
          %p149 = pneg %p38
        $region22: #{tpu_custom_call.1} parent=19 // pred_check_branch
          %151 = sbr.rel (%p149) target = $region24
        $region23: #{tpu_custom_call.1} parent=19 // pred_region
          %s152 = sand.u32 %s28, 1
          %s153 = scalar_lea.sflag [#allocation3], %s152
          %s154 = sand.u32 %s28, 1
          %s155 = smul.addr %s154, 4
          %s156 = scalar_lea.vmem [#allocation2], %s155
          %s157 = smul.u32 2, %s18
          %s159 = ssub.s32 64, 64
          %160 = vsyncadd %s153, %s159
          %s161 = smul.addr %s157, 32
          %s162 = scalar_lea.hbm %s0, %s161
          %s164 = sshll.u32 %s156, 4
          %s165 = int_to_ptr.vmem [resolvable:$true] %s164
          %167 = dma.hbm_to_vmem [thread:$0]  %s162, 64, %s165, %s153
        $region24: #{tpu_custom_call.1} parent=19 // pred_fallthru
          _
        // Predicated region
        $region25: #{tpu_custom_call.1} parent=19 // pred_check
          %p168 = pneg %p64
        $region26: #{tpu_custom_call.1} parent=19 // pred_check_branch
          %170 = sbr.rel (%p168) target = $region28
        $region27: #{tpu_custom_call.1} parent=19 // pred_region
          %s171 = sand.u32 %s18, 1
          %s172 = scalar_lea.sflag [#allocation6], %s171
          %s173 = sand.u32 %s54, 1
          %s174 = smul.addr %s173, 8
          %s175 = scalar_lea.vmem [#allocation5], %s174
          %s176 = smul.u32 2, %s18
          %s178 = ssub.s32 128, 128
          %179 = vsyncadd %s172, %s178
          %s180 = smul.addr %s176, 64
          %s181 = scalar_lea.hbm %s1, %s180
          %s183 = sshll.u32 %s175, 4
          %s184 = int_to_ptr.vmem [resolvable:$true] %s183
          %186 = dma.hbm_to_vmem [thread:$0]  %s181, 128, %s184, %s172
        $region28: #{tpu_custom_call.1} parent=19 // pred_fallthru
          _
      $region20: #{tpu_custom_call.1} parent=5 // pred_fallthru
        _
      %p187 = scmp.le.s32.totalorder 1, %s18
      %p188 = scmp.lt.s32.totalorder %s18, 3
      %p189 = pnand %p187, %p188
      %p190 = pneg %p189
      // Predicated region
      $region29: #{tpu_custom_call.1} parent=5 // pred_check
        _
      $region30: #{tpu_custom_call.1} parent=5 // pred_check_branch
        %192 = sbr.rel (%p189) target = $region32
      $region31: #{tpu_custom_call.1} parent=5 // pred_region
        %s193 = ssub.s32 %s18, 1
        %s194 = sand.u32 %s31, 1
        %s195 = scalar_lea.sflag [#allocation3], %s194
        %s196 = sand.u32 %s31, 1
        %s197 = smul.addr %s196, 4
        %s198 = scalar_lea.vmem [#allocation2], %s197
        // Predicated region
        $region33: #{tpu_custom_call.1} parent=31 // pred_check
          %p199 = pneg %p44
        $region34: #{tpu_custom_call.1} parent=31 // pred_check_branch
          %201 = sbr.rel (%p199) target = $region36
        $region35: #{tpu_custom_call.1} parent=31 // pred_region
          %202 = dma.done %s195, 64
        $region36: #{tpu_custom_call.1} parent=31 // pred_fallthru
          _
        %s203 = sand.u32 %s23, 1
        %s204 = scalar_lea.sflag [#allocation6], %s203
        %s205 = sand.u32 %s57, 1
        %s206 = smul.addr %s205, 8
        %s207 = scalar_lea.vmem [#allocation5], %s206
        // Predicated region
        $region37: #{tpu_custom_call.1} parent=31 // pred_check
          %p208 = pneg %p70
        $region38: #{tpu_custom_call.1} parent=31 // pred_check_branch
          %210 = sbr.rel (%p208) target = $region40
        $region39: #{tpu_custom_call.1} parent=31 // pred_region
          %211 = dma.done %s204, 128
        $region40: #{tpu_custom_call.1} parent=31 // pred_fallthru
          _
        // Predicated region
        $region41: #{tpu_custom_call.1} parent=31 // pred_check
          %p212 = pneg %p91
        $region42: #{tpu_custom_call.1} parent=31 // pred_check_branch
          %214 = sbr.rel (%p212) target = $region44
        $region43: #{tpu_custom_call.1} parent=31 // pred_region
          %215 = dma.done [#allocation6], 1408
        $region44: #{tpu_custom_call.1} parent=31 // pred_fallthru
          _
        %s216 = sand.u32 %s31, 1
        %s217 = scalar_lea.sflag [#allocation3], %s216
        %s218 = sand.u32 %s31, 1
        %s219 = smul.addr %s218, 4
        %s220 = scalar_lea.vmem [#allocation2], %s219
        %p221 = pneg %p44
        %p222 = pneg %p41
        %s223 = sand.u32 %s23, 1
        %s224 = scalar_lea.sflag [#allocation6], %s223
        %s225 = sand.u32 %s57, 1
        %s226 = smul.addr %s225, 8
        %s227 = scalar_lea.vmem [#allocation5], %s226
        %p228 = pneg %p70
        %p229 = pneg %p67
        %p230 = pneg %p91
        %p231 = pneg %p88
        %p232 = pneg %p117
        %p233 = pneg %p114
        %s234 = sand.u32 %s104, 1
        %s235 = scalar_lea.sflag [#allocation4], %s234
        %s236 = sand.u32 %s104, 1
        %s237 = smul.addr %s236, 16
        %s238 = scalar_lea.vmem [#allocation8], %s237
        %s239 = smul.u32 2, %s23
        %s240 = smul.u32 2, %s23
        %s241 = smul.u32 2, %s23
        %v242 = vld [vmem:[%s198] sm:$0xf]
        %v243 = vunpack.c.l.bf16 %v242
        %v244 = vld [vmem:[%s207] sm:$0x77]
        %v245 = vunpack.c.l.bf16 %v244
        %v246 = vunpack.c.h.bf16 %v244
        %v247 = vld [vmem:[#allocation7] sm:$0xff]
        %v248 = vld [vmem:[#allocation7 + $0x8] sm:$0xff]
        %v249 = vld [vmem:[#allocation7 + $0x10] sm:$0xff]
        %v250 = vld [vmem:[#allocation7 + $0x18] sm:$0xff]
        %v251 = vld [vmem:[#allocation7 + $0x20] sm:$0xff]
        %v252 = vld [vmem:[#allocation7 + $0x28] sm:$0xff]
        %v253 = vld [vmem:[#allocation7 + $0x30] sm:$0x3f]
        %v254 = vld [vmem:[#allocation7 + $0x38] sm:$0xff]
        %v255 = vld [vmem:[#allocation7 + $0x40] sm:$0xff]
        %v256 = vld [vmem:[#allocation7 + $0x48] sm:$0xff]
        %v257 = vld [vmem:[#allocation7 + $0x50] sm:$0xf]
        %259 = vset.pattern.permute.xlu0 16
        %260 = vperm.xlu0 %259, %v247
        %v261 = vpop.permute.xlu0 %260
        %264 = vset.pattern.permute.xlu0 16
        %265 = vperm.xlu0 %264, %v248
        %v266 = vpop.permute.xlu0 %265
        %v269 = vcombine.high %v243, %v243
        %vm270 = vcmask 31744
        %v271 = vsel %vm270, %v247, 0
        %v273 = vsel %vm270, %v248, 0
        %vm275 = vcmask 1043456
        %v276 = vsel %vm275, %v243, 0
        %v278 = vsel %vm275, %v269, 0
        %v280 = vand.u32 %v278, 4294901760
        %281 = vmatprep.subr.mxu0 %v280
        %v282 = vand.u32 %v276, 4294901760
        %283 = vmatpush1.msra.mxu0 %v282
        %284 = vmatprep.subr.mxu0 0.0
        %285 = vmatpush1.msra.mxu0 0.0
        %286 = vmatprep.subr.mxu0 0.0
        %287 = vmatpush1.msra.mxu0 0.0
        %288 = vmatprep.subr.mxu0 0.0
        %289 = vmatpush1.msra.mxu0 0.0
        %290 = vmatprep.subr.mxu0 0.0
        %291 = vmatpush1.msra.mxu0 0.0
        %292 = vmatprep.subr.mxu0 0.0
        %293 = vmatpush1.msra.mxu0 0.0
        %294 = vmatprep.subr.mxu0 0.0
        %295 = vmatpush1.msra.mxu0 0.0
        %296 = vmatprep.subr.mxu0 0.0
        %297 = vmatpush1.msra.mxu0 0.0
        %298 = vmatprep.subr.mxu0 0.0
        %299 = vmatpush1.msra.mxu0 0.0
        %300 = vmatprep.subr.mxu0 0.0
        %301 = vmatpush1.msra.mxu0 0.0
        %302 = vmatprep.subr.mxu0 0.0
        %303 = vmatpush1.msra.mxu0 0.0
        %304 = vmatprep.subr.mxu0 0.0
        %305 = vmatpush1.msra.mxu0 0.0
        %306 = vmatprep.subr.mxu0 0.0
        %307 = vmatpush1.msra.mxu0 0.0
        %308 = vmatprep.subr.mxu0 0.0
        %309 = vmatpush1.msra.mxu0 0.0
        %310 = vmatprep.subr.mxu0 0.0
        %311 = vmatpush1.msra.mxu0 0.0
        %312 = vmatprep.subr.mxu0 0.0
        %313 = vmatpush1.msra.mxu0 0.0
        %314 = vmatprep.subr.mxu0 0.0
        %315 = vmatpush1.msra.mxu0 0.0
        %316 = vmatprep.subr.mxu0 0.0
        %317 = vmatpush1.msra.mxu0 0.0
        %318 = vmatprep.subr.mxu0 0.0
        %319 = vmatpush1.msra.mxu0 0.0
        %320 = vmatprep.subr.mxu0 0.0
        %321 = vmatpush1.msra.mxu0 0.0
        %322 = vmatprep.subr.mxu0 0.0
        %323 = vmatpush1.msra.mxu0 0.0
        %324 = vmatprep.subr.mxu0 0.0
        %325 = vmatpush1.msra.mxu0 0.0
        %326 = vmatprep.subr.mxu0 0.0
        %327 = vmatpush1.msra.mxu0 0.0
        %328 = vmatprep.subr.mxu0 0.0
        %329 = vmatpush1.msra.mxu0 0.0
        %330 = vmatprep.subr.mxu0 0.0
        %331 = vmatpush1.msra.mxu0 0.0
        %332 = vmatprep.subr.mxu0 0.0
        %333 = vmatpush1.msra.mxu0 0.0
        %334 = vmatprep.subr.mxu0 0.0
        %335 = vmatpush1.msra.mxu0 0.0
        %336 = vmatprep.subr.mxu0 0.0
        %337 = vmatpush1.msra.mxu0 0.0
        %338 = vmatprep.subr.mxu0 0.0
        %339 = vmatpush1.msra.mxu0 0.0
        %340 = vmatprep.subr.mxu0 0.0
        %341 = vmatpush1.msra.mxu0 0.0
        %342 = vmatprep.subr.mxu0 0.0
        %343 = vmatpush1.msra.mxu0 0.0
        %344 = vmatprep.subr.mxu0 0.0
        %345 = vmatpush1.msra.mxu0 0.0
        %346 = vmatprep.mubr.f32.mxu0 0.0
        %v347 = vand.u32 %v271, 4294901760
        %v348 = vsub.f32 %v271, %v347
        %v349 = vand.u32 %v348, 4294901760
        %v350 = vsub.f32 %v348, %v349
        %v351 = vand.u32 %v350, 4294901760
        %352 = vmatmul.mubr.f32.gmra.mrb[0].mxu0 %v351
        %v353 = vpop.f32.mrb[0].mxu0
        %v354 = vadd.f32 %v261, %v353
        %v355 = vpop.f32.mrb[0].mxu0
        %v356 = vadd.f32 %v261, %v355
        %357 = vmatprep.mubr.f32.mxu0 0.0
        %v358 = vand.u32 %v273, 4294901760
        %v359 = vsub.f32 %v273, %v358
        %v360 = vand.u32 %v359, 4294901760
        %v361 = vsub.f32 %v359, %v360
        %v362 = vand.u32 %v361, 4294901760
        %363 = vmatmul.mubr.f32.gmra.mrb[0].mxu0 %v362
        %v364 = vpop.f32.mrb[0].mxu0
        %v365 = vadd.f32 %v266, %v364
        %v366 = vpop.f32.mrb[0].mxu0
        %v367 = vadd.f32 %v266, %v366
        %368 = vdwg.mxu0
        %v369 = vand.u32 %v278, 4294901760
        %v370 = vsub.f32 %v278, %v369
        %v371 = vand.u32 %v370, 4294901760
        %v372 = vsub.f32 %v370, %v371
        %v373 = vand.u32 %v372, 4294901760
        %374 = vmatprep.subr.mxu0 %v373
        %v375 = vand.u32 %v276, 4294901760
        %v376 = vsub.f32 %v276, %v375
        %v377 = vand.u32 %v376, 4294901760
        %v378 = vsub.f32 %v376, %v377
        %v379 = vand.u32 %v378, 4294901760
        %380 = vmatpush1.msra.mxu0 %v379
        %381 = vmatprep.subr.mxu0 0.0
        %382 = vmatpush1.msra.mxu0 0.0
        %383 = vmatprep.subr.mxu0 0.0
        %384 = vmatpush1.msra.mxu0 0.0
        %385 = vmatprep.subr.mxu0 0.0
        %386 = vmatpush1.msra.mxu0 0.0
        %387 = vmatprep.subr.mxu0 0.0
        %388 = vmatpush1.msra.mxu0 0.0
        %389 = vmatprep.subr.mxu0 0.0
        %390 = vmatpush1.msra.mxu0 0.0
        %391 = vmatprep.subr.mxu0 0.0
        %392 = vmatpush1.msra.mxu0 0.0
        %393 = vmatprep.subr.mxu0 0.0
        %394 = vmatpush1.msra.mxu0 0.0
        %395 = vmatprep.subr.mxu0 0.0
        %396 = vmatpush1.msra.mxu0 0.0
        %397 = vmatprep.subr.mxu0 0.0
        %398 = vmatpush1.msra.mxu0 0.0
        %399 = vmatprep.subr.mxu0 0.0
        %400 = vmatpush1.msra.mxu0 0.0
        %401 = vmatprep.subr.mxu0 0.0
        %402 = vmatpush1.msra.mxu0 0.0
        %403 = vmatprep.subr.mxu0 0.0
        %404 = vmatpush1.msra.mxu0 0.0
        %405 = vmatprep.subr.mxu0 0.0
        %406 = vmatpush1.msra.mxu0 0.0
        %407 = vmatprep.subr.mxu0 0.0
        %408 = vmatpush1.msra.mxu0 0.0
        %409 = vmatprep.subr.mxu0 0.0
        %410 = vmatpush1.msra.mxu0 0.0
        %411 = vmatprep.subr.mxu0 0.0
        %412 = vmatpush1.msra.mxu0 0.0
        %413 = vmatprep.subr.mxu0 0.0
        %414 = vmatpush1.msra.mxu0 0.0
        %415 = vmatprep.subr.mxu0 0.0
        %416 = vmatpush1.msra.mxu0 0.0
        %417 = vmatprep.subr.mxu0 0.0
        %418 = vmatpush1.msra.mxu0 0.0
        %419 = vmatprep.subr.mxu0 0.0
        %420 = vmatpush1.msra.mxu0 0.0
        %421 = vmatprep.subr.mxu0 0.0
        %422 = vmatpush1.msra.mxu0 0.0
        %423 = vmatprep.subr.mxu0 0.0
        %424 = vmatpush1.msra.mxu0 0.0
        %425 = vmatprep.subr.mxu0 0.0
        %426 = vmatpush1.msra.mxu0 0.0
        %427 = vmatprep.subr.mxu0 0.0
        %428 = vmatpush1.msra.mxu0 0.0
        %429 = vmatprep.subr.mxu0 0.0
        %430 = vmatpush1.msra.mxu0 0.0
        %431 = vmatprep.subr.mxu0 0.0
        %432 = vmatpush1.msra.mxu0 0.0
        %433 = vmatprep.subr.mxu0 0.0
        %434 = vmatpush1.msra.mxu0 0.0
        %435 = vmatprep.subr.mxu0 0.0
        %436 = vmatpush1.msra.mxu0 0.0
        %437 = vmatprep.subr.mxu0 0.0
        %438 = vmatpush1.msra.mxu0 0.0
        %439 = vmatprep.subr.mxu0 0.0
        %440 = vmatpush1.msra.mxu0 0.0
        %441 = vmatprep.subr.mxu0 0.0
        %442 = vmatpush1.msra.mxu0 0.0
        %443 = vmatprep.mubr.f32.mxu0 0.0
        %v444 = vand.u32 %v271, 4294901760
        %445 = vmatmul.mubr.f32.gmra.mrb[0].mxu0 %v444
        %v446 = vpop.f32.mrb[0].mxu0
        %v447 = vadd.f32 %v354, %v446
        %v448 = vpop.f32.mrb[0].mxu0
        %v449 = vadd.f32 %v356, %v448
        %450 = vmatprep.mubr.f32.mxu0 0.0
        %v451 = vand.u32 %v273, 4294901760
        %452 = vmatmul.mubr.f32.gmra.mrb[0].mxu0 %v451
        %v453 = vpop.f32.mrb[0].mxu0
        %v454 = vadd.f32 %v365, %v453
        %v455 = vpop.f32.mrb[0].mxu0
        %v456 = vadd.f32 %v367, %v455
        %457 = vdwg.mxu0
        %v458 = vand.u32 %v278, 4294901760
        %v459 = vsub.f32 %v278, %v458
        %460 = vmatprep.subr.mxu0 %v459
        %v461 = vand.u32 %v276, 4294901760
        %v462 = vsub.f32 %v276, %v461
        %463 = vmatpush1.msra.mxu0 %v462
        %464 = vmatprep.subr.mxu0 0.0
        %465 = vmatpush1.msra.mxu0 0.0
        %466 = vmatprep.subr.mxu0 0.0
        %467 = vmatpush1.msra.mxu0 0.0
        %468 = vmatprep.subr.mxu0 0.0
        %469 = vmatpush1.msra.mxu0 0.0
        %470 = vmatprep.subr.mxu0 0.0
        %471 = vmatpush1.msra.mxu0 0.0
        %472 = vmatprep.subr.mxu0 0.0
        %473 = vmatpush1.msra.mxu0 0.0
        %474 = vmatprep.subr.mxu0 0.0
        %475 = vmatpush1.msra.mxu0 0.0
        %476 = vmatprep.subr.mxu0 0.0
        %477 = vmatpush1.msra.mxu0 0.0
        %478 = vmatprep.subr.mxu0 0.0
        %479 = vmatpush1.msra.mxu0 0.0
        %480 = vmatprep.subr.mxu0 0.0
        %481 = vmatpush1.msra.mxu0 0.0
        %482 = vmatprep.subr.mxu0 0.0
        %483 = vmatpush1.msra.mxu0 0.0
        %484 = vmatprep.subr.mxu0 0.0
        %485 = vmatpush1.msra.mxu0 0.0
        %486 = vmatprep.subr.mxu0 0.0
        %487 = vmatpush1.msra.mxu0 0.0
        %488 = vmatprep.subr.mxu0 0.0
        %489 = vmatpush1.msra.mxu0 0.0
        %490 = vmatprep.subr.mxu0 0.0
        %491 = vmatpush1.msra.mxu0 0.0
        %492 = vmatprep.subr.mxu0 0.0
        %493 = vmatpush1.msra.mxu0 0.0
        %494 = vmatprep.subr.mxu0 0.0
        %495 = vmatpush1.msra.mxu0 0.0
        %496 = vmatprep.subr.mxu0 0.0
        %497 = vmatpush1.msra.mxu0 0.0
        %498 = vmatprep.subr.mxu0 0.0
        %499 = vmatpush1.msra.mxu0 0.0
        %500 = vmatprep.subr.mxu0 0.0
        %501 = vmatpush1.msra.mxu0 0.0
        %502 = vmatprep.subr.mxu0 0.0
        %503 = vmatpush1.msra.mxu0 0.0
        %504 = vmatprep.subr.mxu0 0.0
        %505 = vmatpush1.msra.mxu0 0.0
        %506 = vmatprep.subr.mxu0 0.0
        %507 = vmatpush1.msra.mxu0 0.0
        %508 = vmatprep.subr.mxu0 0.0
        %509 = vmatpush1.msra.mxu0 0.0
        %510 = vmatprep.subr.mxu0 0.0
        %511 = vmatpush1.msra.mxu0 0.0
        %512 = vmatprep.subr.mxu0 0.0
        %513 = vmatpush1.msra.mxu0 0.0
        %514 = vmatprep.subr.mxu0 0.0
        %515 = vmatpush1.msra.mxu0 0.0
        %516 = vmatprep.subr.mxu0 0.0
        %517 = vmatpush1.msra.mxu0 0.0
        %518 = vmatprep.subr.mxu0 0.0
        %519 = vmatpush1.msra.mxu0 0.0
        %520 = vmatprep.subr.mxu0 0.0
        %521 = vmatpush1.msra.mxu0 0.0
        %522 = vmatprep.subr.mxu0 0.0
        %523 = vmatpush1.msra.mxu0 0.0
        %524 = vmatprep.subr.mxu0 0.0
        %525 = vmatpush1.msra.mxu0 0.0
        %526 = vmatprep.mubr.f32.mxu0 0.0
        %v527 = vand.u32 %v271, 4294901760
        %v528 = vsub.f32 %v271, %v527
        %529 = vmatmul.mubr.f32.gmra.mrb[0].mxu0 %v528
        %v530 = vpop.f32.mrb[0].mxu0
        %v531 = vadd.f32 %v447, %v530
        %v532 = vpop.f32.mrb[0].mxu0
        %v533 = vadd.f32 %v449, %v532
        %534 = vmatprep.mubr.f32.mxu0 0.0
        %v535 = vand.u32 %v273, 4294901760
        %v536 = vsub.f32 %v273, %v535
        %537 = vmatmul.mubr.f32.gmra.mrb[0].mxu0 %v536
        %v538 = vpop.f32.mrb[0].mxu0
        %v539 = vadd.f32 %v454, %v538
        %v540 = vpop.f32.mrb[0].mxu0
        %v541 = vadd.f32 %v456, %v540
        %542 = vdwg.mxu0
        %v543 = vand.u32 %v278, 4294901760
        %544 = vmatprep.subr.mxu0 %v543
        %v545 = vand.u32 %v276, 4294901760
        %546 = vmatpush1.msra.mxu0 %v545
        %547 = vmatprep.subr.mxu0 0.0
        %548 = vmatpush1.msra.mxu0 0.0
        %549 = vmatprep.subr.mxu0 0.0
        %550 = vmatpush1.msra.mxu0 0.0
        %551 = vmatprep.subr.mxu0 0.0
        %552 = vmatpush1.msra.mxu0 0.0
        %553 = vmatprep.subr.mxu0 0.0
        %554 = vmatpush1.msra.mxu0 0.0
        %555 = vmatprep.subr.mxu0 0.0
        %556 = vmatpush1.msra.mxu0 0.0
        %557 = vmatprep.subr.mxu0 0.0
        %558 = vmatpush1.msra.mxu0 0.0
        %559 = vmatprep.subr.mxu0 0.0
        %560 = vmatpush1.msra.mxu0 0.0
        %561 = vmatprep.subr.mxu0 0.0
        %562 = vmatpush1.msra.mxu0 0.0
        %563 = vmatprep.subr.mxu0 0.0
        %564 = vmatpush1.msra.mxu0 0.0
        %565 = vmatprep.subr.mxu0 0.0
        %566 = vmatpush1.msra.mxu0 0.0
        %567 = vmatprep.subr.mxu0 0.0
        %568 = vmatpush1.msra.mxu0 0.0
        %569 = vmatprep.subr.mxu0 0.0
        %570 = vmatpush1.msra.mxu0 0.0
        %571 = vmatprep.subr.mxu0 0.0
        %572 = vmatpush1.msra.mxu0 0.0
        %573 = vmatprep.subr.mxu0 0.0
        %574 = vmatpush1.msra.mxu0 0.0
        %575 = vmatprep.subr.mxu0 0.0
        %576 = vmatpush1.msra.mxu0 0.0
        %577 = vmatprep.subr.mxu0 0.0
        %578 = vmatpush1.msra.mxu0 0.0
        %579 = vmatprep.subr.mxu0 0.0
        %580 = vmatpush1.msra.mxu0 0.0
        %581 = vmatprep.subr.mxu0 0.0
        %582 = vmatpush1.msra.mxu0 0.0
        %583 = vmatprep.subr.mxu0 0.0
        %584 = vmatpush1.msra.mxu0 0.0
        %585 = vmatprep.subr.mxu0 0.0
        %586 = vmatpush1.msra.mxu0 0.0
        %587 = vmatprep.subr.mxu0 0.0
        %588 = vmatpush1.msra.mxu0 0.0
        %589 = vmatprep.subr.mxu0 0.0
        %590 = vmatpush1.msra.mxu0 0.0
        %591 = vmatprep.subr.mxu0 0.0
        %592 = vmatpush1.msra.mxu0 0.0
        %593 = vmatprep.subr.mxu0 0.0
        %594 = vmatpush1.msra.mxu0 0.0
        %595 = vmatprep.subr.mxu0 0.0
        %596 = vmatpush1.msra.mxu0 0.0
        %597 = vmatprep.subr.mxu0 0.0
        %598 = vmatpush1.msra.mxu0 0.0
        %599 = vmatprep.subr.mxu0 0.0
        %600 = vmatpush1.msra.mxu0 0.0
        %601 = vmatprep.subr.mxu0 0.0
        %602 = vmatpush1.msra.mxu0 0.0
        %603 = vmatprep.subr.mxu0 0.0
        %604 = vmatpush1.msra.mxu0 0.0
        %605 = vmatprep.subr.mxu0 0.0
        %606 = vmatpush1.msra.mxu0 0.0
        %607 = vmatprep.subr.mxu0 0.0
        %608 = vmatpush1.msra.mxu0 0.0
        %609 = vmatprep.mubr.f32.mxu0 0.0
        %v610 = vand.u32 %v271, 4294901760
        %v611 = vsub.f32 %v271, %v610
        %v612 = vand.u32 %v611, 4294901760
        %613 = vmatmul.mubr.f32.gmra.mrb[0].mxu0 %v612
        %v614 = vpop.f32.mrb[0].mxu0
        %v615 = vadd.f32 %v531, %v614
        %v616 = vpop.f32.mrb[0].mxu0
        %v617 = vadd.f32 %v533, %v616
        %618 = vmatprep.mubr.f32.mxu0 0.0
        %v619 = vand.u32 %v273, 4294901760
        %v620 = vsub.f32 %v273, %v619
        %v621 = vand.u32 %v620, 4294901760
        %622 = vmatmul.mubr.f32.gmra.mrb[0].mxu0 %v621
        %v623 = vpop.f32.mrb[0].mxu0
        %v624 = vadd.f32 %v539, %v623
        %v625 = vpop.f32.mrb[0].mxu0
        %v626 = vadd.f32 %v541, %v625
        %627 = vdwg.mxu0
        %v628 = vand.u32 %v278, 4294901760
        %v629 = vsub.f32 %v278, %v628
        %v630 = vand.u32 %v629, 4294901760
        %631 = vmatprep.subr.mxu0 %v630
        %v632 = vand.u32 %v276, 4294901760
        %v633 = vsub.f32 %v276, %v632
        %v634 = vand.u32 %v633, 4294901760
        %635 = vmatpush1.msra.mxu0 %v634
        %636 = vmatprep.subr.mxu0 0.0
        %637 = vmatpush1.msra.mxu0 0.0
        %638 = vmatprep.subr.mxu0 0.0
        %639 = vmatpush1.msra.mxu0 0.0
        %640 = vmatprep.subr.mxu0 0.0
        %641 = vmatpush1.msra.mxu0 0.0
        %642 = vmatprep.subr.mxu0 0.0
        %643 = vmatpush1.msra.mxu0 0.0
        %644 = vmatprep.subr.mxu0 0.0
        %645 = vmatpush1.msra.mxu0 0.0
        %646 = vmatprep.subr.mxu0 0.0
        %647 = vmatpush1.msra.mxu0 0.0
        %648 = vmatprep.subr.mxu0 0.0
        %649 = vmatpush1.msra.mxu0 0.0
        %650 = vmatprep.subr.mxu0 0.0
        %651 = vmatpush1.msra.mxu0 0.0
        %652 = vmatprep.subr.mxu0 0.0
        %653 = vmatpush1.msra.mxu0 0.0
        %654 = vmatprep.subr.mxu0 0.0
        %655 = vmatpush1.msra.mxu0 0.0
        %656 = vmatprep.subr.mxu0 0.0
        %657 = vmatpush1.msra.mxu0 0.0
        %658 = vmatprep.subr.mxu0 0.0
        %659 = vmatpush1.msra.mxu0 0.0
        %660 = vmatprep.subr.mxu0 0.0
        %661 = vmatpush1.msra.mxu0 0.0
        %662 = vmatprep.subr.mxu0 0.0
        %663 = vmatpush1.msra.mxu0 0.0
        %664 = vmatprep.subr.mxu0 0.0
        %665 = vmatpush1.msra.mxu0 0.0
        %666 = vmatprep.subr.mxu0 0.0
        %667 = vmatpush1.msra.mxu0 0.0
        %668 = vmatprep.subr.mxu0 0.0
        %669 = vmatpush1.msra.mxu0 0.0
        %670 = vmatprep.subr.mxu0 0.0
        %671 = vmatpush1.msra.mxu0 0.0
        %672 = vmatprep.subr.mxu0 0.0
        %673 = vmatpush1.msra.mxu0 0.0
        %674 = vmatprep.subr.mxu0 0.0
        %675 = vmatpush1.msra.mxu0 0.0
        %676 = vmatprep.subr.mxu0 0.0
        %677 = vmatpush1.msra.mxu0 0.0
        %678 = vmatprep.subr.mxu0 0.0
        %679 = vmatpush1.msra.mxu0 0.0
        %680 = vmatprep.subr.mxu0 0.0
        %681 = vmatpush1.msra.mxu0 0.0
        %682 = vmatprep.subr.mxu0 0.0
        %683 = vmatpush1.msra.mxu0 0.0
        %684 = vmatprep.subr.mxu0 0.0
        %685 = vmatpush1.msra.mxu0 0.0
        %686 = vmatprep.subr.mxu0 0.0
        %687 = vmatpush1.msra.mxu0 0.0
        %688 = vmatprep.subr.mxu0 0.0
        %689 = vmatpush1.msra.mxu0 0.0
        %690 = vmatprep.subr.mxu0 0.0
        %691 = vmatpush1.msra.mxu0 0.0
        %692 = vmatprep.subr.mxu0 0.0
        %693 = vmatpush1.msra.mxu0 0.0
        %694 = vmatprep.subr.mxu0 0.0
        %695 = vmatpush1.msra.mxu0 0.0
        %696 = vmatprep.subr.mxu0 0.0
        %697 = vmatpush1.msra.mxu0 0.0
        %698 = vmatprep.mubr.f32.mxu0 0.0
        %v699 = vand.u32 %v271, 4294901760
        %700 = vmatmul.mubr.f32.gmra.mrb[0].mxu0 %v699
        %v701 = vpop.f32.mrb[0].mxu0
        %v702 = vadd.f32 %v615, %v701
        %v703 = vpop.f32.mrb[0].mxu0
        %v704 = vadd.f32 %v617, %v703
        %705 = vmatprep.mubr.f32.mxu0 0.0
        %v706 = vand.u32 %v273, 4294901760
        %707 = vmatmul.mubr.f32.gmra.mrb[0].mxu0 %v706
        %v708 = vpop.f32.mrb[0].mxu0
        %v709 = vadd.f32 %v624, %v708
        %v710 = vpop.f32.mrb[0].mxu0
        %v711 = vadd.f32 %v626, %v710
        %712 = vdwg.mxu0
        %v713 = vand.u32 %v278, 4294901760
        %714 = vmatprep.subr.mxu0 %v713
        %v715 = vand.u32 %v276, 4294901760
        %716 = vmatpush1.msra.mxu0 %v715
        %717 = vmatprep.subr.mxu0 0.0
        %718 = vmatpush1.msra.mxu0 0.0
        %719 = vmatprep.subr.mxu0 0.0
        %720 = vmatpush1.msra.mxu0 0.0
        %721 = vmatprep.subr.mxu0 0.0
        %722 = vmatpush1.msra.mxu0 0.0
        %723 = vmatprep.subr.mxu0 0.0
        %724 = vmatpush1.msra.mxu0 0.0
        %725 = vmatprep.subr.mxu0 0.0
        %726 = vmatpush1.msra.mxu0 0.0
        %727 = vmatprep.subr.mxu0 0.0
        %728 = vmatpush1.msra.mxu0 0.0
        %729 = vmatprep.subr.mxu0 0.0
        %730 = vmatpush1.msra.mxu0 0.0
        %731 = vmatprep.subr.mxu0 0.0
        %732 = vmatpush1.msra.mxu0 0.0
        %733 = vmatprep.subr.mxu0 0.0
        %734 = vmatpush1.msra.mxu0 0.0
        %735 = vmatprep.subr.mxu0 0.0
        %736 = vmatpush1.msra.mxu0 0.0
        %737 = vmatprep.subr.mxu0 0.0
        %738 = vmatpush1.msra.mxu0 0.0
        %739 = vmatprep.subr.mxu0 0.0
        %740 = vmatpush1.msra.mxu0 0.0
        %741 = vmatprep.subr.mxu0 0.0
        %742 = vmatpush1.msra.mxu0 0.0
        %743 = vmatprep.subr.mxu0 0.0
        %744 = vmatpush1.msra.mxu0 0.0
        %745 = vmatprep.subr.mxu0 0.0
        %746 = vmatpush1.msra.mxu0 0.0
        %747 = vmatprep.subr.mxu0 0.0
        %748 = vmatpush1.msra.mxu0 0.0
        %749 = vmatprep.subr.mxu0 0.0
        %750 = vmatpush1.msra.mxu0 0.0
        %751 = vmatprep.subr.mxu0 0.0
        %752 = vmatpush1.msra.mxu0 0.0
        %753 = vmatprep.subr.mxu0 0.0
        %754 = vmatpush1.msra.mxu0 0.0
        %755 = vmatprep.subr.mxu0 0.0
        %756 = vmatpush1.msra.mxu0 0.0
        %757 = vmatprep.subr.mxu0 0.0
        %758 = vmatpush1.msra.mxu0 0.0
        %759 = vmatprep.subr.mxu0 0.0
        %760 = vmatpush1.msra.mxu0 0.0
        %761 = vmatprep.subr.mxu0 0.0
        %762 = vmatpush1.msra.mxu0 0.0
        %763 = vmatprep.subr.mxu0 0.0
        %764 = vmatpush1.msra.mxu0 0.0
        %765 = vmatprep.subr.mxu0 0.0
        %766 = vmatpush1.msra.mxu0 0.0
        %767 = vmatprep.subr.mxu0 0.0
        %768 = vmatpush1.msra.mxu0 0.0
        %769 = vmatprep.subr.mxu0 0.0
        %770 = vmatpush1.msra.mxu0 0.0
        %771 = vmatprep.subr.mxu0 0.0
        %772 = vmatpush1.msra.mxu0 0.0
        %773 = vmatprep.subr.mxu0 0.0
        %774 = vmatpush1.msra.mxu0 0.0
        %775 = vmatprep.subr.mxu0 0.0
        %776 = vmatpush1.msra.mxu0 0.0
        %777 = vmatprep.subr.mxu0 0.0
        %778 = vmatpush1.msra.mxu0 0.0
        %779 = vmatprep.mubr.f32.mxu0 0.0
        %v780 = vand.u32 %v271, 4294901760
        %781 = vmatmul.mubr.f32.gmra.mrb[0].mxu0 %v780
        %v782 = vpop.f32.mrb[0].mxu0
        %v783 = vadd.f32 %v702, %v782
        %v784 = vpop.f32.mrb[0].mxu0
        %v785 = vadd.f32 %v704, %v784
        %786 = vmatprep.mubr.f32.mxu0 0.0
        %v787 = vand.u32 %v273, 4294901760
        %788 = vmatmul.mubr.f32.gmra.mrb[0].mxu0 %v787
        %v789 = vpop.f32.mrb[0].mxu0
        %v790 = vadd.f32 %v709, %v789
        %v791 = vpop.f32.mrb[0].mxu0
        %v792 = vadd.f32 %v711, %v791
        %793 = vdwg.mxu0
        %vm794 = vcmp.gt.f32.partialorder %v783, 0.0
        %vm795 = vcmp.gt.f32.partialorder %v785, 0.0
        %vm796 = vcmp.gt.f32.partialorder %v790, 0.0
        %vm797 = vcmp.gt.f32.partialorder %v792, 0.0
        %v798 = vmul.f32 %v783, 0.01
        %v799 = vmul.f32 %v785, 0.01
        %v800 = vmul.f32 %v790, 0.01
        %v801 = vmul.f32 %v792, 0.01
        %v802 = vsel %vm794, %v783, %v798
        %v803 = vsel %vm795, %v785, %v799
        %v804 = vsel %vm796, %v790, %v800
        %v805 = vsel %vm797, %v792, %v801
        %807 = vset.pattern.permute.xlu0 16
        %808 = vperm.xlu0 %807, %v251
        %v809 = vpop.permute.xlu0 %808
        %812 = vset.pattern.permute.xlu0 16
        %813 = vperm.xlu0 %812, %v252
        %v814 = vpop.permute.xlu0 %813
        %vm816 = vcmask 130048
        %v817 = vsel %vm816, %v251, 0
        %v819 = vsel %vm816, %v252, 0
        %v821 = vand.u32 %v803, 4294901760
        %822 = vmatprep.subr.mxu0 %v821
        %v823 = vand.u32 %v802, 4294901760
        %824 = vmatpush1.msra.mxu0 %v823
        %v825 = vand.u32 %v805, 4294901760
        %826 = vmatprep.subr.mxu0 %v825
        %v827 = vand.u32 %v804, 4294901760
        %828 = vmatpush1.msra.mxu0 %v827
        %829 = vmatprep.subr.mxu0 0.0
        %830 = vmatpush1.msra.mxu0 0.0
        %831 = vmatprep.subr.mxu0 0.0
        %832 = vmatpush1.msra.mxu0 0.0
        %833 = vmatprep.subr.mxu0 0.0
        %834 = vmatpush1.msra.mxu0 0.0
        %835 = vmatprep.subr.mxu0 0.0
        %836 = vmatpush1.msra.mxu0 0.0
        %837 = vmatprep.subr.mxu0 0.0
        %838 = vmatpush1.msra.mxu0 0.0
        %839 = vmatprep.subr.mxu0 0.0
        %840 = vmatpush1.msra.mxu0 0.0
        %841 = vmatprep.subr.mxu0 0.0
        %842 = vmatpush1.msra.mxu0 0.0
        %843 = vmatprep.subr.mxu0 0.0
        %844 = vmatpush1.msra.mxu0 0.0
        %845 = vmatprep.subr.mxu0 0.0
        %846 = vmatpush1.msra.mxu0 0.0
        %847 = vmatprep.subr.mxu0 0.0
        %848 = vmatpush1.msra.mxu0 0.0
        %849 = vmatprep.subr.mxu0 0.0
        %850 = vmatpush1.msra.mxu0 0.0
        %851 = vmatprep.subr.mxu0 0.0
        %852 = vmatpush1.msra.mxu0 0.0
        %853 = vmatprep.subr.mxu0 0.0
        %854 = vmatpush1.msra.mxu0 0.0
        %855 = vmatprep.subr.mxu0 0.0
        %856 = vmatpush1.msra.mxu0 0.0
        %857 = vmatprep.subr.mxu0 0.0
        %858 = vmatpush1.msra.mxu0 0.0
        %859 = vmatprep.subr.mxu0 0.0
        %860 = vmatpush1.msra.mxu0 0.0
        %861 = vmatprep.subr.mxu0 0.0
        %862 = vmatpush1.msra.mxu0 0.0
        %863 = vmatprep.subr.mxu0 0.0
        %864 = vmatpush1.msra.mxu0 0.0
        %865 = vmatprep.subr.mxu0 0.0
        %866 = vmatpush1.msra.mxu0 0.0
        %867 = vmatprep.subr.mxu0 0.0
        %868 = vmatpush1.msra.mxu0 0.0
        %869 = vmatprep.subr.mxu0 0.0
        %870 = vmatpush1.msra.mxu0 0.0
        %871 = vmatprep.subr.mxu0 0.0
        %872 = vmatpush1.msra.mxu0 0.0
        %873 = vmatprep.subr.mxu0 0.0
        %874 = vmatpush1.msra.mxu0 0.0
        %875 = vmatprep.subr.mxu0 0.0
        %876 = vmatpush1.msra.mxu0 0.0
        %877 = vmatprep.subr.mxu0 0.0
        %878 = vmatpush1.msra.mxu0 0.0
        %879 = vmatprep.subr.mxu0 0.0
        %880 = vmatpush1.msra.mxu0 0.0
        %881 = vmatprep.subr.mxu0 0.0
        %882 = vmatpush1.msra.mxu0 0.0
        %883 = vmatprep.subr.mxu0 0.0
        %884 = vmatpush1.msra.mxu0 0.0
        %885 = vmatprep.subr.mxu0 0.0
        %886 = vmatpush1.msra.mxu0 0.0
        %887 = vmatprep.subr.mxu0 0.0
        %888 = vmatpush1.msra.mxu0 0.0
        %889 = vmatprep.mubr.f32.mxu0 0.0
        %v890 = vand.u32 %v817, 4294901760
        %v891 = vsub.f32 %v817, %v890
        %v892 = vand.u32 %v891, 4294901760
        %v893 = vsub.f32 %v891, %v892
        %v894 = vand.u32 %v893, 4294901760
        %895 = vmatmul.mubr.f32.gmra.mrb[0].mxu0 %v894
        %v896 = vpop.f32.mrb[0].mxu0
        %v897 = vadd.f32 %v809, %v896
        %v898 = vpop.f32.mrb[0].mxu0
        %v899 = vadd.f32 %v809, %v898
        %900 = vmatprep.mubr.f32.mxu0 0.0
        %v901 = vand.u32 %v819, 4294901760
        %v902 = vsub.f32 %v819, %v901
        %v903 = vand.u32 %v902, 4294901760
        %v904 = vsub.f32 %v902, %v903
        %v905 = vand.u32 %v904, 4294901760
        %906 = vmatmul.mubr.f32.gmra.mrb[0].mxu0 %v905
        %v907 = vpop.f32.mrb[0].mxu0
        %v908 = vadd.f32 %v814, %v907
        %v909 = vpop.f32.mrb[0].mxu0
        %v910 = vadd.f32 %v814, %v909
        %911 = vdwg.mxu0
        %v912 = vand.u32 %v803, 4294901760
        %v913 = vsub.f32 %v803, %v912
        %v914 = vand.u32 %v913, 4294901760
        %v915 = vsub.f32 %v913, %v914
        %v916 = vand.u32 %v915, 4294901760
        %917 = vmatprep.subr.mxu0 %v916
        %v918 = vand.u32 %v802, 4294901760
        %v919 = vsub.f32 %v802, %v918
        %v920 = vand.u32 %v919, 4294901760
        %v921 = vsub.f32 %v919, %v920
        %v922 = vand.u32 %v921, 4294901760
        %923 = vmatpush1.msra.mxu0 %v922
        %v924 = vand.u32 %v805, 4294901760
        %v925 = vsub.f32 %v805, %v924
        %v926 = vand.u32 %v925, 4294901760
        %v927 = vsub.f32 %v925, %v926
        %v928 = vand.u32 %v927, 4294901760
        %929 = vmatprep.subr.mxu0 %v928
        %v930 = vand.u32 %v804, 4294901760
        %v931 = vsub.f32 %v804, %v930
        %v932 = vand.u32 %v931, 4294901760
        %v933 = vsub.f32 %v931, %v932
        %v934 = vand.u32 %v933, 4294901760
        %935 = vmatpush1.msra.mxu0 %v934
        %936 = vmatprep.subr.mxu0 0.0
        %937 = vmatpush1.msra.mxu0 0.0
        %938 = vmatprep.subr.mxu0 0.0
        %939 = vmatpush1.msra.mxu0 0.0
        %940 = vmatprep.subr.mxu0 0.0
        %941 = vmatpush1.msra.mxu0 0.0
        %942 = vmatprep.subr.mxu0 0.0
        %943 = vmatpush1.msra.mxu0 0.0
        %944 = vmatprep.subr.mxu0 0.0
        %945 = vmatpush1.msra.mxu0 0.0
        %946 = vmatprep.subr.mxu0 0.0
        %947 = vmatpush1.msra.mxu0 0.0
        %948 = vmatprep.subr.mxu0 0.0
        %949 = vmatpush1.msra.mxu0 0.0
        %950 = vmatprep.subr.mxu0 0.0
        %951 = vmatpush1.msra.mxu0 0.0
        %952 = vmatprep.subr.mxu0 0.0
        %953 = vmatpush1.msra.mxu0 0.0
        %954 = vmatprep.subr.mxu0 0.0
        %955 = vmatpush1.msra.mxu0 0.0
        %956 = vmatprep.subr.mxu0 0.0
        %957 = vmatpush1.msra.mxu0 0.0
        %958 = vmatprep.subr.mxu0 0.0
        %959 = vmatpush1.msra.mxu0 0.0
        %960 = vmatprep.subr.mxu0 0.0
        %961 = vmatpush1.msra.mxu0 0.0
        %962 = vmatprep.subr.mxu0 0.0
        %963 = vmatpush1.msra.mxu0 0.0
        %964 = vmatprep.subr.mxu0 0.0
        %965 = vmatpush1.msra.mxu0 0.0
        %966 = vmatprep.subr.mxu0 0.0
        %967 = vmatpush1.msra.mxu0 0.0
        %968 = vmatprep.subr.mxu0 0.0
        %969 = vmatpush1.msra.mxu0 0.0
        %970 = vmatprep.subr.mxu0 0.0
        %971 = vmatpush1.msra.mxu0 0.0
        %972 = vmatprep.subr.mxu0 0.0
        %973 = vmatpush1.msra.mxu0 0.0
        %974 = vmatprep.subr.mxu0 0.0
        %975 = vmatpush1.msra.mxu0 0.0
        %976 = vmatprep.subr.mxu0 0.0
        %977 = vmatpush1.msra.mxu0 0.0
        %978 = vmatprep.subr.mxu0 0.0
        %979 = vmatpush1.msra.mxu0 0.0
        %980 = vmatprep.subr.mxu0 0.0
        %981 = vmatpush1.msra.mxu0 0.0
        %982 = vmatprep.subr.mxu0 0.0
        %983 = vmatpush1.msra.mxu0 0.0
        %984 = vmatprep.subr.mxu0 0.0
        %985 = vmatpush1.msra.mxu0 0.0
        %986 = vmatprep.subr.mxu0 0.0
        %987 = vmatpush1.msra.mxu0 0.0
        %988 = vmatprep.subr.mxu0 0.0
        %989 = vmatpush1.msra.mxu0 0.0
        %990 = vmatprep.subr.mxu0 0.0
        %991 = vmatpush1.msra.mxu0 0.0
        %992 = vmatprep.subr.mxu0 0.0
        %993 = vmatpush1.msra.mxu0 0.0
        %994 = vmatprep.subr.mxu0 0.0
        %995 = vmatpush1.msra.mxu0 0.0
        %996 = vmatprep.mubr.f32.mxu0 0.0
        %v997 = vand.u32 %v817, 4294901760
        %998 = vmatmul.mubr.f32.gmra.mrb[0].mxu0 %v997
        %v999 = vpop.f32.mrb[0].mxu0
        %v1000 = vadd.f32 %v897, %v999
        %v1001 = vpop.f32.mrb[0].mxu0
        %v1002 = vadd.f32 %v899, %v1001
        %1003 = vmatprep.mubr.f32.mxu0 0.0
        %v1004 = vand.u32 %v819, 4294901760
        %1005 = vmatmul.mubr.f32.gmra.mrb[0].mxu0 %v1004
        %v1006 = vpop.f32.mrb[0].mxu0
        %v1007 = vadd.f32 %v908, %v1006
        %v1008 = vpop.f32.mrb[0].mxu0
        %v1009 = vadd.f32 %v910, %v1008
        %1010 = vdwg.mxu0
        %v1011 = vand.u32 %v803, 4294901760
        %v1012 = vsub.f32 %v803, %v1011
        %1013 = vmatprep.subr.mxu0 %v1012
        %v1014 = vand.u32 %v802, 4294901760
        %v1015 = vsub.f32 %v802, %v1014
        %1016 = vmatpush1.msra.mxu0 %v1015
        %v1017 = vand.u32 %v805, 4294901760
        %v1018 = vsub.f32 %v805, %v1017
        %1019 = vmatprep.subr.mxu0 %v1018
        %v1020 = vand.u32 %v804, 4294901760
        %v1021 = vsub.f32 %v804, %v1020
        %1022 = vmatpush1.msra.mxu0 %v1021
        %1023 = vmatprep.subr.mxu0 0.0
        %1024 = vmatpush1.msra.mxu0 0.0
        %1025 = vmatprep.subr.mxu0 0.0
        %1026 = vmatpush1.msra.mxu0 0.0
        %1027 = vmatprep.subr.mxu0 0.0
        %1028 = vmatpush1.msra.mxu0 0.0
        %1029 = vmatprep.subr.mxu0 0.0
        %1030 = vmatpush1.msra.mxu0 0.0
        %1031 = vmatprep.subr.mxu0 0.0
        %1032 = vmatpush1.msra.mxu0 0.0
        %1033 = vmatprep.subr.mxu0 0.0
        %1034 = vmatpush1.msra.mxu0 0.0
        %1035 = vmatprep.subr.mxu0 0.0
        %1036 = vmatpush1.msra.mxu0 0.0
        %1037 = vmatprep.subr.mxu0 0.0
        %1038 = vmatpush1.msra.mxu0 0.0
        %1039 = vmatprep.subr.mxu0 0.0
        %1040 = vmatpush1.msra.mxu0 0.0
        %1041 = vmatprep.subr.mxu0 0.0
        %1042 = vmatpush1.msra.mxu0 0.0
        %1043 = vmatprep.subr.mxu0 0.0
        %1044 = vmatpush1.msra.mxu0 0.0
        %1045 = vmatprep.subr.mxu0 0.0
        %1046 = vmatpush1.msra.mxu0 0.0
        %1047 = vmatprep.subr.mxu0 0.0
        %1048 = vmatpush1.msra.mxu0 0.0
        %1049 = vmatprep.subr.mxu0 0.0
        %1050 = vmatpush1.msra.mxu0 0.0
        %1051 = vmatprep.subr.mxu0 0.0
        %1052 = vmatpush1.msra.mxu0 0.0
        %1053 = vmatprep.subr.mxu0 0.0
        %1054 = vmatpush1.msra.mxu0 0.0
        %1055 = vmatprep.subr.mxu0 0.0
        %1056 = vmatpush1.msra.mxu0 0.0
        %1057 = vmatprep.subr.mxu0 0.0
        %1058 = vmatpush1.msra.mxu0 0.0
        %1059 = vmatprep.subr.mxu0 0.0
        %1060 = vmatpush1.msra.mxu0 0.0
        %1061 = vmatprep.subr.mxu0 0.0
        %1062 = vmatpush1.msra.mxu0 0.0
        %1063 = vmatprep.subr.mxu0 0.0
        %1064 = vmatpush1.msra.mxu0 0.0
        %1065 = vmatprep.subr.mxu0 0.0
        %1066 = vmatpush1.msra.mxu0 0.0
        %1067 = vmatprep.subr.mxu0 0.0
        %1068 = vmatpush1.msra.mxu0 0.0
        %1069 = vmatprep.subr.mxu0 0.0
        %1070 = vmatpush1.msra.mxu0 0.0
        %1071 = vmatprep.subr.mxu0 0.0
        %1072 = vmatpush1.msra.mxu0 0.0
        %1073 = vmatprep.subr.mxu0 0.0
        %1074 = vmatpush1.msra.mxu0 0.0
        %1075 = vmatprep.subr.mxu0 0.0
        %1076 = vmatpush1.msra.mxu0 0.0
        %1077 = vmatprep.subr.mxu0 0.0
        %1078 = vmatpush1.msra.mxu0 0.0
        %1079 = vmatprep.subr.mxu0 0.0
        %1080 = vmatpush1.msra.mxu0 0.0
        %1081 = vmatprep.subr.mxu0 0.0
        %1082 = vmatpush1.msra.mxu0 0.0
        %1083 = vmatprep.mubr.f32.mxu0 0.0
        %v1084 = vand.u32 %v817, 4294901760
        %v1085 = vsub.f32 %v817, %v1084
        %1086 = vmatmul.mubr.f32.gmra.mrb[0].mxu0 %v1085
        %v1087 = vpop.f32.mrb[0].mxu0
        %v1088 = vadd.f32 %v1000, %v1087
        %v1089 = vpop.f32.mrb[0].mxu0
        %v1090 = vadd.f32 %v1002, %v1089
        %1091 = vmatprep.mubr.f32.mxu0 0.0
        %v1092 = vand.u32 %v819, 4294901760
        %v1093 = vsub.f32 %v819, %v1092
        %1094 = vmatmul.mubr.f32.gmra.mrb[0].mxu0 %v1093
        %v1095 = vpop.f32.mrb[0].mxu0
        %v1096 = vadd.f32 %v1007, %v1095
        %v1097 = vpop.f32.mrb[0].mxu0
        %v1098 = vadd.f32 %v1009, %v1097
        %1099 = vdwg.mxu0
        %v1100 = vand.u32 %v803, 4294901760
        %1101 = vmatprep.subr.mxu0 %v1100
        %v1102 = vand.u32 %v802, 4294901760
        %1103 = vmatpush1.msra.mxu0 %v1102
        %v1104 = vand.u32 %v805, 4294901760
        %1105 = vmatprep.subr.mxu0 %v1104
        %v1106 = vand.u32 %v804, 4294901760
        %1107 = vmatpush1.msra.mxu0 %v1106
        %1108 = vmatprep.subr.mxu0 0.0
        %1109 = vmatpush1.msra.mxu0 0.0
        %1110 = vmatprep.subr.mxu0 0.0
        %1111 = vmatpush1.msra.mxu0 0.0
        %1112 = vmatprep.subr.mxu0 0.0
        %1113 = vmatpush1.msra.mxu0 0.0
        %1114 = vmatprep.subr.mxu0 0.0
        %1115 = vmatpush1.msra.mxu0 0.0
        %1116 = vmatprep.subr.mxu0 0.0
        %1117 = vmatpush1.msra.mxu0 0.0
        %1118 = vmatprep.subr.mxu0 0.0
        %1119 = vmatpush1.msra.mxu0 0.0
        %1120 = vmatprep.subr.mxu0 0.0
        %1121 = vmatpush1.msra.mxu0 0.0
        %1122 = vmatprep.subr.mxu0 0.0
        %1123 = vmatpush1.msra.mxu0 0.0
        %1124 = vmatprep.subr.mxu0 0.0
        %1125 = vmatpush1.msra.mxu0 0.0
        %1126 = vmatprep.subr.mxu0 0.0
        %1127 = vmatpush1.msra.mxu0 0.0
        %1128 = vmatprep.subr.mxu0 0.0
        %1129 = vmatpush1.msra.mxu0 0.0
        %1130 = vmatprep.subr.mxu0 0.0
        %1131 = vmatpush1.msra.mxu0 0.0
        %1132 = vmatprep.subr.mxu0 0.0
        %1133 = vmatpush1.msra.mxu0 0.0
        %1134 = vmatprep.subr.mxu0 0.0
        %1135 = vmatpush1.msra.mxu0 0.0
        %1136 = vmatprep.subr.mxu0 0.0
        %1137 = vmatpush1.msra.mxu0 0.0
        %1138 = vmatprep.subr.mxu0 0.0
        %1139 = vmatpush1.msra.mxu0 0.0
        %1140 = vmatprep.subr.mxu0 0.0
        %1141 = vmatpush1.msra.mxu0 0.0
        %1142 = vmatprep.subr.mxu0 0.0
        %1143 = vmatpush1.msra.mxu0 0.0
        %1144 = vmatprep.subr.mxu0 0.0
        %1145 = vmatpush1.msra.mxu0 0.0
        %1146 = vmatprep.subr.mxu0 0.0
        %1147 = vmatpush1.msra.mxu0 0.0
        %1148 = vmatprep.subr.mxu0 0.0
        %1149 = vmatpush1.msra.mxu0 0.0
        %1150 = vmatprep.subr.mxu0 0.0
        %1151 = vmatpush1.msra.mxu0 0.0
        %1152 = vmatprep.subr.mxu0 0.0
        %1153 = vmatpush1.msra.mxu0 0.0
        %1154 = vmatprep.subr.mxu0 0.0
        %1155 = vmatpush1.msra.mxu0 0.0
        %1156 = vmatprep.subr.mxu0 0.0
        %1157 = vmatpush1.msra.mxu0 0.0
        %1158 = vmatprep.subr.mxu0 0.0
        %1159 = vmatpush1.msra.mxu0 0.0
        %1160 = vmatprep.subr.mxu0 0.0
        %1161 = vmatpush1.msra.mxu0 0.0
        %1162 = vmatprep.subr.mxu0 0.0
        %1163 = vmatpush1.msra.mxu0 0.0
        %1164 = vmatprep.subr.mxu0 0.0
        %1165 = vmatpush1.msra.mxu0 0.0
        %1166 = vmatprep.subr.mxu0 0.0
        %1167 = vmatpush1.msra.mxu0 0.0
        %1168 = vmatprep.mubr.f32.mxu0 0.0
        %v1169 = vand.u32 %v817, 4294901760
        %v1170 = vsub.f32 %v817, %v1169
        %v1171 = vand.u32 %v1170, 4294901760
        %1172 = vmatmul.mubr.f32.gmra.mrb[0].mxu0 %v1171
        %v1173 = vpop.f32.mrb[0].mxu0
        %v1174 = vadd.f32 %v1088, %v1173
        %v1175 = vpop.f32.mrb[0].mxu0
        %v1176 = vadd.f32 %v1090, %v1175
        %1177 = vmatprep.mubr.f32.mxu0 0.0
        %v1178 = vand.u32 %v819, 4294901760
        %v1179 = vsub.f32 %v819, %v1178
        %v1180 = vand.u32 %v1179, 4294901760
        %1181 = vmatmul.mubr.f32.gmra.mrb[0].mxu0 %v1180
        %v1182 = vpop.f32.mrb[0].mxu0
        %v1183 = vadd.f32 %v1096, %v1182
        %v1184 = vpop.f32.mrb[0].mxu0
        %v1185 = vadd.f32 %v1098, %v1184
        %1186 = vdwg.mxu0
        %v1187 = vand.u32 %v803, 4294901760
        %v1188 = vsub.f32 %v803, %v1187
        %v1189 = vand.u32 %v1188, 4294901760
        %1190 = vmatprep.subr.mxu0 %v1189
        %v1191 = vand.u32 %v802, 4294901760
        %v1192 = vsub.f32 %v802, %v1191
        %v1193 = vand.u32 %v1192, 4294901760
        %1194 = vmatpush1.msra.mxu0 %v1193
        %v1195 = vand.u32 %v805, 4294901760
        %v1196 = vsub.f32 %v805, %v1195
        %v1197 = vand.u32 %v1196, 4294901760
        %1198 = vmatprep.subr.mxu0 %v1197
        %v1199 = vand.u32 %v804, 4294901760
        %v1200 = vsub.f32 %v804, %v1199
        %v1201 = vand.u32 %v1200, 4294901760
        %1202 = vmatpush1.msra.mxu0 %v1201
        %1203 = vmatprep.subr.mxu0 0.0
        %1204 = vmatpush1.msra.mxu0 0.0
        %1205 = vmatprep.subr.mxu0 0.0
        %1206 = vmatpush1.msra.mxu0 0.0
        %1207 = vmatprep.subr.mxu0 0.0
        %1208 = vmatpush1.msra.mxu0 0.0
        %1209 = vmatprep.subr.mxu0 0.0
        %1210 = vmatpush1.msra.mxu0 0.0
        %1211 = vmatprep.subr.mxu0 0.0
        %1212 = vmatpush1.msra.mxu0 0.0
        %1213 = vmatprep.subr.mxu0 0.0
        %1214 = vmatpush1.msra.mxu0 0.0
        %1215 = vmatprep.subr.mxu0 0.0
        %1216 = vmatpush1.msra.mxu0 0.0
        %1217 = vmatprep.subr.mxu0 0.0
        %1218 = vmatpush1.msra.mxu0 0.0
        %1219 = vmatprep.subr.mxu0 0.0
        %1220 = vmatpush1.msra.mxu0 0.0
        %1221 = vmatprep.subr.mxu0 0.0
        %1222 = vmatpush1.msra.mxu0 0.0
        %1223 = vmatprep.subr.mxu0 0.0
        %1224 = vmatpush1.msra.mxu0 0.0
        %1225 = vmatprep.subr.mxu0 0.0
        %1226 = vmatpush1.msra.mxu0 0.0
        %1227 = vmatprep.subr.mxu0 0.0
        %1228 = vmatpush1.msra.mxu0 0.0
        %1229 = vmatprep.subr.mxu0 0.0
        %1230 = vmatpush1.msra.mxu0 0.0
        %1231 = vmatprep.subr.mxu0 0.0
        %1232 = vmatpush1.msra.mxu0 0.0
        %1233 = vmatprep.subr.mxu0 0.0
        %1234 = vmatpush1.msra.mxu0 0.0
        %1235 = vmatprep.subr.mxu0 0.0
        %1236 = vmatpush1.msra.mxu0 0.0
        %1237 = vmatprep.subr.mxu0 0.0
        %1238 = vmatpush1.msra.mxu0 0.0
        %1239 = vmatprep.subr.mxu0 0.0
        %1240 = vmatpush1.msra.mxu0 0.0
        %1241 = vmatprep.subr.mxu0 0.0
        %1242 = vmatpush1.msra.mxu0 0.0
        %1243 = vmatprep.subr.mxu0 0.0
        %1244 = vmatpush1.msra.mxu0 0.0
        %1245 = vmatprep.subr.mxu0 0.0
        %1246 = vmatpush1.msra.mxu0 0.0
        %1247 = vmatprep.subr.mxu0 0.0
        %1248 = vmatpush1.msra.mxu0 0.0
        %1249 = vmatprep.subr.mxu0 0.0
        %1250 = vmatpush1.msra.mxu0 0.0
        %1251 = vmatprep.subr.mxu0 0.0
        %1252 = vmatpush1.msra.mxu0 0.0
        %1253 = vmatprep.subr.mxu0 0.0
        %1254 = vmatpush1.msra.mxu0 0.0
        %1255 = vmatprep.subr.mxu0 0.0
        %1256 = vmatpush1.msra.mxu0 0.0
        %1257 = vmatprep.subr.mxu0 0.0
        %1258 = vmatpush1.msra.mxu0 0.0
        %1259 = vmatprep.subr.mxu0 0.0
        %1260 = vmatpush1.msra.mxu0 0.0
        %1261 = vmatprep.subr.mxu0 0.0
        %1262 = vmatpush1.msra.mxu0 0.0
        %1263 = vmatprep.mubr.f32.mxu0 0.0
        %v1264 = vand.u32 %v817, 4294901760
        %1265 = vmatmul.mubr.f32.gmra.mrb[0].mxu0 %v1264
        %v1266 = vpop.f32.mrb[0].mxu0
        %v1267 = vadd.f32 %v1174, %v1266
        %v1268 = vpop.f32.mrb[0].mxu0
        %v1269 = vadd.f32 %v1176, %v1268
        %1270 = vmatprep.mubr.f32.mxu0 0.0
        %v1271 = vand.u32 %v819, 4294901760
        %1272 = vmatmul.mubr.f32.gmra.mrb[0].mxu0 %v1271
        %v1273 = vpop.f32.mrb[0].mxu0
        %v1274 = vadd.f32 %v1183, %v1273
        %v1275 = vpop.f32.mrb[0].mxu0
        %v1276 = vadd.f32 %v1185, %v1275
        %1277 = vdwg.mxu0
        %v1278 = vand.u32 %v803, 4294901760
        %1279 = vmatprep.subr.mxu0 %v1278
        %v1280 = vand.u32 %v802, 4294901760
        %1281 = vmatpush1.msra.mxu0 %v1280
        %v1282 = vand.u32 %v805, 4294901760
        %1283 = vmatprep.subr.mxu0 %v1282
        %v1284 = vand.u32 %v804, 4294901760
        %1285 = vmatpush1.msra.mxu0 %v1284
        %1286 = vmatprep.subr.mxu0 0.0
        %1287 = vmatpush1.msra.mxu0 0.0
        %1288 = vmatprep.subr.mxu0 0.0
        %1289 = vmatpush1.msra.mxu0 0.0
        %1290 = vmatprep.subr.mxu0 0.0
        %1291 = vmatpush1.msra.mxu0 0.0
        %1292 = vmatprep.subr.mxu0 0.0
        %1293 = vmatpush1.msra.mxu0 0.0
        %1294 = vmatprep.subr.mxu0 0.0
        %1295 = vmatpush1.msra.mxu0 0.0
        %1296 = vmatprep.subr.mxu0 0.0
        %1297 = vmatpush1.msra.mxu0 0.0
        %1298 = vmatprep.subr.mxu0 0.0
        %1299 = vmatpush1.msra.mxu0 0.0
        %1300 = vmatprep.subr.mxu0 0.0
        %1301 = vmatpush1.msra.mxu0 0.0
        %1302 = vmatprep.subr.mxu0 0.0
        %1303 = vmatpush1.msra.mxu0 0.0
        %1304 = vmatprep.subr.mxu0 0.0
        %1305 = vmatpush1.msra.mxu0 0.0
        %1306 = vmatprep.subr.mxu0 0.0
        %1307 = vmatpush1.msra.mxu0 0.0
        %1308 = vmatprep.subr.mxu0 0.0
        %1309 = vmatpush1.msra.mxu0 0.0
        %1310 = vmatprep.subr.mxu0 0.0
        %1311 = vmatpush1.msra.mxu0 0.0
        %1312 = vmatprep.subr.mxu0 0.0
        %1313 = vmatpush1.msra.mxu0 0.0
        %1314 = vmatprep.subr.mxu0 0.0
        %1315 = vmatpush1.msra.mxu0 0.0
        %1316 = vmatprep.subr.mxu0 0.0
        %1317 = vmatpush1.msra.mxu0 0.0
        %1318 = vmatprep.subr.mxu0 0.0
        %1319 = vmatpush1.msra.mxu0 0.0
        %1320 = vmatprep.subr.mxu0 0.0
        %1321 = vmatpush1.msra.mxu0 0.0
        %1322 = vmatprep.subr.mxu0 0.0
        %1323 = vmatpush1.msra.mxu0 0.0
        %1324 = vmatprep.subr.mxu0 0.0
        %1325 = vmatpush1.msra.mxu0 0.0
        %1326 = vmatprep.subr.mxu0 0.0
        %1327 = vmatpush1.msra.mxu0 0.0
        %1328 = vmatprep.subr.mxu0 0.0
        %1329 = vmatpush1.msra.mxu0 0.0
        %1330 = vmatprep.subr.mxu0 0.0
        %1331 = vmatpush1.msra.mxu0 0.0
        %1332 = vmatprep.subr.mxu0 0.0
        %1333 = vmatpush1.msra.mxu0 0.0
        %1334 = vmatprep.subr.mxu0 0.0
        %1335 = vmatpush1.msra.mxu0 0.0
        %1336 = vmatprep.subr.mxu0 0.0
        %1337 = vmatpush1.msra.mxu0 0.0
        %1338 = vmatprep.subr.mxu0 0.0
        %1339 = vmatpush1.msra.mxu0 0.0
        %1340 = vmatprep.subr.mxu0 0.0
        %1341 = vmatpush1.msra.mxu0 0.0
        %1342 = vmatprep.subr.mxu0 0.0
        %1343 = vmatpush1.msra.mxu0 0.0
        %1344 = vmatprep.subr.mxu0 0.0
        %1345 = vmatpush1.msra.mxu0 0.0
        %1346 = vmatprep.mubr.f32.mxu0 0.0
        %v1347 = vand.u32 %v817, 4294901760
        %1348 = vmatmul.mubr.f32.gmra.mrb[0].mxu0 %v1347
        %v1349 = vpop.f32.mrb[0].mxu0
        %v1350 = vadd.f32 %v1267, %v1349
        %v1351 = vpop.f32.mrb[0].mxu0
        %v1352 = vadd.f32 %v1269, %v1351
        %1353 = vmatprep.mubr.f32.mxu0 0.0
        %v1354 = vand.u32 %v819, 4294901760
        %1355 = vmatmul.mubr.f32.gmra.mrb[0].mxu0 %v1354
        %v1356 = vpop.f32.mrb[0].mxu0
        %v1357 = vadd.f32 %v1274, %v1356
        %v1358 = vpop.f32.mrb[0].mxu0
        %v1359 = vadd.f32 %v1276, %v1358
        %1360 = vdwg.mxu0
        %vm1361 = vcmp.gt.f32.partialorder %v1350, 0.0
        %vm1362 = vcmp.gt.f32.partialorder %v1352, 0.0
        %vm1363 = vcmp.gt.f32.partialorder %v1357, 0.0
        %vm1364 = vcmp.gt.f32.partialorder %v1359, 0.0
        %v1365 = vmul.f32 %v1350, 0.01
        %v1366 = vmul.f32 %v1352, 0.01
        %v1367 = vmul.f32 %v1357, 0.01
        %v1368 = vmul.f32 %v1359, 0.01
        %v1369 = vsel %vm1361, %v1350, %v1365
        %v1370 = vsel %vm1362, %v1352, %v1366
        %v1371 = vsel %vm1363, %v1357, %v1367
        %v1372 = vsel %vm1364, %v1359, %v1368
        %1374 = vset.pattern.permute.xlu0 16
        %1375 = vperm.xlu0 %1374, %v253
        %v1376 = vpop.permute.xlu0 %1375
        %v1378 = vsel %vm816, %v253, 0
        %v1380 = vand.u32 %v1370, 4294901760
        %1381 = vmatprep.subr.mxu0 %v1380
        %v1382 = vand.u32 %v1369, 4294901760
        %1383 = vmatpush1.msra.mxu0 %v1382
        %v1384 = vand.u32 %v1372, 4294901760
        %1385 = vmatprep.subr.mxu0 %v1384
        %v1386 = vand.u32 %v1371, 4294901760
        %1387 = vmatpush1.msra.mxu0 %v1386
        %1388 = vmatprep.subr.mxu0 0.0
        %1389 = vmatpush1.msra.mxu0 0.0
        %1390 = vmatprep.subr.mxu0 0.0
        %1391 = vmatpush1.msra.mxu0 0.0
        %1392 = vmatprep.subr.mxu0 0.0
        %1393 = vmatpush1.msra.mxu0 0.0
        %1394 = vmatprep.subr.mxu0 0.0
        %1395 = vmatpush1.msra.mxu0 0.0
        %1396 = vmatprep.subr.mxu0 0.0
        %1397 = vmatpush1.msra.mxu0 0.0
        %1398 = vmatprep.subr.mxu0 0.0
        %1399 = vmatpush1.msra.mxu0 0.0
        %1400 = vmatprep.subr.mxu0 0.0
        %1401 = vmatpush1.msra.mxu0 0.0
        %1402 = vmatprep.subr.mxu0 0.0
        %1403 = vmatpush1.msra.mxu0 0.0
        %1404 = vmatprep.subr.mxu0 0.0
        %1405 = vmatpush1.msra.mxu0 0.0
        %1406 = vmatprep.subr.mxu0 0.0
        %1407 = vmatpush1.msra.mxu0 0.0
        %1408 = vmatprep.subr.mxu0 0.0
        %1409 = vmatpush1.msra.mxu0 0.0
        %1410 = vmatprep.subr.mxu0 0.0
        %1411 = vmatpush1.msra.mxu0 0.0
        %1412 = vmatprep.subr.mxu0 0.0
        %1413 = vmatpush1.msra.mxu0 0.0
        %1414 = vmatprep.subr.mxu0 0.0
        %1415 = vmatpush1.msra.mxu0 0.0
        %1416 = vmatprep.subr.mxu0 0.0
        %1417 = vmatpush1.msra.mxu0 0.0
        %1418 = vmatprep.subr.mxu0 0.0
        %1419 = vmatpush1.msra.mxu0 0.0
        %1420 = vmatprep.subr.mxu0 0.0
        %1421 = vmatpush1.msra.mxu0 0.0
        %1422 = vmatprep.subr.mxu0 0.0
        %1423 = vmatpush1.msra.mxu0 0.0
        %1424 = vmatprep.subr.mxu0 0.0
        %1425 = vmatpush1.msra.mxu0 0.0
        %1426 = vmatprep.subr.mxu0 0.0
        %1427 = vmatpush1.msra.mxu0 0.0
        %1428 = vmatprep.subr.mxu0 0.0
        %1429 = vmatpush1.msra.mxu0 0.0
        %1430 = vmatprep.subr.mxu0 0.0
        %1431 = vmatpush1.msra.mxu0 0.0
        %1432 = vmatprep.subr.mxu0 0.0
        %1433 = vmatpush1.msra.mxu0 0.0
        %1434 = vmatprep.subr.mxu0 0.0
        %1435 = vmatpush1.msra.mxu0 0.0
        %1436 = vmatprep.subr.mxu0 0.0
        %1437 = vmatpush1.msra.mxu0 0.0
        %1438 = vmatprep.subr.mxu0 0.0
        %1439 = vmatpush1.msra.mxu0 0.0
        %1440 = vmatprep.subr.mxu0 0.0
        %1441 = vmatpush1.msra.mxu0 0.0
        %1442 = vmatprep.subr.mxu0 0.0
        %1443 = vmatpush1.msra.mxu0 0.0
        %1444 = vmatprep.subr.mxu0 0.0
        %1445 = vmatpush1.msra.mxu0 0.0
        %1446 = vmatprep.subr.mxu0 0.0
        %1447 = vmatpush1.msra.mxu0 0.0
        %1448 = vmatprep.mubr.f32.mxu0 0.0
        %v1449 = vand.u32 %v1378, 4294901760
        %v1450 = vsub.f32 %v1378, %v1449
        %v1451 = vand.u32 %v1450, 4294901760
        %v1452 = vsub.f32 %v1450, %v1451
        %v1453 = vand.u32 %v1452, 4294901760
        %1454 = vmatmul.mubr.f32.gmra.mrb[0].mxu0 %v1453
        %v1455 = vpop.f32.mrb[0].mxu0
        %v1456 = vadd.f32 %v1376, %v1455
        %v1457 = vpop.f32.mrb[0].mxu0
        %v1458 = vadd.f32 %v1376, %v1457
        %1459 = vdwg.mxu0
        %v1460 = vand.u32 %v1370, 4294901760
        %v1461 = vsub.f32 %v1370, %v1460
        %v1462 = vand.u32 %v1461, 4294901760
        %v1463 = vsub.f32 %v1461, %v1462
        %v1464 = vand.u32 %v1463, 4294901760
        %1465 = vmatprep.subr.mxu0 %v1464
        %v1466 = vand.u32 %v1369, 4294901760
        %v1467 = vsub.f32 %v1369, %v1466
        %v1468 = vand.u32 %v1467, 4294901760
        %v1469 = vsub.f32 %v1467, %v1468
        %v1470 = vand.u32 %v1469, 4294901760
        %1471 = vmatpush1.msra.mxu0 %v1470
        %v1472 = vand.u32 %v1372, 4294901760
        %v1473 = vsub.f32 %v1372, %v1472
        %v1474 = vand.u32 %v1473, 4294901760
        %v1475 = vsub.f32 %v1473, %v1474
        %v1476 = vand.u32 %v1475, 4294901760
        %1477 = vmatprep.subr.mxu0 %v1476
        %v1478 = vand.u32 %v1371, 4294901760
        %v1479 = vsub.f32 %v1371, %v1478
        %v1480 = vand.u32 %v1479, 4294901760
        %v1481 = vsub.f32 %v1479, %v1480
        %v1482 = vand.u32 %v1481, 4294901760
        %1483 = vmatpush1.msra.mxu0 %v1482
        %1484 = vmatprep.subr.mxu0 0.0
        %1485 = vmatpush1.msra.mxu0 0.0
        %1486 = vmatprep.subr.mxu0 0.0
        %1487 = vmatpush1.msra.mxu0 0.0
        %1488 = vmatprep.subr.mxu0 0.0
        %1489 = vmatpush1.msra.mxu0 0.0
        %1490 = vmatprep.subr.mxu0 0.0
        %1491 = vmatpush1.msra.mxu0 0.0
        %1492 = vmatprep.subr.mxu0 0.0
        %1493 = vmatpush1.msra.mxu0 0.0
        %1494 = vmatprep.subr.mxu0 0.0
        %1495 = vmatpush1.msra.mxu0 0.0
        %1496 = vmatprep.subr.mxu0 0.0
        %1497 = vmatpush1.msra.mxu0 0.0
        %1498 = vmatprep.subr.mxu0 0.0
        %1499 = vmatpush1.msra.mxu0 0.0
        %1500 = vmatprep.subr.mxu0 0.0
        %1501 = vmatpush1.msra.mxu0 0.0
        %1502 = vmatprep.subr.mxu0 0.0
        %1503 = vmatpush1.msra.mxu0 0.0
        %1504 = vmatprep.subr.mxu0 0.0
        %1505 = vmatpush1.msra.mxu0 0.0
        %1506 = vmatprep.subr.mxu0 0.0
        %1507 = vmatpush1.msra.mxu0 0.0
        %1508 = vmatprep.subr.mxu0 0.0
        %1509 = vmatpush1.msra.mxu0 0.0
        %1510 = vmatprep.subr.mxu0 0.0
        %1511 = vmatpush1.msra.mxu0 0.0
        %1512 = vmatprep.subr.mxu0 0.0
        %1513 = vmatpush1.msra.mxu0 0.0
        %1514 = vmatprep.subr.mxu0 0.0
        %1515 = vmatpush1.msra.mxu0 0.0
        %1516 = vmatprep.subr.mxu0 0.0
        %1517 = vmatpush1.msra.mxu0 0.0
        %1518 = vmatprep.subr.mxu0 0.0
        %1519 = vmatpush1.msra.mxu0 0.0
        %1520 = vmatprep.subr.mxu0 0.0
        %1521 = vmatpush1.msra.mxu0 0.0
        %1522 = vmatprep.subr.mxu0 0.0
        %1523 = vmatpush1.msra.mxu0 0.0
        %1524 = vmatprep.subr.mxu0 0.0
        %1525 = vmatpush1.msra.mxu0 0.0
        %1526 = vmatprep.subr.mxu0 0.0
        %1527 = vmatpush1.msra.mxu0 0.0
        %1528 = vmatprep.subr.mxu0 0.0
        %1529 = vmatpush1.msra.mxu0 0.0
        %1530 = vmatprep.subr.mxu0 0.0
        %1531 = vmatpush1.msra.mxu0 0.0
        %1532 = vmatprep.subr.mxu0 0.0
        %1533 = vmatpush1.msra.mxu0 0.0
        %1534 = vmatprep.subr.mxu0 0.0
        %1535 = vmatpush1.msra.mxu0 0.0
        %1536 = vmatprep.subr.mxu0 0.0
        %1537 = vmatpush1.msra.mxu0 0.0
        %1538 = vmatprep.subr.mxu0 0.0
        %1539 = vmatpush1.msra.mxu0 0.0
        %1540 = vmatprep.subr.mxu0 0.0
        %1541 = vmatpush1.msra.mxu0 0.0
        %1542 = vmatprep.subr.mxu0 0.0
        %1543 = vmatpush1.msra.mxu0 0.0
        %1544 = vmatprep.mubr.f32.mxu0 0.0
        %v1545 = vand.u32 %v1378, 4294901760
        %1546 = vmatmul.mubr.f32.gmra.mrb[0].mxu0 %v1545
        %v1547 = vpop.f32.mrb[0].mxu0
        %v1548 = vadd.f32 %v1456, %v1547
        %v1549 = vpop.f32.mrb[0].mxu0
        %v1550 = vadd.f32 %v1458, %v1549
        %1551 = vdwg.mxu0
        %v1552 = vand.u32 %v1370, 4294901760
        %v1553 = vsub.f32 %v1370, %v1552
        %1554 = vmatprep.subr.mxu0 %v1553
        %v1555 = vand.u32 %v1369, 4294901760
        %v1556 = vsub.f32 %v1369, %v1555
        %1557 = vmatpush1.msra.mxu0 %v1556
        %v1558 = vand.u32 %v1372, 4294901760
        %v1559 = vsub.f32 %v1372, %v1558
        %1560 = vmatprep.subr.mxu0 %v1559
        %v1561 = vand.u32 %v1371, 4294901760
        %v1562 = vsub.f32 %v1371, %v1561
        %1563 = vmatpush1.msra.mxu0 %v1562
        %1564 = vmatprep.subr.mxu0 0.0
        %1565 = vmatpush1.msra.mxu0 0.0
        %1566 = vmatprep.subr.mxu0 0.0
        %1567 = vmatpush1.msra.mxu0 0.0
        %1568 = vmatprep.subr.mxu0 0.0
        %1569 = vmatpush1.msra.mxu0 0.0
        %1570 = vmatprep.subr.mxu0 0.0
        %1571 = vmatpush1.msra.mxu0 0.0
        %1572 = vmatprep.subr.mxu0 0.0
        %1573 = vmatpush1.msra.mxu0 0.0
        %1574 = vmatprep.subr.mxu0 0.0
        %1575 = vmatpush1.msra.mxu0 0.0
        %1576 = vmatprep.subr.mxu0 0.0
        %1577 = vmatpush1.msra.mxu0 0.0
        %1578 = vmatprep.subr.mxu0 0.0
        %1579 = vmatpush1.msra.mxu0 0.0
        %1580 = vmatprep.subr.mxu0 0.0
        %1581 = vmatpush1.msra.mxu0 0.0
        %1582 = vmatprep.subr.mxu0 0.0
        %1583 = vmatpush1.msra.mxu0 0.0
        %1584 = vmatprep.subr.mxu0 0.0
        %1585 = vmatpush1.msra.mxu0 0.0
        %1586 = vmatprep.subr.mxu0 0.0
        %1587 = vmatpush1.msra.mxu0 0.0
        %1588 = vmatprep.subr.mxu0 0.0
        %1589 = vmatpush1.msra.mxu0 0.0
        %1590 = vmatprep.subr.mxu0 0.0
        %1591 = vmatpush1.msra.mxu0 0.0
        %1592 = vmatprep.subr.mxu0 0.0
        %1593 = vmatpush1.msra.mxu0 0.0
        %1594 = vmatprep.subr.mxu0 0.0
        %1595 = vmatpush1.msra.mxu0 0.0
        %1596 = vmatprep.subr.mxu0 0.0
        %1597 = vmatpush1.msra.mxu0 0.0
        %1598 = vmatprep.subr.mxu0 0.0
        %1599 = vmatpush1.msra.mxu0 0.0
        %1600 = vmatprep.subr.mxu0 0.0
        %1601 = vmatpush1.msra.mxu0 0.0
        %1602 = vmatprep.subr.mxu0 0.0
        %1603 = vmatpush1.msra.mxu0 0.0
        %1604 = vmatprep.subr.mxu0 0.0
        %1605 = vmatpush1.msra.mxu0 0.0
        %1606 = vmatprep.subr.mxu0 0.0
        %1607 = vmatpush1.msra.mxu0 0.0
        %1608 = vmatprep.subr.mxu0 0.0
        %1609 = vmatpush1.msra.mxu0 0.0
        %1610 = vmatprep.subr.mxu0 0.0
        %1611 = vmatpush1.msra.mxu0 0.0
        %1612 = vmatprep.subr.mxu0 0.0
        %1613 = vmatpush1.msra.mxu0 0.0
        %1614 = vmatprep.subr.mxu0 0.0
        %1615 = vmatpush1.msra.mxu0 0.0
        %1616 = vmatprep.subr.mxu0 0.0
        %1617 = vmatpush1.msra.mxu0 0.0
        %1618 = vmatprep.subr.mxu0 0.0
        %1619 = vmatpush1.msra.mxu0 0.0
        %1620 = vmatprep.subr.mxu0 0.0
        %1621 = vmatpush1.msra.mxu0 0.0
        %1622 = vmatprep.subr.mxu0 0.0
        %1623 = vmatpush1.msra.mxu0 0.0
        %1624 = vmatprep.mubr.f32.mxu0 0.0
        %v1625 = vand.u32 %v1378, 4294901760
        %v1626 = vsub.f32 %v1378, %v1625
        %1627 = vmatmul.mubr.f32.gmra.mrb[0].mxu0 %v1626
        %v1628 = vpop.f32.mrb[0].mxu0
        %v1629 = vadd.f32 %v1548, %v1628
        %v1630 = vpop.f32.mrb[0].mxu0
        %v1631 = vadd.f32 %v1550, %v1630
        %1632 = vdwg.mxu0
        %v1633 = vand.u32 %v1370, 4294901760
        %1634 = vmatprep.subr.mxu0 %v1633
        %v1635 = vand.u32 %v1369, 4294901760
        %1636 = vmatpush1.msra.mxu0 %v1635
        %v1637 = vand.u32 %v1372, 4294901760
        %1638 = vmatprep.subr.mxu0 %v1637
        %v1639 = vand.u32 %v1371, 4294901760
        %1640 = vmatpush1.msra.mxu0 %v1639
        %1641 = vmatprep.subr.mxu0 0.0
        %1642 = vmatpush1.msra.mxu0 0.0
        %1643 = vmatprep.subr.mxu0 0.0
        %1644 = vmatpush1.msra.mxu0 0.0
        %1645 = vmatprep.subr.mxu0 0.0
        %1646 = vmatpush1.msra.mxu0 0.0
        %1647 = vmatprep.subr.mxu0 0.0
        %1648 = vmatpush1.msra.mxu0 0.0
        %1649 = vmatprep.subr.mxu0 0.0
        %1650 = vmatpush1.msra.mxu0 0.0
        %1651 = vmatprep.subr.mxu0 0.0
        %1652 = vmatpush1.msra.mxu0 0.0
        %1653 = vmatprep.subr.mxu0 0.0
        %1654 = vmatpush1.msra.mxu0 0.0
        %1655 = vmatprep.subr.mxu0 0.0
        %1656 = vmatpush1.msra.mxu0 0.0
        %1657 = vmatprep.subr.mxu0 0.0
        %1658 = vmatpush1.msra.mxu0 0.0
        %1659 = vmatprep.subr.mxu0 0.0
        %1660 = vmatpush1.msra.mxu0 0.0
        %1661 = vmatprep.subr.mxu0 0.0
        %1662 = vmatpush1.msra.mxu0 0.0
        %1663 = vmatprep.subr.mxu0 0.0
        %1664 = vmatpush1.msra.mxu0 0.0
        %1665 = vmatprep.subr.mxu0 0.0
        %1666 = vmatpush1.msra.mxu0 0.0
        %1667 = vmatprep.subr.mxu0 0.0
        %1668 = vmatpush1.msra.mxu0 0.0
        %1669 = vmatprep.subr.mxu0 0.0
        %1670 = vmatpush1.msra.mxu0 0.0
        %1671 = vmatprep.subr.mxu0 0.0
        %1672 = vmatpush1.msra.mxu0 0.0
        %1673 = vmatprep.subr.mxu0 0.0
        %1674 = vmatpush1.msra.mxu0 0.0
        %1675 = vmatprep.subr.mxu0 0.0
        %1676 = vmatpush1.msra.mxu0 0.0
        %1677 = vmatprep.subr.mxu0 0.0
        %1678 = vmatpush1.msra.mxu0 0.0
        %1679 = vmatprep.subr.mxu0 0.0
        %1680 = vmatpush1.msra.mxu0 0.0
        %1681 = vmatprep.subr.mxu0 0.0
        %1682 = vmatpush1.msra.mxu0 0.0
        %1683 = vmatprep.subr.mxu0 0.0
        %1684 = vmatpush1.msra.mxu0 0.0
        %1685 = vmatprep.subr.mxu0 0.0
        %1686 = vmatpush1.msra.mxu0 0.0
        %1687 = vmatprep.subr.mxu0 0.0
        %1688 = vmatpush1.msra.mxu0 0.0
        %1689 = vmatprep.subr.mxu0 0.0
        %1690 = vmatpush1.msra.mxu0 0.0
        %1691 = vmatprep.subr.mxu0 0.0
        %1692 = vmatpush1.msra.mxu0 0.0
        %1693 = vmatprep.subr.mxu0 0.0
        %1694 = vmatpush1.msra.mxu0 0.0
        %1695 = vmatprep.subr.mxu0 0.0
        %1696 = vmatpush1.msra.mxu0 0.0
        %1697 = vmatprep.subr.mxu0 0.0
        %1698 = vmatpush1.msra.mxu0 0.0
        %1699 = vmatprep.subr.mxu0 0.0
        %1700 = vmatpush1.msra.mxu0 0.0
        %1701 = vmatprep.mubr.f32.mxu0 0.0
        %v1702 = vand.u32 %v1378, 4294901760
        %v1703 = vsub.f32 %v1378, %v1702
        %v1704 = vand.u32 %v1703, 4294901760
        %1705 = vmatmul.mubr.f32.gmra.mrb[0].mxu0 %v1704
        %v1706 = vpop.f32.mrb[0].mxu0
        %v1707 = vadd.f32 %v1629, %v1706
        %v1708 = vpop.f32.mrb[0].mxu0
        %v1709 = vadd.f32 %v1631, %v1708
        %1710 = vdwg.mxu0
        %v1711 = vand.u32 %v1370, 4294901760
        %v1712 = vsub.f32 %v1370, %v1711
        %v1713 = vand.u32 %v1712, 4294901760
        %1714 = vmatprep.subr.mxu0 %v1713
        %v1715 = vand.u32 %v1369, 4294901760
        %v1716 = vsub.f32 %v1369, %v1715
        %v1717 = vand.u32 %v1716, 4294901760
        %1718 = vmatpush1.msra.mxu0 %v1717
        %v1719 = vand.u32 %v1372, 4294901760
        %v1720 = vsub.f32 %v1372, %v1719
        %v1721 = vand.u32 %v1720, 4294901760
        %1722 = vmatprep.subr.mxu0 %v1721
        %v1723 = vand.u32 %v1371, 4294901760
        %v1724 = vsub.f32 %v1371, %v1723
        %v1725 = vand.u32 %v1724, 4294901760
        %1726 = vmatpush1.msra.mxu0 %v1725
        %1727 = vmatprep.subr.mxu0 0.0
        %1728 = vmatpush1.msra.mxu0 0.0
        %1729 = vmatprep.subr.mxu0 0.0
        %1730 = vmatpush1.msra.mxu0 0.0
        %1731 = vmatprep.subr.mxu0 0.0
        %1732 = vmatpush1.msra.mxu0 0.0
        %1733 = vmatprep.subr.mxu0 0.0
        %1734 = vmatpush1.msra.mxu0 0.0
        %1735 = vmatprep.subr.mxu0 0.0
        %1736 = vmatpush1.msra.mxu0 0.0
        %1737 = vmatprep.subr.mxu0 0.0
        %1738 = vmatpush1.msra.mxu0 0.0
        %1739 = vmatprep.subr.mxu0 0.0
        %1740 = vmatpush1.msra.mxu0 0.0
        %1741 = vmatprep.subr.mxu0 0.0
        %1742 = vmatpush1.msra.mxu0 0.0
        %1743 = vmatprep.subr.mxu0 0.0
        %1744 = vmatpush1.msra.mxu0 0.0
        %1745 = vmatprep.subr.mxu0 0.0
        %1746 = vmatpush1.msra.mxu0 0.0
        %1747 = vmatprep.subr.mxu0 0.0
        %1748 = vmatpush1.msra.mxu0 0.0
        %1749 = vmatprep.subr.mxu0 0.0
        %1750 = vmatpush1.msra.mxu0 0.0
        %1751 = vmatprep.subr.mxu0 0.0
        %1752 = vmatpush1.msra.mxu0 0.0
        %1753 = vmatprep.subr.mxu0 0.0
        %1754 = vmatpush1.msra.mxu0 0.0
        %1755 = vmatprep.subr.mxu0 0.0
        %1756 = vmatpush1.msra.mxu0 0.0
        %1757 = vmatprep.subr.mxu0 0.0
        %1758 = vmatpush1.msra.mxu0 0.0
        %1759 = vmatprep.subr.mxu0 0.0
        %1760 = vmatpush1.msra.mxu0 0.0
        %1761 = vmatprep.subr.mxu0 0.0
        %1762 = vmatpush1.msra.mxu0 0.0
        %1763 = vmatprep.subr.mxu0 0.0
        %1764 = vmatpush1.msra.mxu0 0.0
        %1765 = vmatprep.subr.mxu0 0.0
        %1766 = vmatpush1.msra.mxu0 0.0
        %1767 = vmatprep.subr.mxu0 0.0
        %1768 = vmatpush1.msra.mxu0 0.0
        %1769 = vmatprep.subr.mxu0 0.0
        %1770 = vmatpush1.msra.mxu0 0.0
        %1771 = vmatprep.subr.mxu0 0.0
        %1772 = vmatpush1.msra.mxu0 0.0
        %1773 = vmatprep.subr.mxu0 0.0
        %1774 = vmatpush1.msra.mxu0 0.0
        %1775 = vmatprep.subr.mxu0 0.0
        %1776 = vmatpush1.msra.mxu0 0.0
        %1777 = vmatprep.subr.mxu0 0.0
        %1778 = vmatpush1.msra.mxu0 0.0
        %1779 = vmatprep.subr.mxu0 0.0
        %1780 = vmatpush1.msra.mxu0 0.0
        %1781 = vmatprep.subr.mxu0 0.0
        %1782 = vmatpush1.msra.mxu0 0.0
        %1783 = vmatprep.subr.mxu0 0.0
        %1784 = vmatpush1.msra.mxu0 0.0
        %1785 = vmatprep.subr.mxu0 0.0
        %1786 = vmatpush1.msra.mxu0 0.0
        %1787 = vmatprep.mubr.f32.mxu0 0.0
        %v1788 = vand.u32 %v1378, 4294901760
        %1789 = vmatmul.mubr.f32.gmra.mrb[0].mxu0 %v1788
        %v1790 = vpop.f32.mrb[0].mxu0
        %v1791 = vadd.f32 %v1707, %v1790
        %v1792 = vpop.f32.mrb[0].mxu0
        %v1793 = vadd.f32 %v1709, %v1792
        %1794 = vdwg.mxu0
        %v1795 = vand.u32 %v1370, 4294901760
        %1796 = vmatprep.subr.mxu0 %v1795
        %v1797 = vand.u32 %v1369, 4294901760
        %1798 = vmatpush1.msra.mxu0 %v1797
        %v1799 = vand.u32 %v1372, 4294901760
        %1800 = vmatprep.subr.mxu0 %v1799
        %v1801 = vand.u32 %v1371, 4294901760
        %1802 = vmatpush1.msra.mxu0 %v1801
        %1803 = vmatprep.subr.mxu0 0.0
        %1804 = vmatpush1.msra.mxu0 0.0
        %1805 = vmatprep.subr.mxu0 0.0
        %1806 = vmatpush1.msra.mxu0 0.0
        %1807 = vmatprep.subr.mxu0 0.0
        %1808 = vmatpush1.msra.mxu0 0.0
        %1809 = vmatprep.subr.mxu0 0.0
        %1810 = vmatpush1.msra.mxu0 0.0
        %1811 = vmatprep.subr.mxu0 0.0
        %1812 = vmatpush1.msra.mxu0 0.0
        %1813 = vmatprep.subr.mxu0 0.0
        %1814 = vmatpush1.msra.mxu0 0.0
        %1815 = vmatprep.subr.mxu0 0.0
        %1816 = vmatpush1.msra.mxu0 0.0
        %1817 = vmatprep.subr.mxu0 0.0
        %1818 = vmatpush1.msra.mxu0 0.0
        %1819 = vmatprep.subr.mxu0 0.0
        %1820 = vmatpush1.msra.mxu0 0.0
        %1821 = vmatprep.subr.mxu0 0.0
        %1822 = vmatpush1.msra.mxu0 0.0
        %1823 = vmatprep.subr.mxu0 0.0
        %1824 = vmatpush1.msra.mxu0 0.0
        %1825 = vmatprep.subr.mxu0 0.0
        %1826 = vmatpush1.msra.mxu0 0.0
        %1827 = vmatprep.subr.mxu0 0.0
        %1828 = vmatpush1.msra.mxu0 0.0
        %1829 = vmatprep.subr.mxu0 0.0
        %1830 = vmatpush1.msra.mxu0 0.0
        %1831 = vmatprep.subr.mxu0 0.0
        %1832 = vmatpush1.msra.mxu0 0.0
        %1833 = vmatprep.subr.mxu0 0.0
        %1834 = vmatpush1.msra.mxu0 0.0
        %1835 = vmatprep.subr.mxu0 0.0
        %1836 = vmatpush1.msra.mxu0 0.0
        %1837 = vmatprep.subr.mxu0 0.0
        %1838 = vmatpush1.msra.mxu0 0.0
        %1839 = vmatprep.subr.mxu0 0.0
        %1840 = vmatpush1.msra.mxu0 0.0
        %1841 = vmatprep.subr.mxu0 0.0
        %1842 = vmatpush1.msra.mxu0 0.0
        %1843 = vmatprep.subr.mxu0 0.0
        %1844 = vmatpush1.msra.mxu0 0.0
        %1845 = vmatprep.subr.mxu0 0.0
        %1846 = vmatpush1.msra.mxu0 0.0
        %1847 = vmatprep.subr.mxu0 0.0
        %1848 = vmatpush1.msra.mxu0 0.0
        %1849 = vmatprep.subr.mxu0 0.0
        %1850 = vmatpush1.msra.mxu0 0.0
        %1851 = vmatprep.subr.mxu0 0.0
        %1852 = vmatpush1.msra.mxu0 0.0
        %1853 = vmatprep.subr.mxu0 0.0
        %1854 = vmatpush1.msra.mxu0 0.0
        %1855 = vmatprep.subr.mxu0 0.0
        %1856 = vmatpush1.msra.mxu0 0.0
        %1857 = vmatprep.subr.mxu0 0.0
        %1858 = vmatpush1.msra.mxu0 0.0
        %1859 = vmatprep.subr.mxu0 0.0
        %1860 = vmatpush1.msra.mxu0 0.0
        %1861 = vmatprep.subr.mxu0 0.0
        %1862 = vmatpush1.msra.mxu0 0.0
        %1863 = vmatprep.mubr.f32.mxu0 0.0
        %v1864 = vand.u32 %v1378, 4294901760
        %1865 = vmatmul.mubr.f32.gmra.mrb[0].mxu0 %v1864
        %v1866 = vpop.f32.mrb[0].mxu0
        %v1867 = vadd.f32 %v1791, %v1866
        %v1868 = vpop.f32.mrb[0].mxu0
        %v1869 = vadd.f32 %v1793, %v1868
        %1870 = vdwg.mxu0
        %1872 = vset.pattern.permute.xlu0 16
        %1873 = vperm.xlu0 %1872, %v254
        %v1874 = vpop.permute.xlu0 %1873
        %1877 = vset.pattern.permute.xlu0 16
        %1878 = vperm.xlu0 %1877, %v255
        %v1879 = vpop.permute.xlu0 %1878
        %v1881 = vsel %vm816, %v254, 0
        %v1883 = vsel %vm816, %v255, 0
        %v1885 = vand.u32 %v1370, 4294901760
        %1886 = vmatprep.subr.mxu0 %v1885
        %v1887 = vand.u32 %v1369, 4294901760
        %1888 = vmatpush1.msra.mxu0 %v1887
        %v1889 = vand.u32 %v1372, 4294901760
        %1890 = vmatprep.subr.mxu0 %v1889
        %v1891 = vand.u32 %v1371, 4294901760
        %1892 = vmatpush1.msra.mxu0 %v1891
        %1893 = vmatprep.subr.mxu0 0.0
        %1894 = vmatpush1.msra.mxu0 0.0
        %1895 = vmatprep.subr.mxu0 0.0
        %1896 = vmatpush1.msra.mxu0 0.0
        %1897 = vmatprep.subr.mxu0 0.0
        %1898 = vmatpush1.msra.mxu0 0.0
        %1899 = vmatprep.subr.mxu0 0.0
        %1900 = vmatpush1.msra.mxu0 0.0
        %1901 = vmatprep.subr.mxu0 0.0
        %1902 = vmatpush1.msra.mxu0 0.0
        %1903 = vmatprep.subr.mxu0 0.0
        %1904 = vmatpush1.msra.mxu0 0.0
        %1905 = vmatprep.subr.mxu0 0.0
        %1906 = vmatpush1.msra.mxu0 0.0
        %1907 = vmatprep.subr.mxu0 0.0
        %1908 = vmatpush1.msra.mxu0 0.0
        %1909 = vmatprep.subr.mxu0 0.0
        %1910 = vmatpush1.msra.mxu0 0.0
        %1911 = vmatprep.subr.mxu0 0.0
        %1912 = vmatpush1.msra.mxu0 0.0
        %1913 = vmatprep.subr.mxu0 0.0
        %1914 = vmatpush1.msra.mxu0 0.0
        %1915 = vmatprep.subr.mxu0 0.0
        %1916 = vmatpush1.msra.mxu0 0.0
        %1917 = vmatprep.subr.mxu0 0.0
        %1918 = vmatpush1.msra.mxu0 0.0
        %1919 = vmatprep.subr.mxu0 0.0
        %1920 = vmatpush1.msra.mxu0 0.0
        %1921 = vmatprep.subr.mxu0 0.0
        %1922 = vmatpush1.msra.mxu0 0.0
        %1923 = vmatprep.subr.mxu0 0.0
        %1924 = vmatpush1.msra.mxu0 0.0
        %1925 = vmatprep.subr.mxu0 0.0
        %1926 = vmatpush1.msra.mxu0 0.0
        %1927 = vmatprep.subr.mxu0 0.0
        %1928 = vmatpush1.msra.mxu0 0.0
        %1929 = vmatprep.subr.mxu0 0.0
        %1930 = vmatpush1.msra.mxu0 0.0
        %1931 = vmatprep.subr.mxu0 0.0
        %1932 = vmatpush1.msra.mxu0 0.0
        %1933 = vmatprep.subr.mxu0 0.0
        %1934 = vmatpush1.msra.mxu0 0.0
        %1935 = vmatprep.subr.mxu0 0.0
        %1936 = vmatpush1.msra.mxu0 0.0
        %1937 = vmatprep.subr.mxu0 0.0
        %1938 = vmatpush1.msra.mxu0 0.0
        %1939 = vmatprep.subr.mxu0 0.0
        %1940 = vmatpush1.msra.mxu0 0.0
        %1941 = vmatprep.subr.mxu0 0.0
        %1942 = vmatpush1.msra.mxu0 0.0
        %1943 = vmatprep.subr.mxu0 0.0
        %1944 = vmatpush1.msra.mxu0 0.0
        %1945 = vmatprep.subr.mxu0 0.0
        %1946 = vmatpush1.msra.mxu0 0.0
        %1947 = vmatprep.subr.mxu0 0.0
        %1948 = vmatpush1.msra.mxu0 0.0
        %1949 = vmatprep.subr.mxu0 0.0
        %1950 = vmatpush1.msra.mxu0 0.0
        %1951 = vmatprep.subr.mxu0 0.0
        %1952 = vmatpush1.msra.mxu0 0.0
        %1953 = vmatprep.mubr.f32.mxu0 0.0
        %v1954 = vand.u32 %v1881, 4294901760
        %v1955 = vsub.f32 %v1881, %v1954
        %v1956 = vand.u32 %v1955, 4294901760
        %v1957 = vsub.f32 %v1955, %v1956
        %v1958 = vand.u32 %v1957, 4294901760
        %1959 = vmatmul.mubr.f32.gmra.mrb[0].mxu0 %v1958
        %v1960 = vpop.f32.mrb[0].mxu0
        %v1961 = vadd.f32 %v1874, %v1960
        %v1962 = vpop.f32.mrb[0].mxu0
        %v1963 = vadd.f32 %v1874, %v1962
        %1964 = vmatprep.mubr.f32.mxu0 0.0
        %v1965 = vand.u32 %v1883, 4294901760
        %v1966 = vsub.f32 %v1883, %v1965
        %v1967 = vand.u32 %v1966, 4294901760
        %v1968 = vsub.f32 %v1966, %v1967
        %v1969 = vand.u32 %v1968, 4294901760
        %1970 = vmatmul.mubr.f32.gmra.mrb[0].mxu0 %v1969
        %v1971 = vpop.f32.mrb[0].mxu0
        %v1972 = vadd.f32 %v1879, %v1971
        %v1973 = vpop.f32.mrb[0].mxu0
        %v1974 = vadd.f32 %v1879, %v1973
        %1975 = vdwg.mxu0
        %v1976 = vand.u32 %v1370, 4294901760
        %v1977 = vsub.f32 %v1370, %v1976
        %v1978 = vand.u32 %v1977, 4294901760
        %v1979 = vsub.f32 %v1977, %v1978
        %v1980 = vand.u32 %v1979, 4294901760
        %1981 = vmatprep.subr.mxu0 %v1980
        %v1982 = vand.u32 %v1369, 4294901760
        %v1983 = vsub.f32 %v1369, %v1982
        %v1984 = vand.u32 %v1983, 4294901760
        %v1985 = vsub.f32 %v1983, %v1984
        %v1986 = vand.u32 %v1985, 4294901760
        %1987 = vmatpush1.msra.mxu0 %v1986
        %v1988 = vand.u32 %v1372, 4294901760
        %v1989 = vsub.f32 %v1372, %v1988
        %v1990 = vand.u32 %v1989, 4294901760
        %v1991 = vsub.f32 %v1989, %v1990
        %v1992 = vand.u32 %v1991, 4294901760
        %1993 = vmatprep.subr.mxu0 %v1992
        %v1994 = vand.u32 %v1371, 4294901760
        %v1995 = vsub.f32 %v1371, %v1994
        %v1996 = vand.u32 %v1995, 4294901760
        %v1997 = vsub.f32 %v1995, %v1996
        %v1998 = vand.u32 %v1997, 4294901760
        %1999 = vmatpush1.msra.mxu0 %v1998
        %2000 = vmatprep.subr.mxu0 0.0
        %2001 = vmatpush1.msra.mxu0 0.0
        %2002 = vmatprep.subr.mxu0 0.0
        %2003 = vmatpush1.msra.mxu0 0.0
        %2004 = vmatprep.subr.mxu0 0.0
        %2005 = vmatpush1.msra.mxu0 0.0
        %2006 = vmatprep.subr.mxu0 0.0
        %2007 = vmatpush1.msra.mxu0 0.0
        %2008 = vmatprep.subr.mxu0 0.0
        %2009 = vmatpush1.msra.mxu0 0.0
        %2010 = vmatprep.subr.mxu0 0.0
        %2011 = vmatpush1.msra.mxu0 0.0
        %2012 = vmatprep.subr.mxu0 0.0
        %2013 = vmatpush1.msra.mxu0 0.0
        %2014 = vmatprep.subr.mxu0 0.0
        %2015 = vmatpush1.msra.mxu0 0.0
        %2016 = vmatprep.subr.mxu0 0.0
        %2017 = vmatpush1.msra.mxu0 0.0
        %2018 = vmatprep.subr.mxu0 0.0
        %2019 = vmatpush1.msra.mxu0 0.0
        %2020 = vmatprep.subr.mxu0 0.0
        %2021 = vmatpush1.msra.mxu0 0.0
        %2022 = vmatprep.subr.mxu0 0.0
        %2023 = vmatpush1.msra.mxu0 0.0
        %2024 = vmatprep.subr.mxu0 0.0
        %2025 = vmatpush1.msra.mxu0 0.0
        %2026 = vmatprep.subr.mxu0 0.0
        %2027 = vmatpush1.msra.mxu0 0.0
        %2028 = vmatprep.subr.mxu0 0.0
        %2029 = vmatpush1.msra.mxu0 0.0
        %2030 = vmatprep.subr.mxu0 0.0
        %2031 = vmatpush1.msra.mxu0 0.0
        %2032 = vmatprep.subr.mxu0 0.0
        %2033 = vmatpush1.msra.mxu0 0.0
        %2034 = vmatprep.subr.mxu0 0.0
        %2035 = vmatpush1.msra.mxu0 0.0
        %2036 = vmatprep.subr.mxu0 0.0
        %2037 = vmatpush1.msra.mxu0 0.0
        %2038 = vmatprep.subr.mxu0 0.0
        %2039 = vmatpush1.msra.mxu0 0.0
        %2040 = vmatprep.subr.mxu0 0.0
        %2041 = vmatpush1.msra.mxu0 0.0
        %2042 = vmatprep.subr.mxu0 0.0
        %2043 = vmatpush1.msra.mxu0 0.0
        %2044 = vmatprep.subr.mxu0 0.0
        %2045 = vmatpush1.msra.mxu0 0.0
        %2046 = vmatprep.subr.mxu0 0.0
        %2047 = vmatpush1.msra.mxu0 0.0
        %2048 = vmatprep.subr.mxu0 0.0
        %2049 = vmatpush1.msra.mxu0 0.0
        %2050 = vmatprep.subr.mxu0 0.0
        %2051 = vmatpush1.msra.mxu0 0.0
        %2052 = vmatprep.subr.mxu0 0.0
        %2053 = vmatpush1.msra.mxu0 0.0
        %2054 = vmatprep.subr.mxu0 0.0
        %2055 = vmatpush1.msra.mxu0 0.0
        %2056 = vmatprep.subr.mxu0 0.0
        %2057 = vmatpush1.msra.mxu0 0.0
        %2058 = vmatprep.subr.mxu0 0.0
        %2059 = vmatpush1.msra.mxu0 0.0
        %2060 = vmatprep.mubr.f32.mxu0 0.0
        %v2061 = vand.u32 %v1881, 4294901760
        %2062 = vmatmul.mubr.f32.gmra.mrb[0].mxu0 %v2061
        %v2063 = vpop.f32.mrb[0].mxu0
        %v2064 = vadd.f32 %v1961, %v2063
        %v2065 = vpop.f32.mrb[0].mxu0
        %v2066 = vadd.f32 %v1963, %v2065
        %2067 = vmatprep.mubr.f32.mxu0 0.0
        %v2068 = vand.u32 %v1883, 4294901760
        %2069 = vmatmul.mubr.f32.gmra.mrb[0].mxu0 %v2068
        %v2070 = vpop.f32.mrb[0].mxu0
        %v2071 = vadd.f32 %v1972, %v2070
        %v2072 = vpop.f32.mrb[0].mxu0
        %v2073 = vadd.f32 %v1974, %v2072
        %2074 = vdwg.mxu0
        %v2075 = vand.u32 %v1370, 4294901760
        %v2076 = vsub.f32 %v1370, %v2075
        %2077 = vmatprep.subr.mxu0 %v2076
        %v2078 = vand.u32 %v1369, 4294901760
        %v2079 = vsub.f32 %v1369, %v2078
        %2080 = vmatpush1.msra.mxu0 %v2079
        %v2081 = vand.u32 %v1372, 4294901760
        %v2082 = vsub.f32 %v1372, %v2081
        %2083 = vmatprep.subr.mxu0 %v2082
        %v2084 = vand.u32 %v1371, 4294901760
        %v2085 = vsub.f32 %v1371, %v2084
        %2086 = vmatpush1.msra.mxu0 %v2085
        %2087 = vmatprep.subr.mxu0 0.0
        %2088 = vmatpush1.msra.mxu0 0.0
        %2089 = vmatprep.subr.mxu0 0.0
        %2090 = vmatpush1.msra.mxu0 0.0
        %2091 = vmatprep.subr.mxu0 0.0
        %2092 = vmatpush1.msra.mxu0 0.0
        %2093 = vmatprep.subr.mxu0 0.0
        %2094 = vmatpush1.msra.mxu0 0.0
        %2095 = vmatprep.subr.mxu0 0.0
        %2096 = vmatpush1.msra.mxu0 0.0
        %2097 = vmatprep.subr.mxu0 0.0
        %2098 = vmatpush1.msra.mxu0 0.0
        %2099 = vmatprep.subr.mxu0 0.0
        %2100 = vmatpush1.msra.mxu0 0.0
        %2101 = vmatprep.subr.mxu0 0.0
        %2102 = vmatpush1.msra.mxu0 0.0
        %2103 = vmatprep.subr.mxu0 0.0
        %2104 = vmatpush1.msra.mxu0 0.0
        %2105 = vmatprep.subr.mxu0 0.0
        %2106 = vmatpush1.msra.mxu0 0.0
        %2107 = vmatprep.subr.mxu0 0.0
        %2108 = vmatpush1.msra.mxu0 0.0
        %2109 = vmatprep.subr.mxu0 0.0
        %2110 = vmatpush1.msra.mxu0 0.0
        %2111 = vmatprep.subr.mxu0 0.0
        %2112 = vmatpush1.msra.mxu0 0.0
        %2113 = vmatprep.subr.mxu0 0.0
        %2114 = vmatpush1.msra.mxu0 0.0
        %2115 = vmatprep.subr.mxu0 0.0
        %2116 = vmatpush1.msra.mxu0 0.0
        %2117 = vmatprep.subr.mxu0 0.0
        %2118 = vmatpush1.msra.mxu0 0.0
        %2119 = vmatprep.subr.mxu0 0.0
        %2120 = vmatpush1.msra.mxu0 0.0
        %2121 = vmatprep.subr.mxu0 0.0
        %2122 = vmatpush1.msra.mxu0 0.0
        %2123 = vmatprep.subr.mxu0 0.0
        %2124 = vmatpush1.msra.mxu0 0.0
        %2125 = vmatprep.subr.mxu0 0.0
        %2126 = vmatpush1.msra.mxu0 0.0
        %2127 = vmatprep.subr.mxu0 0.0
        %2128 = vmatpush1.msra.mxu0 0.0
        %2129 = vmatprep.subr.mxu0 0.0
        %2130 = vmatpush1.msra.mxu0 0.0
        %2131 = vmatprep.subr.mxu0 0.0
        %2132 = vmatpush1.msra.mxu0 0.0
        %2133 = vmatprep.subr.mxu0 0.0
        %2134 = vmatpush1.msra.mxu0 0.0
        %2135 = vmatprep.subr.mxu0 0.0
        %2136 = vmatpush1.msra.mxu0 0.0
        %2137 = vmatprep.subr.mxu0 0.0
        %2138 = vmatpush1.msra.mxu0 0.0
        %2139 = vmatprep.subr.mxu0 0.0
        %2140 = vmatpush1.msra.mxu0 0.0
        %2141 = vmatprep.subr.mxu0 0.0
        %2142 = vmatpush1.msra.mxu0 0.0
        %2143 = vmatprep.subr.mxu0 0.0
        %2144 = vmatpush1.msra.mxu0 0.0
        %2145 = vmatprep.subr.mxu0 0.0
        %2146 = vmatpush1.msra.mxu0 0.0
        %2147 = vmatprep.mubr.f32.mxu0 0.0
        %v2148 = vand.u32 %v1881, 4294901760
        %v2149 = vsub.f32 %v1881, %v2148
        %2150 = vmatmul.mubr.f32.gmra.mrb[0].mxu0 %v2149
        %v2151 = vpop.f32.mrb[0].mxu0
        %v2152 = vadd.f32 %v2064, %v2151
        %v2153 = vpop.f32.mrb[0].mxu0
        %v2154 = vadd.f32 %v2066, %v2153
        %2155 = vmatprep.mubr.f32.mxu0 0.0
        %v2156 = vand.u32 %v1883, 4294901760
        %v2157 = vsub.f32 %v1883, %v2156
        %2158 = vmatmul.mubr.f32.gmra.mrb[0].mxu0 %v2157
        %v2159 = vpop.f32.mrb[0].mxu0
        %v2160 = vadd.f32 %v2071, %v2159
        %v2161 = vpop.f32.mrb[0].mxu0
        %v2162 = vadd.f32 %v2073, %v2161
        %2163 = vdwg.mxu0
        %v2164 = vand.u32 %v1370, 4294901760
        %2165 = vmatprep.subr.mxu0 %v2164
        %v2166 = vand.u32 %v1369, 4294901760
        %2167 = vmatpush1.msra.mxu0 %v2166
        %v2168 = vand.u32 %v1372, 4294901760
        %2169 = vmatprep.subr.mxu0 %v2168
        %v2170 = vand.u32 %v1371, 4294901760
        %2171 = vmatpush1.msra.mxu0 %v2170
        %2172 = vmatprep.subr.mxu0 0.0
        %2173 = vmatpush1.msra.mxu0 0.0
        %2174 = vmatprep.subr.mxu0 0.0
        %2175 = vmatpush1.msra.mxu0 0.0
        %2176 = vmatprep.subr.mxu0 0.0
        %2177 = vmatpush1.msra.mxu0 0.0
        %2178 = vmatprep.subr.mxu0 0.0
        %2179 = vmatpush1.msra.mxu0 0.0
        %2180 = vmatprep.subr.mxu0 0.0
        %2181 = vmatpush1.msra.mxu0 0.0
        %2182 = vmatprep.subr.mxu0 0.0
        %2183 = vmatpush1.msra.mxu0 0.0
        %2184 = vmatprep.subr.mxu0 0.0
        %2185 = vmatpush1.msra.mxu0 0.0
        %2186 = vmatprep.subr.mxu0 0.0
        %2187 = vmatpush1.msra.mxu0 0.0
        %2188 = vmatprep.subr.mxu0 0.0
        %2189 = vmatpush1.msra.mxu0 0.0
        %2190 = vmatprep.subr.mxu0 0.0
        %2191 = vmatpush1.msra.mxu0 0.0
        %2192 = vmatprep.subr.mxu0 0.0
        %2193 = vmatpush1.msra.mxu0 0.0
        %2194 = vmatprep.subr.mxu0 0.0
        %2195 = vmatpush1.msra.mxu0 0.0
        %2196 = vmatprep.subr.mxu0 0.0
        %2197 = vmatpush1.msra.mxu0 0.0
        %2198 = vmatprep.subr.mxu0 0.0
        %2199 = vmatpush1.msra.mxu0 0.0
        %2200 = vmatprep.subr.mxu0 0.0
        %2201 = vmatpush1.msra.mxu0 0.0
        %2202 = vmatprep.subr.mxu0 0.0
        %2203 = vmatpush1.msra.mxu0 0.0
        %2204 = vmatprep.subr.mxu0 0.0
        %2205 = vmatpush1.msra.mxu0 0.0
        %2206 = vmatprep.subr.mxu0 0.0
        %2207 = vmatpush1.msra.mxu0 0.0
        %2208 = vmatprep.subr.mxu0 0.0
        %2209 = vmatpush1.msra.mxu0 0.0
        %2210 = vmatprep.subr.mxu0 0.0
        %2211 = vmatpush1.msra.mxu0 0.0
        %2212 = vmatprep.subr.mxu0 0.0
        %2213 = vmatpush1.msra.mxu0 0.0
        %2214 = vmatprep.subr.mxu0 0.0
        %2215 = vmatpush1.msra.mxu0 0.0
        %2216 = vmatprep.subr.mxu0 0.0
        %2217 = vmatpush1.msra.mxu0 0.0
        %2218 = vmatprep.subr.mxu0 0.0
        %2219 = vmatpush1.msra.mxu0 0.0
        %2220 = vmatprep.subr.mxu0 0.0
        %2221 = vmatpush1.msra.mxu0 0.0
        %2222 = vmatprep.subr.mxu0 0.0
        %2223 = vmatpush1.msra.mxu0 0.0
        %2224 = vmatprep.subr.mxu0 0.0
        %2225 = vmatpush1.msra.mxu0 0.0
        %2226 = vmatprep.subr.mxu0 0.0
        %2227 = vmatpush1.msra.mxu0 0.0
        %2228 = vmatprep.subr.mxu0 0.0
        %2229 = vmatpush1.msra.mxu0 0.0
        %2230 = vmatprep.subr.mxu0 0.0
        %2231 = vmatpush1.msra.mxu0 0.0
        %2232 = vmatprep.mubr.f32.mxu0 0.0
        %v2233 = vand.u32 %v1881, 4294901760
        %v2234 = vsub.f32 %v1881, %v2233
        %v2235 = vand.u32 %v2234, 4294901760
        %2236 = vmatmul.mubr.f32.gmra.mrb[0].mxu0 %v2235
        %v2237 = vpop.f32.mrb[0].mxu0
        %v2238 = vadd.f32 %v2152, %v2237
        %v2239 = vpop.f32.mrb[0].mxu0
        %v2240 = vadd.f32 %v2154, %v2239
        %2241 = vmatprep.mubr.f32.mxu0 0.0
        %v2242 = vand.u32 %v1883, 4294901760
        %v2243 = vsub.f32 %v1883, %v2242
        %v2244 = vand.u32 %v2243, 4294901760
        %2245 = vmatmul.mubr.f32.gmra.mrb[0].mxu0 %v2244
        %v2246 = vpop.f32.mrb[0].mxu0
        %v2247 = vadd.f32 %v2160, %v2246
        %v2248 = vpop.f32.mrb[0].mxu0
        %v2249 = vadd.f32 %v2162, %v2248
        %2250 = vdwg.mxu0
        %v2251 = vand.u32 %v1370, 4294901760
        %v2252 = vsub.f32 %v1370, %v2251
        %v2253 = vand.u32 %v2252, 4294901760
        %2254 = vmatprep.subr.mxu0 %v2253
        %v2255 = vand.u32 %v1369, 4294901760
        %v2256 = vsub.f32 %v1369, %v2255
        %v2257 = vand.u32 %v2256, 4294901760
        %2258 = vmatpush1.msra.mxu0 %v2257
        %v2259 = vand.u32 %v1372, 4294901760
        %v2260 = vsub.f32 %v1372, %v2259
        %v2261 = vand.u32 %v2260, 4294901760
        %2262 = vmatprep.subr.mxu0 %v2261
        %v2263 = vand.u32 %v1371, 4294901760
        %v2264 = vsub.f32 %v1371, %v2263
        %v2265 = vand.u32 %v2264, 4294901760
        %2266 = vmatpush1.msra.mxu0 %v2265
        %2267 = vmatprep.subr.mxu0 0.0
        %2268 = vmatpush1.msra.mxu0 0.0
        %2269 = vmatprep.subr.mxu0 0.0
        %2270 = vmatpush1.msra.mxu0 0.0
        %2271 = vmatprep.subr.mxu0 0.0
        %2272 = vmatpush1.msra.mxu0 0.0
        %2273 = vmatprep.subr.mxu0 0.0
        %2274 = vmatpush1.msra.mxu0 0.0
        %2275 = vmatprep.subr.mxu0 0.0
        %2276 = vmatpush1.msra.mxu0 0.0
        %2277 = vmatprep.subr.mxu0 0.0
        %2278 = vmatpush1.msra.mxu0 0.0
        %2279 = vmatprep.subr.mxu0 0.0
        %2280 = vmatpush1.msra.mxu0 0.0
        %2281 = vmatprep.subr.mxu0 0.0
        %2282 = vmatpush1.msra.mxu0 0.0
        %2283 = vmatprep.subr.mxu0 0.0
        %2284 = vmatpush1.msra.mxu0 0.0
        %2285 = vmatprep.subr.mxu0 0.0
        %2286 = vmatpush1.msra.mxu0 0.0
        %2287 = vmatprep.subr.mxu0 0.0
        %2288 = vmatpush1.msra.mxu0 0.0
        %2289 = vmatprep.subr.mxu0 0.0
        %2290 = vmatpush1.msra.mxu0 0.0
        %2291 = vmatprep.subr.mxu0 0.0
        %2292 = vmatpush1.msra.mxu0 0.0
        %2293 = vmatprep.subr.mxu0 0.0
        %2294 = vmatpush1.msra.mxu0 0.0
        %2295 = vmatprep.subr.mxu0 0.0
        %2296 = vmatpush1.msra.mxu0 0.0
        %2297 = vmatprep.subr.mxu0 0.0
        %2298 = vmatpush1.msra.mxu0 0.0
        %2299 = vmatprep.subr.mxu0 0.0
        %2300 = vmatpush1.msra.mxu0 0.0
        %2301 = vmatprep.subr.mxu0 0.0
        %2302 = vmatpush1.msra.mxu0 0.0
        %2303 = vmatprep.subr.mxu0 0.0
        %2304 = vmatpush1.msra.mxu0 0.0
        %2305 = vmatprep.subr.mxu0 0.0
        %2306 = vmatpush1.msra.mxu0 0.0
        %2307 = vmatprep.subr.mxu0 0.0
        %2308 = vmatpush1.msra.mxu0 0.0
        %2309 = vmatprep.subr.mxu0 0.0
        %2310 = vmatpush1.msra.mxu0 0.0
        %2311 = vmatprep.subr.mxu0 0.0
        %2312 = vmatpush1.msra.mxu0 0.0
        %2313 = vmatprep.subr.mxu0 0.0
        %2314 = vmatpush1.msra.mxu0 0.0
        %2315 = vmatprep.subr.mxu0 0.0
        %2316 = vmatpush1.msra.mxu0 0.0
        %2317 = vmatprep.subr.mxu0 0.0
        %2318 = vmatpush1.msra.mxu0 0.0
        %2319 = vmatprep.subr.mxu0 0.0
        %2320 = vmatpush1.msra.mxu0 0.0
        %2321 = vmatprep.subr.mxu0 0.0
        %2322 = vmatpush1.msra.mxu0 0.0
        %2323 = vmatprep.subr.mxu0 0.0
        %2324 = vmatpush1.msra.mxu0 0.0
        %2325 = vmatprep.subr.mxu0 0.0
        %2326 = vmatpush1.msra.mxu0 0.0
        %2327 = vmatprep.mubr.f32.mxu0 0.0
        %v2328 = vand.u32 %v1881, 4294901760
        %2329 = vmatmul.mubr.f32.gmra.mrb[0].mxu0 %v2328
        %v2330 = vpop.f32.mrb[0].mxu0
        %v2331 = vadd.f32 %v2238, %v2330
        %v2332 = vpop.f32.mrb[0].mxu0
        %v2333 = vadd.f32 %v2240, %v2332
        %2334 = vmatprep.mubr.f32.mxu0 0.0
        %v2335 = vand.u32 %v1883, 4294901760
        %2336 = vmatmul.mubr.f32.gmra.mrb[0].mxu0 %v2335
        %v2337 = vpop.f32.mrb[0].mxu0
        %v2338 = vadd.f32 %v2247, %v2337
        %v2339 = vpop.f32.mrb[0].mxu0
        %v2340 = vadd.f32 %v2249, %v2339
        %2341 = vdwg.mxu0
        %v2342 = vand.u32 %v1370, 4294901760
        %2343 = vmatprep.subr.mxu0 %v2342
        %v2344 = vand.u32 %v1369, 4294901760
        %2345 = vmatpush1.msra.mxu0 %v2344
        %v2346 = vand.u32 %v1372, 4294901760
        %2347 = vmatprep.subr.mxu0 %v2346
        %v2348 = vand.u32 %v1371, 4294901760
        %2349 = vmatpush1.msra.mxu0 %v2348
        %2350 = vmatprep.subr.mxu0 0.0
        %2351 = vmatpush1.msra.mxu0 0.0
        %2352 = vmatprep.subr.mxu0 0.0
        %2353 = vmatpush1.msra.mxu0 0.0
        %2354 = vmatprep.subr.mxu0 0.0
        %2355 = vmatpush1.msra.mxu0 0.0
        %2356 = vmatprep.subr.mxu0 0.0
        %2357 = vmatpush1.msra.mxu0 0.0
        %2358 = vmatprep.subr.mxu0 0.0
        %2359 = vmatpush1.msra.mxu0 0.0
        %2360 = vmatprep.subr.mxu0 0.0
        %2361 = vmatpush1.msra.mxu0 0.0
        %2362 = vmatprep.subr.mxu0 0.0
        %2363 = vmatpush1.msra.mxu0 0.0
        %2364 = vmatprep.subr.mxu0 0.0
        %2365 = vmatpush1.msra.mxu0 0.0
        %2366 = vmatprep.subr.mxu0 0.0
        %2367 = vmatpush1.msra.mxu0 0.0
        %2368 = vmatprep.subr.mxu0 0.0
        %2369 = vmatpush1.msra.mxu0 0.0
        %2370 = vmatprep.subr.mxu0 0.0
        %2371 = vmatpush1.msra.mxu0 0.0
        %2372 = vmatprep.subr.mxu0 0.0
        %2373 = vmatpush1.msra.mxu0 0.0
        %2374 = vmatprep.subr.mxu0 0.0
        %2375 = vmatpush1.msra.mxu0 0.0
        %2376 = vmatprep.subr.mxu0 0.0
        %2377 = vmatpush1.msra.mxu0 0.0
        %2378 = vmatprep.subr.mxu0 0.0
        %2379 = vmatpush1.msra.mxu0 0.0
        %2380 = vmatprep.subr.mxu0 0.0
        %2381 = vmatpush1.msra.mxu0 0.0
        %2382 = vmatprep.subr.mxu0 0.0
        %2383 = vmatpush1.msra.mxu0 0.0
        %2384 = vmatprep.subr.mxu0 0.0
        %2385 = vmatpush1.msra.mxu0 0.0
        %2386 = vmatprep.subr.mxu0 0.0
        %2387 = vmatpush1.msra.mxu0 0.0
        %2388 = vmatprep.subr.mxu0 0.0
        %2389 = vmatpush1.msra.mxu0 0.0
        %2390 = vmatprep.subr.mxu0 0.0
        %2391 = vmatpush1.msra.mxu0 0.0
        %2392 = vmatprep.subr.mxu0 0.0
        %2393 = vmatpush1.msra.mxu0 0.0
        %2394 = vmatprep.subr.mxu0 0.0
        %2395 = vmatpush1.msra.mxu0 0.0
        %2396 = vmatprep.subr.mxu0 0.0
        %2397 = vmatpush1.msra.mxu0 0.0
        %2398 = vmatprep.subr.mxu0 0.0
        %2399 = vmatpush1.msra.mxu0 0.0
        %2400 = vmatprep.subr.mxu0 0.0
        %2401 = vmatpush1.msra.mxu0 0.0
        %2402 = vmatprep.subr.mxu0 0.0
        %2403 = vmatpush1.msra.mxu0 0.0
        %2404 = vmatprep.subr.mxu0 0.0
        %2405 = vmatpush1.msra.mxu0 0.0
        %2406 = vmatprep.subr.mxu0 0.0
        %2407 = vmatpush1.msra.mxu0 0.0
        %2408 = vmatprep.subr.mxu0 0.0
        %2409 = vmatpush1.msra.mxu0 0.0
        %2410 = vmatprep.mubr.f32.mxu0 0.0
        %v2411 = vand.u32 %v1881, 4294901760
        %2412 = vmatmul.mubr.f32.gmra.mrb[0].mxu0 %v2411
        %v2413 = vpop.f32.mrb[0].mxu0
        %v2414 = vadd.f32 %v2331, %v2413
        %v2415 = vpop.f32.mrb[0].mxu0
        %v2416 = vadd.f32 %v2333, %v2415
        %2417 = vmatprep.mubr.f32.mxu0 0.0
        %v2418 = vand.u32 %v1883, 4294901760
        %2419 = vmatmul.mubr.f32.gmra.mrb[0].mxu0 %v2418
        %v2420 = vpop.f32.mrb[0].mxu0
        %v2421 = vadd.f32 %v2338, %v2420
        %v2422 = vpop.f32.mrb[0].mxu0
        %v2423 = vadd.f32 %v2340, %v2422
        %2424 = vdwg.mxu0
        %vm2425 = vcmask 39936
        %v2427 = vsel %vm2425, %v249, 0
        %v2430 = vsel %vm2425, %v250, 0
        %vm2432 = vcmask 1044480
        %v2434 = vsel %vm2432, %v245, 0
        %v2437 = vsel %vm2432, %v246, 0
        %v2439 = vand.u32 %v2437, 4294901760
        %2440 = vmatprep.subr.mxu0 %v2439
        %v2441 = vand.u32 %v2434, 4294901760
        %2442 = vmatpush1.msra.mxu0 %v2441
        %2443 = vmatprep.subr.mxu0 0.0
        %2444 = vmatpush1.msra.mxu0 0.0
        %2445 = vmatprep.subr.mxu0 0.0
        %2446 = vmatpush1.msra.mxu0 0.0
        %2447 = vmatprep.subr.mxu0 0.0
        %2448 = vmatpush1.msra.mxu0 0.0
        %2449 = vmatprep.subr.mxu0 0.0
        %2450 = vmatpush1.msra.mxu0 0.0
        %2451 = vmatprep.subr.mxu0 0.0
        %2452 = vmatpush1.msra.mxu0 0.0
        %2453 = vmatprep.subr.mxu0 0.0
        %2454 = vmatpush1.msra.mxu0 0.0
        %2455 = vmatprep.subr.mxu0 0.0
        %2456 = vmatpush1.msra.mxu0 0.0
        %2457 = vmatprep.subr.mxu0 0.0
        %2458 = vmatpush1.msra.mxu0 0.0
        %2459 = vmatprep.subr.mxu0 0.0
        %2460 = vmatpush1.msra.mxu0 0.0
        %2461 = vmatprep.subr.mxu0 0.0
        %2462 = vmatpush1.msra.mxu0 0.0
        %2463 = vmatprep.subr.mxu0 0.0
        %2464 = vmatpush1.msra.mxu0 0.0
        %2465 = vmatprep.subr.mxu0 0.0
        %2466 = vmatpush1.msra.mxu0 0.0
        %2467 = vmatprep.subr.mxu0 0.0
        %2468 = vmatpush1.msra.mxu0 0.0
        %2469 = vmatprep.subr.mxu0 0.0
        %2470 = vmatpush1.msra.mxu0 0.0
        %2471 = vmatprep.subr.mxu0 0.0
        %2472 = vmatpush1.msra.mxu0 0.0
        %2473 = vmatprep.subr.mxu0 0.0
        %2474 = vmatpush1.msra.mxu0 0.0
        %2475 = vmatprep.subr.mxu0 0.0
        %2476 = vmatpush1.msra.mxu0 0.0
        %2477 = vmatprep.subr.mxu0 0.0
        %2478 = vmatpush1.msra.mxu0 0.0
        %2479 = vmatprep.subr.mxu0 0.0
        %2480 = vmatpush1.msra.mxu0 0.0
        %2481 = vmatprep.subr.mxu0 0.0
        %2482 = vmatpush1.msra.mxu0 0.0
        %2483 = vmatprep.subr.mxu0 0.0
        %2484 = vmatpush1.msra.mxu0 0.0
        %2485 = vmatprep.subr.mxu0 0.0
        %2486 = vmatpush1.msra.mxu0 0.0
        %2487 = vmatprep.subr.mxu0 0.0
        %2488 = vmatpush1.msra.mxu0 0.0
        %2489 = vmatprep.subr.mxu0 0.0
        %2490 = vmatpush1.msra.mxu0 0.0
        %2491 = vmatprep.subr.mxu0 0.0
        %2492 = vmatpush1.msra.mxu0 0.0
        %2493 = vmatprep.subr.mxu0 0.0
        %2494 = vmatpush1.msra.mxu0 0.0
        %2495 = vmatprep.subr.mxu0 0.0
        %2496 = vmatpush1.msra.mxu0 0.0
        %2497 = vmatprep.subr.mxu0 0.0
        %2498 = vmatpush1.msra.mxu0 0.0
        %2499 = vmatprep.subr.mxu0 0.0
        %2500 = vmatpush1.msra.mxu0 0.0
        %2501 = vmatprep.subr.mxu0 0.0
        %2502 = vmatpush1.msra.mxu0 0.0
        %2503 = vmatprep.subr.mxu0 0.0
        %2504 = vmatpush1.msra.mxu0 0.0
        %2505 = vmatprep.mubr.f32.mxu0 0.0
        %v2506 = vand.u32 %v2427, 4294901760
        %v2507 = vsub.f32 %v2427, %v2506
        %v2508 = vand.u32 %v2507, 4294901760
        %v2509 = vsub.f32 %v2507, %v2508
        %v2510 = vand.u32 %v2509, 4294901760
        %2511 = vmatmul.mubr.f32.gmra.mrb[0].mxu0 %v2510
        %v2512 = vpop.f32.mrb[0].mxu0
        %v2513 = vadd.f32 0.0, %v2512
        %v2514 = vpop.f32.mrb[0].mxu0
        %v2515 = vadd.f32 0.0, %v2514
        %2516 = vmatprep.mubr.f32.mxu0 0.0
        %v2517 = vand.u32 %v2430, 4294901760
        %v2518 = vsub.f32 %v2430, %v2517
        %v2519 = vand.u32 %v2518, 4294901760
        %v2520 = vsub.f32 %v2518, %v2519
        %v2521 = vand.u32 %v2520, 4294901760
        %2522 = vmatmul.mubr.f32.gmra.mrb[0].mxu0 %v2521
        %v2523 = vpop.f32.mrb[0].mxu0
        %v2524 = vadd.f32 0.0, %v2523
        %v2525 = vpop.f32.mrb[0].mxu0
        %v2526 = vadd.f32 0.0, %v2525
        %2527 = vdwg.mxu0
        %v2528 = vand.u32 %v2437, 4294901760
        %v2529 = vsub.f32 %v2437, %v2528
        %v2530 = vand.u32 %v2529, 4294901760
        %v2531 = vsub.f32 %v2529, %v2530
        %v2532 = vand.u32 %v2531, 4294901760
        %2533 = vmatprep.subr.mxu0 %v2532
        %v2534 = vand.u32 %v2434, 4294901760
        %v2535 = vsub.f32 %v2434, %v2534
        %v2536 = vand.u32 %v2535, 4294901760
        %v2537 = vsub.f32 %v2535, %v2536
        %v2538 = vand.u32 %v2537, 4294901760
        %2539 = vmatpush1.msra.mxu0 %v2538
        %2540 = vmatprep.subr.mxu0 0.0
        %2541 = vmatpush1.msra.mxu0 0.0
        %2542 = vmatprep.subr.mxu0 0.0
        %2543 = vmatpush1.msra.mxu0 0.0
        %2544 = vmatprep.subr.mxu0 0.0
        %2545 = vmatpush1.msra.mxu0 0.0
        %2546 = vmatprep.subr.mxu0 0.0
        %2547 = vmatpush1.msra.mxu0 0.0
        %2548 = vmatprep.subr.mxu0 0.0
        %2549 = vmatpush1.msra.mxu0 0.0
        %2550 = vmatprep.subr.mxu0 0.0
        %2551 = vmatpush1.msra.mxu0 0.0
        %2552 = vmatprep.subr.mxu0 0.0
        %2553 = vmatpush1.msra.mxu0 0.0
        %2554 = vmatprep.subr.mxu0 0.0
        %2555 = vmatpush1.msra.mxu0 0.0
        %2556 = vmatprep.subr.mxu0 0.0
        %2557 = vmatpush1.msra.mxu0 0.0
        %2558 = vmatprep.subr.mxu0 0.0
        %2559 = vmatpush1.msra.mxu0 0.0
        %2560 = vmatprep.subr.mxu0 0.0
        %2561 = vmatpush1.msra.mxu0 0.0
        %2562 = vmatprep.subr.mxu0 0.0
        %2563 = vmatpush1.msra.mxu0 0.0
        %2564 = vmatprep.subr.mxu0 0.0
        %2565 = vmatpush1.msra.mxu0 0.0
        %2566 = vmatprep.subr.mxu0 0.0
        %2567 = vmatpush1.msra.mxu0 0.0
        %2568 = vmatprep.subr.mxu0 0.0
        %2569 = vmatpush1.msra.mxu0 0.0
        %2570 = vmatprep.subr.mxu0 0.0
        %2571 = vmatpush1.msra.mxu0 0.0
        %2572 = vmatprep.subr.mxu0 0.0
        %2573 = vmatpush1.msra.mxu0 0.0
        %2574 = vmatprep.subr.mxu0 0.0
        %2575 = vmatpush1.msra.mxu0 0.0
        %2576 = vmatprep.subr.mxu0 0.0
        %2577 = vmatpush1.msra.mxu0 0.0
        %2578 = vmatprep.subr.mxu0 0.0
        %2579 = vmatpush1.msra.mxu0 0.0
        %2580 = vmatprep.subr.mxu0 0.0
        %2581 = vmatpush1.msra.mxu0 0.0
        %2582 = vmatprep.subr.mxu0 0.0
        %2583 = vmatpush1.msra.mxu0 0.0
        %2584 = vmatprep.subr.mxu0 0.0
        %2585 = vmatpush1.msra.mxu0 0.0
        %2586 = vmatprep.subr.mxu0 0.0
        %2587 = vmatpush1.msra.mxu0 0.0
        %2588 = vmatprep.subr.mxu0 0.0
        %2589 = vmatpush1.msra.mxu0 0.0
        %2590 = vmatprep.subr.mxu0 0.0
        %2591 = vmatpush1.msra.mxu0 0.0
        %2592 = vmatprep.subr.mxu0 0.0
        %2593 = vmatpush1.msra.mxu0 0.0
        %2594 = vmatprep.subr.mxu0 0.0
        %2595 = vmatpush1.msra.mxu0 0.0
        %2596 = vmatprep.subr.mxu0 0.0
        %2597 = vmatpush1.msra.mxu0 0.0
        %2598 = vmatprep.subr.mxu0 0.0
        %2599 = vmatpush1.msra.mxu0 0.0
        %2600 = vmatprep.subr.mxu0 0.0
        %2601 = vmatpush1.msra.mxu0 0.0
        %2602 = vmatprep.mubr.f32.mxu0 0.0
        %v2603 = vand.u32 %v2427, 4294901760
        %2604 = vmatmul.mubr.f32.gmra.mrb[0].mxu0 %v2603
        %v2605 = vpop.f32.mrb[0].mxu0
        %v2606 = vadd.f32 %v2513, %v2605
        %v2607 = vpop.f32.mrb[0].mxu0
        %v2608 = vadd.f32 %v2515, %v2607
        %2609 = vmatprep.mubr.f32.mxu0 0.0
        %v2610 = vand.u32 %v2430, 4294901760
        %2611 = vmatmul.mubr.f32.gmra.mrb[0].mxu0 %v2610
        %v2612 = vpop.f32.mrb[0].mxu0
        %v2613 = vadd.f32 %v2524, %v2612
        %v2614 = vpop.f32.mrb[0].mxu0
        %v2615 = vadd.f32 %v2526, %v2614
        %2616 = vdwg.mxu0
        %v2617 = vand.u32 %v2437, 4294901760
        %v2618 = vsub.f32 %v2437, %v2617
        %2619 = vmatprep.subr.mxu0 %v2618
        %v2620 = vand.u32 %v2434, 4294901760
        %v2621 = vsub.f32 %v2434, %v2620
        %2622 = vmatpush1.msra.mxu0 %v2621
        %2623 = vmatprep.subr.mxu0 0.0
        %2624 = vmatpush1.msra.mxu0 0.0
        %2625 = vmatprep.subr.mxu0 0.0
        %2626 = vmatpush1.msra.mxu0 0.0
        %2627 = vmatprep.subr.mxu0 0.0
        %2628 = vmatpush1.msra.mxu0 0.0
        %2629 = vmatprep.subr.mxu0 0.0
        %2630 = vmatpush1.msra.mxu0 0.0
        %2631 = vmatprep.subr.mxu0 0.0
        %2632 = vmatpush1.msra.mxu0 0.0
        %2633 = vmatprep.subr.mxu0 0.0
        %2634 = vmatpush1.msra.mxu0 0.0
        %2635 = vmatprep.subr.mxu0 0.0
        %2636 = vmatpush1.msra.mxu0 0.0
        %2637 = vmatprep.subr.mxu0 0.0
        %2638 = vmatpush1.msra.mxu0 0.0
        %2639 = vmatprep.subr.mxu0 0.0
        %2640 = vmatpush1.msra.mxu0 0.0
        %2641 = vmatprep.subr.mxu0 0.0
        %2642 = vmatpush1.msra.mxu0 0.0
        %2643 = vmatprep.subr.mxu0 0.0
        %2644 = vmatpush1.msra.mxu0 0.0
        %2645 = vmatprep.subr.mxu0 0.0
        %2646 = vmatpush1.msra.mxu0 0.0
        %2647 = vmatprep.subr.mxu0 0.0
        %2648 = vmatpush1.msra.mxu0 0.0
        %2649 = vmatprep.subr.mxu0 0.0
        %2650 = vmatpush1.msra.mxu0 0.0
        %2651 = vmatprep.subr.mxu0 0.0
        %2652 = vmatpush1.msra.mxu0 0.0
        %2653 = vmatprep.subr.mxu0 0.0
        %2654 = vmatpush1.msra.mxu0 0.0
        %2655 = vmatprep.subr.mxu0 0.0
        %2656 = vmatpush1.msra.mxu0 0.0
        %2657 = vmatprep.subr.mxu0 0.0
        %2658 = vmatpush1.msra.mxu0 0.0
        %2659 = vmatprep.subr.mxu0 0.0
        %2660 = vmatpush1.msra.mxu0 0.0
        %2661 = vmatprep.subr.mxu0 0.0
        %2662 = vmatpush1.msra.mxu0 0.0
        %2663 = vmatprep.subr.mxu0 0.0
        %2664 = vmatpush1.msra.mxu0 0.0
        %2665 = vmatprep.subr.mxu0 0.0
        %2666 = vmatpush1.msra.mxu0 0.0
        %2667 = vmatprep.subr.mxu0 0.0
        %2668 = vmatpush1.msra.mxu0 0.0
        %2669 = vmatprep.subr.mxu0 0.0
        %2670 = vmatpush1.msra.mxu0 0.0
        %2671 = vmatprep.subr.mxu0 0.0
        %2672 = vmatpush1.msra.mxu0 0.0
        %2673 = vmatprep.subr.mxu0 0.0
        %2674 = vmatpush1.msra.mxu0 0.0
        %2675 = vmatprep.subr.mxu0 0.0
        %2676 = vmatpush1.msra.mxu0 0.0
        %2677 = vmatprep.subr.mxu0 0.0
        %2678 = vmatpush1.msra.mxu0 0.0
        %2679 = vmatprep.subr.mxu0 0.0
        %2680 = vmatpush1.msra.mxu0 0.0
        %2681 = vmatprep.subr.mxu0 0.0
        %2682 = vmatpush1.msra.mxu0 0.0
        %2683 = vmatprep.subr.mxu0 0.0
        %2684 = vmatpush1.msra.mxu0 0.0
        %2685 = vmatprep.mubr.f32.mxu0 0.0
        %v2686 = vand.u32 %v2427, 4294901760
        %v2687 = vsub.f32 %v2427, %v2686
        %2688 = vmatmul.mubr.f32.gmra.mrb[0].mxu0 %v2687
        %v2689 = vpop.f32.mrb[0].mxu0
        %v2690 = vadd.f32 %v2606, %v2689
        %v2691 = vpop.f32.mrb[0].mxu0
        %v2692 = vadd.f32 %v2608, %v2691
        %2693 = vmatprep.mubr.f32.mxu0 0.0
        %v2694 = vand.u32 %v2430, 4294901760
        %v2695 = vsub.f32 %v2430, %v2694
        %2696 = vmatmul.mubr.f32.gmra.mrb[0].mxu0 %v2695
        %v2697 = vpop.f32.mrb[0].mxu0
        %v2698 = vadd.f32 %v2613, %v2697
        %v2699 = vpop.f32.mrb[0].mxu0
        %v2700 = vadd.f32 %v2615, %v2699
        %2701 = vdwg.mxu0
        %v2702 = vand.u32 %v2437, 4294901760
        %2703 = vmatprep.subr.mxu0 %v2702
        %v2704 = vand.u32 %v2434, 4294901760
        %2705 = vmatpush1.msra.mxu0 %v2704
        %2706 = vmatprep.subr.mxu0 0.0
        %2707 = vmatpush1.msra.mxu0 0.0
        %2708 = vmatprep.subr.mxu0 0.0
        %2709 = vmatpush1.msra.mxu0 0.0
        %2710 = vmatprep.subr.mxu0 0.0
        %2711 = vmatpush1.msra.mxu0 0.0
        %2712 = vmatprep.subr.mxu0 0.0
        %2713 = vmatpush1.msra.mxu0 0.0
        %2714 = vmatprep.subr.mxu0 0.0
        %2715 = vmatpush1.msra.mxu0 0.0
        %2716 = vmatprep.subr.mxu0 0.0
        %2717 = vmatpush1.msra.mxu0 0.0
        %2718 = vmatprep.subr.mxu0 0.0
        %2719 = vmatpush1.msra.mxu0 0.0
        %2720 = vmatprep.subr.mxu0 0.0
        %2721 = vmatpush1.msra.mxu0 0.0
        %2722 = vmatprep.subr.mxu0 0.0
        %2723 = vmatpush1.msra.mxu0 0.0
        %2724 = vmatprep.subr.mxu0 0.0
        %2725 = vmatpush1.msra.mxu0 0.0
        %2726 = vmatprep.subr.mxu0 0.0
        %2727 = vmatpush1.msra.mxu0 0.0
        %2728 = vmatprep.subr.mxu0 0.0
        %2729 = vmatpush1.msra.mxu0 0.0
        %2730 = vmatprep.subr.mxu0 0.0
        %2731 = vmatpush1.msra.mxu0 0.0
        %2732 = vmatprep.subr.mxu0 0.0
        %2733 = vmatpush1.msra.mxu0 0.0
        %2734 = vmatprep.subr.mxu0 0.0
        %2735 = vmatpush1.msra.mxu0 0.0
        %2736 = vmatprep.subr.mxu0 0.0
        %2737 = vmatpush1.msra.mxu0 0.0
        %2738 = vmatprep.subr.mxu0 0.0
        %2739 = vmatpush1.msra.mxu0 0.0
        %2740 = vmatprep.subr.mxu0 0.0
        %2741 = vmatpush1.msra.mxu0 0.0
        %2742 = vmatprep.subr.mxu0 0.0
        %2743 = vmatpush1.msra.mxu0 0.0
        %2744 = vmatprep.subr.mxu0 0.0
        %2745 = vmatpush1.msra.mxu0 0.0
        %2746 = vmatprep.subr.mxu0 0.0
        %2747 = vmatpush1.msra.mxu0 0.0
        %2748 = vmatprep.subr.mxu0 0.0
        %2749 = vmatpush1.msra.mxu0 0.0
        %2750 = vmatprep.subr.mxu0 0.0
        %2751 = vmatpush1.msra.mxu0 0.0
        %2752 = vmatprep.subr.mxu0 0.0
        %2753 = vmatpush1.msra.mxu0 0.0
        %2754 = vmatprep.subr.mxu0 0.0
        %2755 = vmatpush1.msra.mxu0 0.0
        %2756 = vmatprep.subr.mxu0 0.0
        %2757 = vmatpush1.msra.mxu0 0.0
        %2758 = vmatprep.subr.mxu0 0.0
        %2759 = vmatpush1.msra.mxu0 0.0
        %2760 = vmatprep.subr.mxu0 0.0
        %2761 = vmatpush1.msra.mxu0 0.0
        %2762 = vmatprep.subr.mxu0 0.0
        %2763 = vmatpush1.msra.mxu0 0.0
        %2764 = vmatprep.subr.mxu0 0.0
        %2765 = vmatpush1.msra.mxu0 0.0
        %2766 = vmatprep.subr.mxu0 0.0
        %2767 = vmatpush1.msra.mxu0 0.0
        %2768 = vmatprep.mubr.f32.mxu0 0.0
        %v2769 = vand.u32 %v2427, 4294901760
        %v2770 = vsub.f32 %v2427, %v2769
        %v2771 = vand.u32 %v2770, 4294901760
        %2772 = vmatmul.mubr.f32.gmra.mrb[0].mxu0 %v2771
        %v2773 = vpop.f32.mrb[0].mxu0
        %v2774 = vadd.f32 %v2690, %v2773
        %v2775 = vpop.f32.mrb[0].mxu0
        %v2776 = vadd.f32 %v2692, %v2775
        %2777 = vmatprep.mubr.f32.mxu0 0.0
        %v2778 = vand.u32 %v2430, 4294901760
        %v2779 = vsub.f32 %v2430, %v2778
        %v2780 = vand.u32 %v2779, 4294901760
        %2781 = vmatmul.mubr.f32.gmra.mrb[0].mxu0 %v2780
        %v2782 = vpop.f32.mrb[0].mxu0
        %v2783 = vadd.f32 %v2698, %v2782
        %v2784 = vpop.f32.mrb[0].mxu0
        %v2785 = vadd.f32 %v2700, %v2784
        %2786 = vdwg.mxu0
        %v2787 = vand.u32 %v2437, 4294901760
        %v2788 = vsub.f32 %v2437, %v2787
        %v2789 = vand.u32 %v2788, 4294901760
        %2790 = vmatprep.subr.mxu0 %v2789
        %v2791 = vand.u32 %v2434, 4294901760
        %v2792 = vsub.f32 %v2434, %v2791
        %v2793 = vand.u32 %v2792, 4294901760
        %2794 = vmatpush1.msra.mxu0 %v2793
        %2795 = vmatprep.subr.mxu0 0.0
        %2796 = vmatpush1.msra.mxu0 0.0
        %2797 = vmatprep.subr.mxu0 0.0
        %2798 = vmatpush1.msra.mxu0 0.0
        %2799 = vmatprep.subr.mxu0 0.0
        %2800 = vmatpush1.msra.mxu0 0.0
        %2801 = vmatprep.subr.mxu0 0.0
        %2802 = vmatpush1.msra.mxu0 0.0
        %2803 = vmatprep.subr.mxu0 0.0
        %2804 = vmatpush1.msra.mxu0 0.0
        %2805 = vmatprep.subr.mxu0 0.0
        %2806 = vmatpush1.msra.mxu0 0.0
        %2807 = vmatprep.subr.mxu0 0.0
        %2808 = vmatpush1.msra.mxu0 0.0
        %2809 = vmatprep.subr.mxu0 0.0
        %2810 = vmatpush1.msra.mxu0 0.0
        %2811 = vmatprep.subr.mxu0 0.0
        %2812 = vmatpush1.msra.mxu0 0.0
        %2813 = vmatprep.subr.mxu0 0.0
        %2814 = vmatpush1.msra.mxu0 0.0
        %2815 = vmatprep.subr.mxu0 0.0
        %2816 = vmatpush1.msra.mxu0 0.0
        %2817 = vmatprep.subr.mxu0 0.0
        %2818 = vmatpush1.msra.mxu0 0.0
        %2819 = vmatprep.subr.mxu0 0.0
        %2820 = vmatpush1.msra.mxu0 0.0
        %2821 = vmatprep.subr.mxu0 0.0
        %2822 = vmatpush1.msra.mxu0 0.0
        %2823 = vmatprep.subr.mxu0 0.0
        %2824 = vmatpush1.msra.mxu0 0.0
        %2825 = vmatprep.subr.mxu0 0.0
        %2826 = vmatpush1.msra.mxu0 0.0
        %2827 = vmatprep.subr.mxu0 0.0
        %2828 = vmatpush1.msra.mxu0 0.0
        %2829 = vmatprep.subr.mxu0 0.0
        %2830 = vmatpush1.msra.mxu0 0.0
        %2831 = vmatprep.subr.mxu0 0.0
        %2832 = vmatpush1.msra.mxu0 0.0
        %2833 = vmatprep.subr.mxu0 0.0
        %2834 = vmatpush1.msra.mxu0 0.0
        %2835 = vmatprep.subr.mxu0 0.0
        %2836 = vmatpush1.msra.mxu0 0.0
        %2837 = vmatprep.subr.mxu0 0.0
        %2838 = vmatpush1.msra.mxu0 0.0
        %2839 = vmatprep.subr.mxu0 0.0
        %2840 = vmatpush1.msra.mxu0 0.0
        %2841 = vmatprep.subr.mxu0 0.0
        %2842 = vmatpush1.msra.mxu0 0.0
        %2843 = vmatprep.subr.mxu0 0.0
        %2844 = vmatpush1.msra.mxu0 0.0
        %2845 = vmatprep.subr.mxu0 0.0
        %2846 = vmatpush1.msra.mxu0 0.0
        %2847 = vmatprep.subr.mxu0 0.0
        %2848 = vmatpush1.msra.mxu0 0.0
        %2849 = vmatprep.subr.mxu0 0.0
        %2850 = vmatpush1.msra.mxu0 0.0
        %2851 = vmatprep.subr.mxu0 0.0
        %2852 = vmatpush1.msra.mxu0 0.0
        %2853 = vmatprep.subr.mxu0 0.0
        %2854 = vmatpush1.msra.mxu0 0.0
        %2855 = vmatprep.subr.mxu0 0.0
        %2856 = vmatpush1.msra.mxu0 0.0
        %2857 = vmatprep.mubr.f32.mxu0 0.0
        %v2858 = vand.u32 %v2427, 4294901760
        %2859 = vmatmul.mubr.f32.gmra.mrb[0].mxu0 %v2858
        %v2860 = vpop.f32.mrb[0].mxu0
        %v2861 = vadd.f32 %v2774, %v2860
        %v2862 = vpop.f32.mrb[0].mxu0
        %v2863 = vadd.f32 %v2776, %v2862
        %2864 = vmatprep.mubr.f32.mxu0 0.0
        %v2865 = vand.u32 %v2430, 4294901760
        %2866 = vmatmul.mubr.f32.gmra.mrb[0].mxu0 %v2865
        %v2867 = vpop.f32.mrb[0].mxu0
        %v2868 = vadd.f32 %v2783, %v2867
        %v2869 = vpop.f32.mrb[0].mxu0
        %v2870 = vadd.f32 %v2785, %v2869
        %2871 = vdwg.mxu0
        %v2872 = vand.u32 %v2437, 4294901760
        %2873 = vmatprep.subr.mxu0 %v2872
        %v2874 = vand.u32 %v2434, 4294901760
        %2875 = vmatpush1.msra.mxu0 %v2874
        %2876 = vmatprep.subr.mxu0 0.0
        %2877 = vmatpush1.msra.mxu0 0.0
        %2878 = vmatprep.subr.mxu0 0.0
        %2879 = vmatpush1.msra.mxu0 0.0
        %2880 = vmatprep.subr.mxu0 0.0
        %2881 = vmatpush1.msra.mxu0 0.0
        %2882 = vmatprep.subr.mxu0 0.0
        %2883 = vmatpush1.msra.mxu0 0.0
        %2884 = vmatprep.subr.mxu0 0.0
        %2885 = vmatpush1.msra.mxu0 0.0
        %2886 = vmatprep.subr.mxu0 0.0
        %2887 = vmatpush1.msra.mxu0 0.0
        %2888 = vmatprep.subr.mxu0 0.0
        %2889 = vmatpush1.msra.mxu0 0.0
        %2890 = vmatprep.subr.mxu0 0.0
        %2891 = vmatpush1.msra.mxu0 0.0
        %2892 = vmatprep.subr.mxu0 0.0
        %2893 = vmatpush1.msra.mxu0 0.0
        %2894 = vmatprep.subr.mxu0 0.0
        %2895 = vmatpush1.msra.mxu0 0.0
        %2896 = vmatprep.subr.mxu0 0.0
        %2897 = vmatpush1.msra.mxu0 0.0
        %2898 = vmatprep.subr.mxu0 0.0
        %2899 = vmatpush1.msra.mxu0 0.0
        %2900 = vmatprep.subr.mxu0 0.0
        %2901 = vmatpush1.msra.mxu0 0.0
        %2902 = vmatprep.subr.mxu0 0.0
        %2903 = vmatpush1.msra.mxu0 0.0
        %2904 = vmatprep.subr.mxu0 0.0
        %2905 = vmatpush1.msra.mxu0 0.0
        %2906 = vmatprep.subr.mxu0 0.0
        %2907 = vmatpush1.msra.mxu0 0.0
        %2908 = vmatprep.subr.mxu0 0.0
        %2909 = vmatpush1.msra.mxu0 0.0
        %2910 = vmatprep.subr.mxu0 0.0
        %2911 = vmatpush1.msra.mxu0 0.0
        %2912 = vmatprep.subr.mxu0 0.0
        %2913 = vmatpush1.msra.mxu0 0.0
        %2914 = vmatprep.subr.mxu0 0.0
        %2915 = vmatpush1.msra.mxu0 0.0
        %2916 = vmatprep.subr.mxu0 0.0
        %2917 = vmatpush1.msra.mxu0 0.0
        %2918 = vmatprep.subr.mxu0 0.0
        %2919 = vmatpush1.msra.mxu0 0.0
        %2920 = vmatprep.subr.mxu0 0.0
        %2921 = vmatpush1.msra.mxu0 0.0
        %2922 = vmatprep.subr.mxu0 0.0
        %2923 = vmatpush1.msra.mxu0 0.0
        %2924 = vmatprep.subr.mxu0 0.0
        %2925 = vmatpush1.msra.mxu0 0.0
        %2926 = vmatprep.subr.mxu0 0.0
        %2927 = vmatpush1.msra.mxu0 0.0
        %2928 = vmatprep.subr.mxu0 0.0
        %2929 = vmatpush1.msra.mxu0 0.0
        %2930 = vmatprep.subr.mxu0 0.0
        %2931 = vmatpush1.msra.mxu0 0.0
        %2932 = vmatprep.subr.mxu0 0.0
        %2933 = vmatpush1.msra.mxu0 0.0
        %2934 = vmatprep.subr.mxu0 0.0
        %2935 = vmatpush1.msra.mxu0 0.0
        %2936 = vmatprep.subr.mxu0 0.0
        %2937 = vmatpush1.msra.mxu0 0.0
        %2938 = vmatprep.mubr.f32.mxu0 0.0
        %v2939 = vand.u32 %v2427, 4294901760
        %2940 = vmatmul.mubr.f32.gmra.mrb[0].mxu0 %v2939
        %v2941 = vpop.f32.mrb[0].mxu0
        %v2942 = vadd.f32 %v2861, %v2941
        %v2943 = vpop.f32.mrb[0].mxu0
        %v2944 = vadd.f32 %v2863, %v2943
        %2945 = vmatprep.mubr.f32.mxu0 0.0
        %v2946 = vand.u32 %v2430, 4294901760
        %2947 = vmatmul.mubr.f32.gmra.mrb[0].mxu0 %v2946
        %v2948 = vpop.f32.mrb[0].mxu0
        %v2949 = vadd.f32 %v2868, %v2948
        %v2950 = vpop.f32.mrb[0].mxu0
        %v2951 = vadd.f32 %v2870, %v2950
        %2952 = vdwg.mxu0
        %v2953 = vadd.f32 %v2414, %v2942
        %v2954 = vadd.f32 %v2416, %v2944
        %v2955 = vadd.f32 %v2421, %v2949
        %v2956 = vadd.f32 %v2423, %v2951
        %vm2957 = vcmp.gt.f32.partialorder %v2953, 0.0
        %vm2958 = vcmp.gt.f32.partialorder %v2954, 0.0
        %vm2959 = vcmp.gt.f32.partialorder %v2955, 0.0
        %vm2960 = vcmp.gt.f32.partialorder %v2956, 0.0
        %v2961 = vmul.f32 %v2953, 0.01
        %v2962 = vmul.f32 %v2954, 0.01
        %v2963 = vmul.f32 %v2955, 0.01
        %v2964 = vmul.f32 %v2956, 0.01
        %v2965 = vsel %vm2957, %v2953, %v2961
        %v2966 = vsel %vm2958, %v2954, %v2962
        %v2967 = vsel %vm2959, %v2955, %v2963
        %v2968 = vsel %vm2960, %v2956, %v2964
        %2970 = vset.pattern.permute.xlu0 16
        %2971 = vperm.xlu0 %2970, %v256
        %v2972 = vpop.permute.xlu0 %2971
        %v2974 = vsel %vm816, %v256, 0
        %v2976 = vand.u32 %v2966, 4294901760
        %2977 = vmatprep.subr.mxu0 %v2976
        %v2978 = vand.u32 %v2965, 4294901760
        %2979 = vmatpush1.msra.mxu0 %v2978
        %v2980 = vand.u32 %v2968, 4294901760
        %2981 = vmatprep.subr.mxu0 %v2980
        %v2982 = vand.u32 %v2967, 4294901760
        %2983 = vmatpush1.msra.mxu0 %v2982
        %2984 = vmatprep.subr.mxu0 0.0
        %2985 = vmatpush1.msra.mxu0 0.0
        %2986 = vmatprep.subr.mxu0 0.0
        %2987 = vmatpush1.msra.mxu0 0.0
        %2988 = vmatprep.subr.mxu0 0.0
        %2989 = vmatpush1.msra.mxu0 0.0
        %2990 = vmatprep.subr.mxu0 0.0
        %2991 = vmatpush1.msra.mxu0 0.0
        %2992 = vmatprep.subr.mxu0 0.0
        %2993 = vmatpush1.msra.mxu0 0.0
        %2994 = vmatprep.subr.mxu0 0.0
        %2995 = vmatpush1.msra.mxu0 0.0
        %2996 = vmatprep.subr.mxu0 0.0
        %2997 = vmatpush1.msra.mxu0 0.0
        %2998 = vmatprep.subr.mxu0 0.0
        %2999 = vmatpush1.msra.mxu0 0.0
        %3000 = vmatprep.subr.mxu0 0.0
        %3001 = vmatpush1.msra.mxu0 0.0
        %3002 = vmatprep.subr.mxu0 0.0
        %3003 = vmatpush1.msra.mxu0 0.0
        %3004 = vmatprep.subr.mxu0 0.0
        %3005 = vmatpush1.msra.mxu0 0.0
        %3006 = vmatprep.subr.mxu0 0.0
        %3007 = vmatpush1.msra.mxu0 0.0
        %3008 = vmatprep.subr.mxu0 0.0
        %3009 = vmatpush1.msra.mxu0 0.0
        %3010 = vmatprep.subr.mxu0 0.0
        %3011 = vmatpush1.msra.mxu0 0.0
        %3012 = vmatprep.subr.mxu0 0.0
        %3013 = vmatpush1.msra.mxu0 0.0
        %3014 = vmatprep.subr.mxu0 0.0
        %3015 = vmatpush1.msra.mxu0 0.0
        %3016 = vmatprep.subr.mxu0 0.0
        %3017 = vmatpush1.msra.mxu0 0.0
        %3018 = vmatprep.subr.mxu0 0.0
        %3019 = vmatpush1.msra.mxu0 0.0
        %3020 = vmatprep.subr.mxu0 0.0
        %3021 = vmatpush1.msra.mxu0 0.0
        %3022 = vmatprep.subr.mxu0 0.0
        %3023 = vmatpush1.msra.mxu0 0.0
        %3024 = vmatprep.subr.mxu0 0.0
        %3025 = vmatpush1.msra.mxu0 0.0
        %3026 = vmatprep.subr.mxu0 0.0
        %3027 = vmatpush1.msra.mxu0 0.0
        %3028 = vmatprep.subr.mxu0 0.0
        %3029 = vmatpush1.msra.mxu0 0.0
        %3030 = vmatprep.subr.mxu0 0.0
        %3031 = vmatpush1.msra.mxu0 0.0
        %3032 = vmatprep.subr.mxu0 0.0
        %3033 = vmatpush1.msra.mxu0 0.0
        %3034 = vmatprep.subr.mxu0 0.0
        %3035 = vmatpush1.msra.mxu0 0.0
        %3036 = vmatprep.subr.mxu0 0.0
        %3037 = vmatpush1.msra.mxu0 0.0
        %3038 = vmatprep.subr.mxu0 0.0
        %3039 = vmatpush1.msra.mxu0 0.0
        %3040 = vmatprep.subr.mxu0 0.0
        %3041 = vmatpush1.msra.mxu0 0.0
        %3042 = vmatprep.subr.mxu0 0.0
        %3043 = vmatpush1.msra.mxu0 0.0
        %3044 = vmatprep.mubr.f32.mxu0 0.0
        %v3045 = vand.u32 %v2974, 4294901760
        %v3046 = vsub.f32 %v2974, %v3045
        %v3047 = vand.u32 %v3046, 4294901760
        %v3048 = vsub.f32 %v3046, %v3047
        %v3049 = vand.u32 %v3048, 4294901760
        %3050 = vmatmul.mubr.f32.gmra.mrb[0].mxu0 %v3049
        %v3051 = vpop.f32.mrb[0].mxu0
        %v3052 = vadd.f32 %v2972, %v3051
        %v3053 = vpop.f32.mrb[0].mxu0
        %v3054 = vadd.f32 %v2972, %v3053
        %3055 = vdwg.mxu0
        %v3056 = vand.u32 %v2966, 4294901760
        %v3057 = vsub.f32 %v2966, %v3056
        %v3058 = vand.u32 %v3057, 4294901760
        %v3059 = vsub.f32 %v3057, %v3058
        %v3060 = vand.u32 %v3059, 4294901760
        %3061 = vmatprep.subr.mxu0 %v3060
        %v3062 = vand.u32 %v2965, 4294901760
        %v3063 = vsub.f32 %v2965, %v3062
        %v3064 = vand.u32 %v3063, 4294901760
        %v3065 = vsub.f32 %v3063, %v3064
        %v3066 = vand.u32 %v3065, 4294901760
        %3067 = vmatpush1.msra.mxu0 %v3066
        %v3068 = vand.u32 %v2968, 4294901760
        %v3069 = vsub.f32 %v2968, %v3068
        %v3070 = vand.u32 %v3069, 4294901760
        %v3071 = vsub.f32 %v3069, %v3070
        %v3072 = vand.u32 %v3071, 4294901760
        %3073 = vmatprep.subr.mxu0 %v3072
        %v3074 = vand.u32 %v2967, 4294901760
        %v3075 = vsub.f32 %v2967, %v3074
        %v3076 = vand.u32 %v3075, 4294901760
        %v3077 = vsub.f32 %v3075, %v3076
        %v3078 = vand.u32 %v3077, 4294901760
        %3079 = vmatpush1.msra.mxu0 %v3078
        %3080 = vmatprep.subr.mxu0 0.0
        %3081 = vmatpush1.msra.mxu0 0.0
        %3082 = vmatprep.subr.mxu0 0.0
        %3083 = vmatpush1.msra.mxu0 0.0
        %3084 = vmatprep.subr.mxu0 0.0
        %3085 = vmatpush1.msra.mxu0 0.0
        %3086 = vmatprep.subr.mxu0 0.0
        %3087 = vmatpush1.msra.mxu0 0.0
        %3088 = vmatprep.subr.mxu0 0.0
        %3089 = vmatpush1.msra.mxu0 0.0
        %3090 = vmatprep.subr.mxu0 0.0
        %3091 = vmatpush1.msra.mxu0 0.0
        %3092 = vmatprep.subr.mxu0 0.0
        %3093 = vmatpush1.msra.mxu0 0.0
        %3094 = vmatprep.subr.mxu0 0.0
        %3095 = vmatpush1.msra.mxu0 0.0
        %3096 = vmatprep.subr.mxu0 0.0
        %3097 = vmatpush1.msra.mxu0 0.0
        %3098 = vmatprep.subr.mxu0 0.0
        %3099 = vmatpush1.msra.mxu0 0.0
        %3100 = vmatprep.subr.mxu0 0.0
        %3101 = vmatpush1.msra.mxu0 0.0
        %3102 = vmatprep.subr.mxu0 0.0
        %3103 = vmatpush1.msra.mxu0 0.0
        %3104 = vmatprep.subr.mxu0 0.0
        %3105 = vmatpush1.msra.mxu0 0.0
        %3106 = vmatprep.subr.mxu0 0.0
        %3107 = vmatpush1.msra.mxu0 0.0
        %3108 = vmatprep.subr.mxu0 0.0
        %3109 = vmatpush1.msra.mxu0 0.0
        %3110 = vmatprep.subr.mxu0 0.0
        %3111 = vmatpush1.msra.mxu0 0.0
        %3112 = vmatprep.subr.mxu0 0.0
        %3113 = vmatpush1.msra.mxu0 0.0
        %3114 = vmatprep.subr.mxu0 0.0
        %3115 = vmatpush1.msra.mxu0 0.0
        %3116 = vmatprep.subr.mxu0 0.0
        %3117 = vmatpush1.msra.mxu0 0.0
        %3118 = vmatprep.subr.mxu0 0.0
        %3119 = vmatpush1.msra.mxu0 0.0
        %3120 = vmatprep.subr.mxu0 0.0
        %3121 = vmatpush1.msra.mxu0 0.0
        %3122 = vmatprep.subr.mxu0 0.0
        %3123 = vmatpush1.msra.mxu0 0.0
        %3124 = vmatprep.subr.mxu0 0.0
        %3125 = vmatpush1.msra.mxu0 0.0
        %3126 = vmatprep.subr.mxu0 0.0
        %3127 = vmatpush1.msra.mxu0 0.0
        %3128 = vmatprep.subr.mxu0 0.0
        %3129 = vmatpush1.msra.mxu0 0.0
        %3130 = vmatprep.subr.mxu0 0.0
        %3131 = vmatpush1.msra.mxu0 0.0
        %3132 = vmatprep.subr.mxu0 0.0
        %3133 = vmatpush1.msra.mxu0 0.0
        %3134 = vmatprep.subr.mxu0 0.0
        %3135 = vmatpush1.msra.mxu0 0.0
        %3136 = vmatprep.subr.mxu0 0.0
        %3137 = vmatpush1.msra.mxu0 0.0
        %3138 = vmatprep.subr.mxu0 0.0
        %3139 = vmatpush1.msra.mxu0 0.0
        %3140 = vmatprep.mubr.f32.mxu0 0.0
        %v3141 = vand.u32 %v2974, 4294901760
        %3142 = vmatmul.mubr.f32.gmra.mrb[0].mxu0 %v3141
        %v3143 = vpop.f32.mrb[0].mxu0
        %v3144 = vadd.f32 %v3052, %v3143
        %v3145 = vpop.f32.mrb[0].mxu0
        %v3146 = vadd.f32 %v3054, %v3145
        %3147 = vdwg.mxu0
        %v3148 = vand.u32 %v2966, 4294901760
        %v3149 = vsub.f32 %v2966, %v3148
        %3150 = vmatprep.subr.mxu0 %v3149
        %v3151 = vand.u32 %v2965, 4294901760
        %v3152 = vsub.f32 %v2965, %v3151
        %3153 = vmatpush1.msra.mxu0 %v3152
        %v3154 = vand.u32 %v2968, 4294901760
        %v3155 = vsub.f32 %v2968, %v3154
        %3156 = vmatprep.subr.mxu0 %v3155
        %v3157 = vand.u32 %v2967, 4294901760
        %v3158 = vsub.f32 %v2967, %v3157
        %3159 = vmatpush1.msra.mxu0 %v3158
        %3160 = vmatprep.subr.mxu0 0.0
        %3161 = vmatpush1.msra.mxu0 0.0
        %3162 = vmatprep.subr.mxu0 0.0
        %3163 = vmatpush1.msra.mxu0 0.0
        %3164 = vmatprep.subr.mxu0 0.0
        %3165 = vmatpush1.msra.mxu0 0.0
        %3166 = vmatprep.subr.mxu0 0.0
        %3167 = vmatpush1.msra.mxu0 0.0
        %3168 = vmatprep.subr.mxu0 0.0
        %3169 = vmatpush1.msra.mxu0 0.0
        %3170 = vmatprep.subr.mxu0 0.0
        %3171 = vmatpush1.msra.mxu0 0.0
        %3172 = vmatprep.subr.mxu0 0.0
        %3173 = vmatpush1.msra.mxu0 0.0
        %3174 = vmatprep.subr.mxu0 0.0
        %3175 = vmatpush1.msra.mxu0 0.0
        %3176 = vmatprep.subr.mxu0 0.0
        %3177 = vmatpush1.msra.mxu0 0.0
        %3178 = vmatprep.subr.mxu0 0.0
        %3179 = vmatpush1.msra.mxu0 0.0
        %3180 = vmatprep.subr.mxu0 0.0
        %3181 = vmatpush1.msra.mxu0 0.0
        %3182 = vmatprep.subr.mxu0 0.0
        %3183 = vmatpush1.msra.mxu0 0.0
        %3184 = vmatprep.subr.mxu0 0.0
        %3185 = vmatpush1.msra.mxu0 0.0
        %3186 = vmatprep.subr.mxu0 0.0
        %3187 = vmatpush1.msra.mxu0 0.0
        %3188 = vmatprep.subr.mxu0 0.0
        %3189 = vmatpush1.msra.mxu0 0.0
        %3190 = vmatprep.subr.mxu0 0.0
        %3191 = vmatpush1.msra.mxu0 0.0
        %3192 = vmatprep.subr.mxu0 0.0
        %3193 = vmatpush1.msra.mxu0 0.0
        %3194 = vmatprep.subr.mxu0 0.0
        %3195 = vmatpush1.msra.mxu0 0.0
        %3196 = vmatprep.subr.mxu0 0.0
        %3197 = vmatpush1.msra.mxu0 0.0
        %3198 = vmatprep.subr.mxu0 0.0
        %3199 = vmatpush1.msra.mxu0 0.0
        %3200 = vmatprep.subr.mxu0 0.0
        %3201 = vmatpush1.msra.mxu0 0.0
        %3202 = vmatprep.subr.mxu0 0.0
        %3203 = vmatpush1.msra.mxu0 0.0
        %3204 = vmatprep.subr.mxu0 0.0
        %3205 = vmatpush1.msra.mxu0 0.0
        %3206 = vmatprep.subr.mxu0 0.0
        %3207 = vmatpush1.msra.mxu0 0.0
        %3208 = vmatprep.subr.mxu0 0.0
        %3209 = vmatpush1.msra.mxu0 0.0
        %3210 = vmatprep.subr.mxu0 0.0
        %3211 = vmatpush1.msra.mxu0 0.0
        %3212 = vmatprep.subr.mxu0 0.0
        %3213 = vmatpush1.msra.mxu0 0.0
        %3214 = vmatprep.subr.mxu0 0.0
        %3215 = vmatpush1.msra.mxu0 0.0
        %3216 = vmatprep.subr.mxu0 0.0
        %3217 = vmatpush1.msra.mxu0 0.0
        %3218 = vmatprep.subr.mxu0 0.0
        %3219 = vmatpush1.msra.mxu0 0.0
        %3220 = vmatprep.mubr.f32.mxu0 0.0
        %v3221 = vand.u32 %v2974, 4294901760
        %v3222 = vsub.f32 %v2974, %v3221
        %3223 = vmatmul.mubr.f32.gmra.mrb[0].mxu0 %v3222
        %v3224 = vpop.f32.mrb[0].mxu0
        %v3225 = vadd.f32 %v3144, %v3224
        %v3226 = vpop.f32.mrb[0].mxu0
        %v3227 = vadd.f32 %v3146, %v3226
        %3228 = vdwg.mxu0
        %v3229 = vand.u32 %v2966, 4294901760
        %3230 = vmatprep.subr.mxu0 %v3229
        %v3231 = vand.u32 %v2965, 4294901760
        %3232 = vmatpush1.msra.mxu0 %v3231
        %v3233 = vand.u32 %v2968, 4294901760
        %3234 = vmatprep.subr.mxu0 %v3233
        %v3235 = vand.u32 %v2967, 4294901760
        %3236 = vmatpush1.msra.mxu0 %v3235
        %3237 = vmatprep.subr.mxu0 0.0
        %3238 = vmatpush1.msra.mxu0 0.0
        %3239 = vmatprep.subr.mxu0 0.0
        %3240 = vmatpush1.msra.mxu0 0.0
        %3241 = vmatprep.subr.mxu0 0.0
        %3242 = vmatpush1.msra.mxu0 0.0
        %3243 = vmatprep.subr.mxu0 0.0
        %3244 = vmatpush1.msra.mxu0 0.0
        %3245 = vmatprep.subr.mxu0 0.0
        %3246 = vmatpush1.msra.mxu0 0.0
        %3247 = vmatprep.subr.mxu0 0.0
        %3248 = vmatpush1.msra.mxu0 0.0
        %3249 = vmatprep.subr.mxu0 0.0
        %3250 = vmatpush1.msra.mxu0 0.0
        %3251 = vmatprep.subr.mxu0 0.0
        %3252 = vmatpush1.msra.mxu0 0.0
        %3253 = vmatprep.subr.mxu0 0.0
        %3254 = vmatpush1.msra.mxu0 0.0
        %3255 = vmatprep.subr.mxu0 0.0
        %3256 = vmatpush1.msra.mxu0 0.0
        %3257 = vmatprep.subr.mxu0 0.0
        %3258 = vmatpush1.msra.mxu0 0.0
        %3259 = vmatprep.subr.mxu0 0.0
        %3260 = vmatpush1.msra.mxu0 0.0
        %3261 = vmatprep.subr.mxu0 0.0
        %3262 = vmatpush1.msra.mxu0 0.0
        %3263 = vmatprep.subr.mxu0 0.0
        %3264 = vmatpush1.msra.mxu0 0.0
        %3265 = vmatprep.subr.mxu0 0.0
        %3266 = vmatpush1.msra.mxu0 0.0
        %3267 = vmatprep.subr.mxu0 0.0
        %3268 = vmatpush1.msra.mxu0 0.0
        %3269 = vmatprep.subr.mxu0 0.0
        %3270 = vmatpush1.msra.mxu0 0.0
        %3271 = vmatprep.subr.mxu0 0.0
        %3272 = vmatpush1.msra.mxu0 0.0
        %3273 = vmatprep.subr.mxu0 0.0
        %3274 = vmatpush1.msra.mxu0 0.0
        %3275 = vmatprep.subr.mxu0 0.0
        %3276 = vmatpush1.msra.mxu0 0.0
        %3277 = vmatprep.subr.mxu0 0.0
        %3278 = vmatpush1.msra.mxu0 0.0
        %3279 = vmatprep.subr.mxu0 0.0
        %3280 = vmatpush1.msra.mxu0 0.0
        %3281 = vmatprep.subr.mxu0 0.0
        %3282 = vmatpush1.msra.mxu0 0.0
        %3283 = vmatprep.subr.mxu0 0.0
        %3284 = vmatpush1.msra.mxu0 0.0
        %3285 = vmatprep.subr.mxu0 0.0
        %3286 = vmatpush1.msra.mxu0 0.0
        %3287 = vmatprep.subr.mxu0 0.0
        %3288 = vmatpush1.msra.mxu0 0.0
        %3289 = vmatprep.subr.mxu0 0.0
        %3290 = vmatpush1.msra.mxu0 0.0
        %3291 = vmatprep.subr.mxu0 0.0
        %3292 = vmatpush1.msra.mxu0 0.0
        %3293 = vmatprep.subr.mxu0 0.0
        %3294 = vmatpush1.msra.mxu0 0.0
        %3295 = vmatprep.subr.mxu0 0.0
        %3296 = vmatpush1.msra.mxu0 0.0
        %3297 = vmatprep.mubr.f32.mxu0 0.0
        %v3298 = vand.u32 %v2974, 4294901760
        %v3299 = vsub.f32 %v2974, %v3298
        %v3300 = vand.u32 %v3299, 4294901760
        %3301 = vmatmul.mubr.f32.gmra.mrb[0].mxu0 %v3300
        %v3302 = vpop.f32.mrb[0].mxu0
        %v3303 = vadd.f32 %v3225, %v3302
        %v3304 = vpop.f32.mrb[0].mxu0
        %v3305 = vadd.f32 %v3227, %v3304
        %3306 = vdwg.mxu0
        %v3307 = vand.u32 %v2966, 4294901760
        %v3308 = vsub.f32 %v2966, %v3307
        %v3309 = vand.u32 %v3308, 4294901760
        %3310 = vmatprep.subr.mxu0 %v3309
        %v3311 = vand.u32 %v2965, 4294901760
        %v3312 = vsub.f32 %v2965, %v3311
        %v3313 = vand.u32 %v3312, 4294901760
        %3314 = vmatpush1.msra.mxu0 %v3313
        %v3315 = vand.u32 %v2968, 4294901760
        %v3316 = vsub.f32 %v2968, %v3315
        %v3317 = vand.u32 %v3316, 4294901760
        %3318 = vmatprep.subr.mxu0 %v3317
        %v3319 = vand.u32 %v2967, 4294901760
        %v3320 = vsub.f32 %v2967, %v3319
        %v3321 = vand.u32 %v3320, 4294901760
        %3322 = vmatpush1.msra.mxu0 %v3321
        %3323 = vmatprep.subr.mxu0 0.0
        %3324 = vmatpush1.msra.mxu0 0.0
        %3325 = vmatprep.subr.mxu0 0.0
        %3326 = vmatpush1.msra.mxu0 0.0
        %3327 = vmatprep.subr.mxu0 0.0
        %3328 = vmatpush1.msra.mxu0 0.0
        %3329 = vmatprep.subr.mxu0 0.0
        %3330 = vmatpush1.msra.mxu0 0.0
        %3331 = vmatprep.subr.mxu0 0.0
        %3332 = vmatpush1.msra.mxu0 0.0
        %3333 = vmatprep.subr.mxu0 0.0
        %3334 = vmatpush1.msra.mxu0 0.0
        %3335 = vmatprep.subr.mxu0 0.0
        %3336 = vmatpush1.msra.mxu0 0.0
        %3337 = vmatprep.subr.mxu0 0.0
        %3338 = vmatpush1.msra.mxu0 0.0
        %3339 = vmatprep.subr.mxu0 0.0
        %3340 = vmatpush1.msra.mxu0 0.0
        %3341 = vmatprep.subr.mxu0 0.0
        %3342 = vmatpush1.msra.mxu0 0.0
        %3343 = vmatprep.subr.mxu0 0.0
        %3344 = vmatpush1.msra.mxu0 0.0
        %3345 = vmatprep.subr.mxu0 0.0
        %3346 = vmatpush1.msra.mxu0 0.0
        %3347 = vmatprep.subr.mxu0 0.0
        %3348 = vmatpush1.msra.mxu0 0.0
        %3349 = vmatprep.subr.mxu0 0.0
        %3350 = vmatpush1.msra.mxu0 0.0
        %3351 = vmatprep.subr.mxu0 0.0
        %3352 = vmatpush1.msra.mxu0 0.0
        %3353 = vmatprep.subr.mxu0 0.0
        %3354 = vmatpush1.msra.mxu0 0.0
        %3355 = vmatprep.subr.mxu0 0.0
        %3356 = vmatpush1.msra.mxu0 0.0
        %3357 = vmatprep.subr.mxu0 0.0
        %3358 = vmatpush1.msra.mxu0 0.0
        %3359 = vmatprep.subr.mxu0 0.0
        %3360 = vmatpush1.msra.mxu0 0.0
        %3361 = vmatprep.subr.mxu0 0.0
        %3362 = vmatpush1.msra.mxu0 0.0
        %3363 = vmatprep.subr.mxu0 0.0
        %3364 = vmatpush1.msra.mxu0 0.0
        %3365 = vmatprep.subr.mxu0 0.0
        %3366 = vmatpush1.msra.mxu0 0.0
        %3367 = vmatprep.subr.mxu0 0.0
        %3368 = vmatpush1.msra.mxu0 0.0
        %3369 = vmatprep.subr.mxu0 0.0
        %3370 = vmatpush1.msra.mxu0 0.0
        %3371 = vmatprep.subr.mxu0 0.0
        %3372 = vmatpush1.msra.mxu0 0.0
        %3373 = vmatprep.subr.mxu0 0.0
        %3374 = vmatpush1.msra.mxu0 0.0
        %3375 = vmatprep.subr.mxu0 0.0
        %3376 = vmatpush1.msra.mxu0 0.0
        %3377 = vmatprep.subr.mxu0 0.0
        %3378 = vmatpush1.msra.mxu0 0.0
        %3379 = vmatprep.subr.mxu0 0.0
        %3380 = vmatpush1.msra.mxu0 0.0
        %3381 = vmatprep.subr.mxu0 0.0
        %3382 = vmatpush1.msra.mxu0 0.0
        %3383 = vmatprep.mubr.f32.mxu0 0.0
        %v3384 = vand.u32 %v2974, 4294901760
        %3385 = vmatmul.mubr.f32.gmra.mrb[0].mxu0 %v3384
        %v3386 = vpop.f32.mrb[0].mxu0
        %v3387 = vadd.f32 %v3303, %v3386
        %v3388 = vpop.f32.mrb[0].mxu0
        %v3389 = vadd.f32 %v3305, %v3388
        %3390 = vdwg.mxu0
        %v3391 = vand.u32 %v2966, 4294901760
        %3392 = vmatprep.subr.mxu0 %v3391
        %v3393 = vand.u32 %v2965, 4294901760
        %3394 = vmatpush1.msra.mxu0 %v3393
        %v3395 = vand.u32 %v2968, 4294901760
        %3396 = vmatprep.subr.mxu0 %v3395
        %v3397 = vand.u32 %v2967, 4294901760
        %3398 = vmatpush1.msra.mxu0 %v3397
        %3399 = vmatprep.subr.mxu0 0.0
        %3400 = vmatpush1.msra.mxu0 0.0
        %3401 = vmatprep.subr.mxu0 0.0
        %3402 = vmatpush1.msra.mxu0 0.0
        %3403 = vmatprep.subr.mxu0 0.0
        %3404 = vmatpush1.msra.mxu0 0.0
        %3405 = vmatprep.subr.mxu0 0.0
        %3406 = vmatpush1.msra.mxu0 0.0
        %3407 = vmatprep.subr.mxu0 0.0
        %3408 = vmatpush1.msra.mxu0 0.0
        %3409 = vmatprep.subr.mxu0 0.0
        %3410 = vmatpush1.msra.mxu0 0.0
        %3411 = vmatprep.subr.mxu0 0.0
        %3412 = vmatpush1.msra.mxu0 0.0
        %3413 = vmatprep.subr.mxu0 0.0
        %3414 = vmatpush1.msra.mxu0 0.0
        %3415 = vmatprep.subr.mxu0 0.0
        %3416 = vmatpush1.msra.mxu0 0.0
        %3417 = vmatprep.subr.mxu0 0.0
        %3418 = vmatpush1.msra.mxu0 0.0
        %3419 = vmatprep.subr.mxu0 0.0
        %3420 = vmatpush1.msra.mxu0 0.0
        %3421 = vmatprep.subr.mxu0 0.0
        %3422 = vmatpush1.msra.mxu0 0.0
        %3423 = vmatprep.subr.mxu0 0.0
        %3424 = vmatpush1.msra.mxu0 0.0
        %3425 = vmatprep.subr.mxu0 0.0
        %3426 = vmatpush1.msra.mxu0 0.0
        %3427 = vmatprep.subr.mxu0 0.0
        %3428 = vmatpush1.msra.mxu0 0.0
        %3429 = vmatprep.subr.mxu0 0.0
        %3430 = vmatpush1.msra.mxu0 0.0
        %3431 = vmatprep.subr.mxu0 0.0
        %3432 = vmatpush1.msra.mxu0 0.0
        %3433 = vmatprep.subr.mxu0 0.0
        %3434 = vmatpush1.msra.mxu0 0.0
        %3435 = vmatprep.subr.mxu0 0.0
        %3436 = vmatpush1.msra.mxu0 0.0
        %3437 = vmatprep.subr.mxu0 0.0
        %3438 = vmatpush1.msra.mxu0 0.0
        %3439 = vmatprep.subr.mxu0 0.0
        %3440 = vmatpush1.msra.mxu0 0.0
        %3441 = vmatprep.subr.mxu0 0.0
        %3442 = vmatpush1.msra.mxu0 0.0
        %3443 = vmatprep.subr.mxu0 0.0
        %3444 = vmatpush1.msra.mxu0 0.0
        %3445 = vmatprep.subr.mxu0 0.0
        %3446 = vmatpush1.msra.mxu0 0.0
        %3447 = vmatprep.subr.mxu0 0.0
        %3448 = vmatpush1.msra.mxu0 0.0
        %3449 = vmatprep.subr.mxu0 0.0
        %3450 = vmatpush1.msra.mxu0 0.0
        %3451 = vmatprep.subr.mxu0 0.0
        %3452 = vmatpush1.msra.mxu0 0.0
        %3453 = vmatprep.subr.mxu0 0.0
        %3454 = vmatpush1.msra.mxu0 0.0
        %3455 = vmatprep.subr.mxu0 0.0
        %3456 = vmatpush1.msra.mxu0 0.0
        %3457 = vmatprep.subr.mxu0 0.0
        %3458 = vmatpush1.msra.mxu0 0.0
        %3459 = vmatprep.mubr.f32.mxu0 0.0
        %v3460 = vand.u32 %v2974, 4294901760
        %3461 = vmatmul.mubr.f32.gmra.mrb[0].mxu0 %v3460
        %v3462 = vpop.f32.mrb[0].mxu0
        %v3463 = vadd.f32 %v3387, %v3462
        %v3464 = vpop.f32.mrb[0].mxu0
        %v3465 = vadd.f32 %v3389, %v3464
        %3466 = vdwg.mxu0
        %vm3467 = vcmp.gt.f32.partialorder %v3463, 0.0
        %vm3468 = vcmp.gt.f32.partialorder %v3465, 0.0
        %v3469 = vmul.f32 %v3463, 0.01
        %v3470 = vmul.f32 %v3465, 0.01
        %v3471 = vsel %vm3467, %v3463, %v3469
        %v3472 = vsel %vm3468, %v3465, %v3470
        %3474 = vset.pattern.permute.xlu0 16
        %3475 = vperm.xlu0 %3474, %v257
        %v3476 = vpop.permute.xlu0 %3475
        %vm3478 = vcmask 64512
        %v3479 = vsel %vm3478, %v257, 0
        %v3481 = vand.u32 %v3472, 4294901760
        %3482 = vmatprep.subr.mxu0 %v3481
        %v3483 = vand.u32 %v3471, 4294901760
        %3484 = vmatpush1.msra.mxu0 %v3483
        %3485 = vmatprep.subr.mxu0 0.0
        %3486 = vmatpush1.msra.mxu0 0.0
        %3487 = vmatprep.subr.mxu0 0.0
        %3488 = vmatpush1.msra.mxu0 0.0
        %3489 = vmatprep.subr.mxu0 0.0
        %3490 = vmatpush1.msra.mxu0 0.0
        %3491 = vmatprep.subr.mxu0 0.0
        %3492 = vmatpush1.msra.mxu0 0.0
        %3493 = vmatprep.subr.mxu0 0.0
        %3494 = vmatpush1.msra.mxu0 0.0
        %3495 = vmatprep.subr.mxu0 0.0
        %3496 = vmatpush1.msra.mxu0 0.0
        %3497 = vmatprep.subr.mxu0 0.0
        %3498 = vmatpush1.msra.mxu0 0.0
        %3499 = vmatprep.subr.mxu0 0.0
        %3500 = vmatpush1.msra.mxu0 0.0
        %3501 = vmatprep.subr.mxu0 0.0
        %3502 = vmatpush1.msra.mxu0 0.0
        %3503 = vmatprep.subr.mxu0 0.0
        %3504 = vmatpush1.msra.mxu0 0.0
        %3505 = vmatprep.subr.mxu0 0.0
        %3506 = vmatpush1.msra.mxu0 0.0
        %3507 = vmatprep.subr.mxu0 0.0
        %3508 = vmatpush1.msra.mxu0 0.0
        %3509 = vmatprep.subr.mxu0 0.0
        %3510 = vmatpush1.msra.mxu0 0.0
        %3511 = vmatprep.subr.mxu0 0.0
        %3512 = vmatpush1.msra.mxu0 0.0
        %3513 = vmatprep.subr.mxu0 0.0
        %3514 = vmatpush1.msra.mxu0 0.0
        %3515 = vmatprep.subr.mxu0 0.0
        %3516 = vmatpush1.msra.mxu0 0.0
        %3517 = vmatprep.subr.mxu0 0.0
        %3518 = vmatpush1.msra.mxu0 0.0
        %3519 = vmatprep.subr.mxu0 0.0
        %3520 = vmatpush1.msra.mxu0 0.0
        %3521 = vmatprep.subr.mxu0 0.0
        %3522 = vmatpush1.msra.mxu0 0.0
        %3523 = vmatprep.subr.mxu0 0.0
        %3524 = vmatpush1.msra.mxu0 0.0
        %3525 = vmatprep.subr.mxu0 0.0
        %3526 = vmatpush1.msra.mxu0 0.0
        %3527 = vmatprep.subr.mxu0 0.0
        %3528 = vmatpush1.msra.mxu0 0.0
        %3529 = vmatprep.subr.mxu0 0.0
        %3530 = vmatpush1.msra.mxu0 0.0
        %3531 = vmatprep.subr.mxu0 0.0
        %3532 = vmatpush1.msra.mxu0 0.0
        %3533 = vmatprep.subr.mxu0 0.0
        %3534 = vmatpush1.msra.mxu0 0.0
        %3535 = vmatprep.subr.mxu0 0.0
        %3536 = vmatpush1.msra.mxu0 0.0
        %3537 = vmatprep.subr.mxu0 0.0
        %3538 = vmatpush1.msra.mxu0 0.0
        %3539 = vmatprep.subr.mxu0 0.0
        %3540 = vmatpush1.msra.mxu0 0.0
        %3541 = vmatprep.subr.mxu0 0.0
        %3542 = vmatpush1.msra.mxu0 0.0
        %3543 = vmatprep.subr.mxu0 0.0
        %3544 = vmatpush1.msra.mxu0 0.0
        %3545 = vmatprep.subr.mxu0 0.0
        %3546 = vmatpush1.msra.mxu0 0.0
        %3547 = vmatprep.mubr.f32.mxu0 0.0
        %v3548 = vand.u32 %v3479, 4294901760
        %v3549 = vsub.f32 %v3479, %v3548
        %v3550 = vand.u32 %v3549, 4294901760
        %v3551 = vsub.f32 %v3549, %v3550
        %v3552 = vand.u32 %v3551, 4294901760
        %3553 = vmatmul.mubr.f32.gmra.mrb[0].mxu0 %v3552
        %v3554 = vpop.f32.mrb[0].mxu0
        %v3555 = vadd.f32 %v3476, %v3554
        %v3556 = vpop.f32.mrb[0].mxu0
        %v3557 = vadd.f32 %v3476, %v3556
        %3558 = vdwg.mxu0
        %v3559 = vand.u32 %v3472, 4294901760
        %v3560 = vsub.f32 %v3472, %v3559
        %v3561 = vand.u32 %v3560, 4294901760
        %v3562 = vsub.f32 %v3560, %v3561
        %v3563 = vand.u32 %v3562, 4294901760
        %3564 = vmatprep.subr.mxu0 %v3563
        %v3565 = vand.u32 %v3471, 4294901760
        %v3566 = vsub.f32 %v3471, %v3565
        %v3567 = vand.u32 %v3566, 4294901760
        %v3568 = vsub.f32 %v3566, %v3567
        %v3569 = vand.u32 %v3568, 4294901760
        %3570 = vmatpush1.msra.mxu0 %v3569
        %3571 = vmatprep.subr.mxu0 0.0
        %3572 = vmatpush1.msra.mxu0 0.0
        %3573 = vmatprep.subr.mxu0 0.0
        %3574 = vmatpush1.msra.mxu0 0.0
        %3575 = vmatprep.subr.mxu0 0.0
        %3576 = vmatpush1.msra.mxu0 0.0
        %3577 = vmatprep.subr.mxu0 0.0
        %3578 = vmatpush1.msra.mxu0 0.0
        %3579 = vmatprep.subr.mxu0 0.0
        %3580 = vmatpush1.msra.mxu0 0.0
        %3581 = vmatprep.subr.mxu0 0.0
        %3582 = vmatpush1.msra.mxu0 0.0
        %3583 = vmatprep.subr.mxu0 0.0
        %3584 = vmatpush1.msra.mxu0 0.0
        %3585 = vmatprep.subr.mxu0 0.0
        %3586 = vmatpush1.msra.mxu0 0.0
        %3587 = vmatprep.subr.mxu0 0.0
        %3588 = vmatpush1.msra.mxu0 0.0
        %3589 = vmatprep.subr.mxu0 0.0
        %3590 = vmatpush1.msra.mxu0 0.0
        %3591 = vmatprep.subr.mxu0 0.0
        %3592 = vmatpush1.msra.mxu0 0.0
        %3593 = vmatprep.subr.mxu0 0.0
        %3594 = vmatpush1.msra.mxu0 0.0
        %3595 = vmatprep.subr.mxu0 0.0
        %3596 = vmatpush1.msra.mxu0 0.0
        %3597 = vmatprep.subr.mxu0 0.0
        %3598 = vmatpush1.msra.mxu0 0.0
        %3599 = vmatprep.subr.mxu0 0.0
        %3600 = vmatpush1.msra.mxu0 0.0
        %3601 = vmatprep.subr.mxu0 0.0
        %3602 = vmatpush1.msra.mxu0 0.0
        %3603 = vmatprep.subr.mxu0 0.0
        %3604 = vmatpush1.msra.mxu0 0.0
        %3605 = vmatprep.subr.mxu0 0.0
        %3606 = vmatpush1.msra.mxu0 0.0
        %3607 = vmatprep.subr.mxu0 0.0
        %3608 = vmatpush1.msra.mxu0 0.0
        %3609 = vmatprep.subr.mxu0 0.0
        %3610 = vmatpush1.msra.mxu0 0.0
        %3611 = vmatprep.subr.mxu0 0.0
        %3612 = vmatpush1.msra.mxu0 0.0
        %3613 = vmatprep.subr.mxu0 0.0
        %3614 = vmatpush1.msra.mxu0 0.0
        %3615 = vmatprep.subr.mxu0 0.0
        %3616 = vmatpush1.msra.mxu0 0.0
        %3617 = vmatprep.subr.mxu0 0.0
        %3618 = vmatpush1.msra.mxu0 0.0
        %3619 = vmatprep.subr.mxu0 0.0
        %3620 = vmatpush1.msra.mxu0 0.0
        %3621 = vmatprep.subr.mxu0 0.0
        %3622 = vmatpush1.msra.mxu0 0.0
        %3623 = vmatprep.subr.mxu0 0.0
        %3624 = vmatpush1.msra.mxu0 0.0
        %3625 = vmatprep.subr.mxu0 0.0
        %3626 = vmatpush1.msra.mxu0 0.0
        %3627 = vmatprep.subr.mxu0 0.0
        %3628 = vmatpush1.msra.mxu0 0.0
        %3629 = vmatprep.subr.mxu0 0.0
        %3630 = vmatpush1.msra.mxu0 0.0
        %3631 = vmatprep.subr.mxu0 0.0
        %3632 = vmatpush1.msra.mxu0 0.0
        %3633 = vmatprep.mubr.f32.mxu0 0.0
        %v3634 = vand.u32 %v3479, 4294901760
        %3635 = vmatmul.mubr.f32.gmra.mrb[0].mxu0 %v3634
        %v3636 = vpop.f32.mrb[0].mxu0
        %v3637 = vadd.f32 %v3555, %v3636
        %v3638 = vpop.f32.mrb[0].mxu0
        %v3639 = vadd.f32 %v3557, %v3638
        %3640 = vdwg.mxu0
        %v3641 = vand.u32 %v3472, 4294901760
        %v3642 = vsub.f32 %v3472, %v3641
        %3643 = vmatprep.subr.mxu0 %v3642
        %v3644 = vand.u32 %v3471, 4294901760
        %v3645 = vsub.f32 %v3471, %v3644
        %3646 = vmatpush1.msra.mxu0 %v3645
        %3647 = vmatprep.subr.mxu0 0.0
        %3648 = vmatpush1.msra.mxu0 0.0
        %3649 = vmatprep.subr.mxu0 0.0
        %3650 = vmatpush1.msra.mxu0 0.0
        %3651 = vmatprep.subr.mxu0 0.0
        %3652 = vmatpush1.msra.mxu0 0.0
        %3653 = vmatprep.subr.mxu0 0.0
        %3654 = vmatpush1.msra.mxu0 0.0
        %3655 = vmatprep.subr.mxu0 0.0
        %3656 = vmatpush1.msra.mxu0 0.0
        %3657 = vmatprep.subr.mxu0 0.0
        %3658 = vmatpush1.msra.mxu0 0.0
        %3659 = vmatprep.subr.mxu0 0.0
        %3660 = vmatpush1.msra.mxu0 0.0
        %3661 = vmatprep.subr.mxu0 0.0
        %3662 = vmatpush1.msra.mxu0 0.0
        %3663 = vmatprep.subr.mxu0 0.0
        %3664 = vmatpush1.msra.mxu0 0.0
        %3665 = vmatprep.subr.mxu0 0.0
        %3666 = vmatpush1.msra.mxu0 0.0
        %3667 = vmatprep.subr.mxu0 0.0
        %3668 = vmatpush1.msra.mxu0 0.0
        %3669 = vmatprep.subr.mxu0 0.0
        %3670 = vmatpush1.msra.mxu0 0.0
        %3671 = vmatprep.subr.mxu0 0.0
        %3672 = vmatpush1.msra.mxu0 0.0
        %3673 = vmatprep.subr.mxu0 0.0
        %3674 = vmatpush1.msra.mxu0 0.0
        %3675 = vmatprep.subr.mxu0 0.0
        %3676 = vmatpush1.msra.mxu0 0.0
        %3677 = vmatprep.subr.mxu0 0.0
        %3678 = vmatpush1.msra.mxu0 0.0
        %3679 = vmatprep.subr.mxu0 0.0
        %3680 = vmatpush1.msra.mxu0 0.0
        %3681 = vmatprep.subr.mxu0 0.0
        %3682 = vmatpush1.msra.mxu0 0.0
        %3683 = vmatprep.subr.mxu0 0.0
        %3684 = vmatpush1.msra.mxu0 0.0
        %3685 = vmatprep.subr.mxu0 0.0
        %3686 = vmatpush1.msra.mxu0 0.0
        %3687 = vmatprep.subr.mxu0 0.0
        %3688 = vmatpush1.msra.mxu0 0.0
        %3689 = vmatprep.subr.mxu0 0.0
        %3690 = vmatpush1.msra.mxu0 0.0
        %3691 = vmatprep.subr.mxu0 0.0
        %3692 = vmatpush1.msra.mxu0 0.0
        %3693 = vmatprep.subr.mxu0 0.0
        %3694 = vmatpush1.msra.mxu0 0.0
        %3695 = vmatprep.subr.mxu0 0.0
        %3696 = vmatpush1.msra.mxu0 0.0
        %3697 = vmatprep.subr.mxu0 0.0
        %3698 = vmatpush1.msra.mxu0 0.0
        %3699 = vmatprep.subr.mxu0 0.0
        %3700 = vmatpush1.msra.mxu0 0.0
        %3701 = vmatprep.subr.mxu0 0.0
        %3702 = vmatpush1.msra.mxu0 0.0
        %3703 = vmatprep.subr.mxu0 0.0
        %3704 = vmatpush1.msra.mxu0 0.0
        %3705 = vmatprep.subr.mxu0 0.0
        %3706 = vmatpush1.msra.mxu0 0.0
        %3707 = vmatprep.subr.mxu0 0.0
        %3708 = vmatpush1.msra.mxu0 0.0
        %3709 = vmatprep.mubr.f32.mxu0 0.0
        %v3710 = vand.u32 %v3479, 4294901760
        %v3711 = vsub.f32 %v3479, %v3710
        %3712 = vmatmul.mubr.f32.gmra.mrb[0].mxu0 %v3711
        %v3713 = vpop.f32.mrb[0].mxu0
        %v3714 = vadd.f32 %v3637, %v3713
        %v3715 = vpop.f32.mrb[0].mxu0
        %v3716 = vadd.f32 %v3639, %v3715
        %3717 = vdwg.mxu0
        %v3718 = vand.u32 %v3472, 4294901760
        %3719 = vmatprep.subr.mxu0 %v3718
        %v3720 = vand.u32 %v3471, 4294901760
        %3721 = vmatpush1.msra.mxu0 %v3720
        %3722 = vmatprep.subr.mxu0 0.0
        %3723 = vmatpush1.msra.mxu0 0.0
        %3724 = vmatprep.subr.mxu0 0.0
        %3725 = vmatpush1.msra.mxu0 0.0
        %3726 = vmatprep.subr.mxu0 0.0
        %3727 = vmatpush1.msra.mxu0 0.0
        %3728 = vmatprep.subr.mxu0 0.0
        %3729 = vmatpush1.msra.mxu0 0.0
        %3730 = vmatprep.subr.mxu0 0.0
        %3731 = vmatpush1.msra.mxu0 0.0
        %3732 = vmatprep.subr.mxu0 0.0
        %3733 = vmatpush1.msra.mxu0 0.0
        %3734 = vmatprep.subr.mxu0 0.0
        %3735 = vmatpush1.msra.mxu0 0.0
        %3736 = vmatprep.subr.mxu0 0.0
        %3737 = vmatpush1.msra.mxu0 0.0
        %3738 = vmatprep.subr.mxu0 0.0
        %3739 = vmatpush1.msra.mxu0 0.0
        %3740 = vmatprep.subr.mxu0 0.0
        %3741 = vmatpush1.msra.mxu0 0.0
        %3742 = vmatprep.subr.mxu0 0.0
        %3743 = vmatpush1.msra.mxu0 0.0
        %3744 = vmatprep.subr.mxu0 0.0
        %3745 = vmatpush1.msra.mxu0 0.0
        %3746 = vmatprep.subr.mxu0 0.0
        %3747 = vmatpush1.msra.mxu0 0.0
        %3748 = vmatprep.subr.mxu0 0.0
        %3749 = vmatpush1.msra.mxu0 0.0
        %3750 = vmatprep.subr.mxu0 0.0
        %3751 = vmatpush1.msra.mxu0 0.0
        %3752 = vmatprep.subr.mxu0 0.0
        %3753 = vmatpush1.msra.mxu0 0.0
        %3754 = vmatprep.subr.mxu0 0.0
        %3755 = vmatpush1.msra.mxu0 0.0
        %3756 = vmatprep.subr.mxu0 0.0
        %3757 = vmatpush1.msra.mxu0 0.0
        %3758 = vmatprep.subr.mxu0 0.0
        %3759 = vmatpush1.msra.mxu0 0.0
        %3760 = vmatprep.subr.mxu0 0.0
        %3761 = vmatpush1.msra.mxu0 0.0
        %3762 = vmatprep.subr.mxu0 0.0
        %3763 = vmatpush1.msra.mxu0 0.0
        %3764 = vmatprep.subr.mxu0 0.0
        %3765 = vmatpush1.msra.mxu0 0.0
        %3766 = vmatprep.subr.mxu0 0.0
        %3767 = vmatpush1.msra.mxu0 0.0
        %3768 = vmatprep.subr.mxu0 0.0
        %3769 = vmatpush1.msra.mxu0 0.0
        %3770 = vmatprep.subr.mxu0 0.0
        %3771 = vmatpush1.msra.mxu0 0.0
        %3772 = vmatprep.subr.mxu0 0.0
        %3773 = vmatpush1.msra.mxu0 0.0
        %3774 = vmatprep.subr.mxu0 0.0
        %3775 = vmatpush1.msra.mxu0 0.0
        %3776 = vmatprep.subr.mxu0 0.0
        %3777 = vmatpush1.msra.mxu0 0.0
        %3778 = vmatprep.subr.mxu0 0.0
        %3779 = vmatpush1.msra.mxu0 0.0
        %3780 = vmatprep.subr.mxu0 0.0
        %3781 = vmatpush1.msra.mxu0 0.0
        %3782 = vmatprep.subr.mxu0 0.0
        %3783 = vmatpush1.msra.mxu0 0.0
        %3784 = vmatprep.mubr.f32.mxu0 0.0
        %v3785 = vand.u32 %v3479, 4294901760
        %v3786 = vsub.f32 %v3479, %v3785
        %v3787 = vand.u32 %v3786, 4294901760
        %3788 = vmatmul.mubr.f32.gmra.mrb[0].mxu0 %v3787
        %v3789 = vpop.f32.mrb[0].mxu0
        %v3790 = vadd.f32 %v3714, %v3789
        %v3791 = vpop.f32.mrb[0].mxu0
        %v3792 = vadd.f32 %v3716, %v3791
        %3793 = vdwg.mxu0
        %v3794 = vand.u32 %v3472, 4294901760
        %v3795 = vsub.f32 %v3472, %v3794
        %v3796 = vand.u32 %v3795, 4294901760
        %3797 = vmatprep.subr.mxu0 %v3796
        %v3798 = vand.u32 %v3471, 4294901760
        %v3799 = vsub.f32 %v3471, %v3798
        %v3800 = vand.u32 %v3799, 4294901760
        %3801 = vmatpush1.msra.mxu0 %v3800
        %3802 = vmatprep.subr.mxu0 0.0
        %3803 = vmatpush1.msra.mxu0 0.0
        %3804 = vmatprep.subr.mxu0 0.0
        %3805 = vmatpush1.msra.mxu0 0.0
        %3806 = vmatprep.subr.mxu0 0.0
        %3807 = vmatpush1.msra.mxu0 0.0
        %3808 = vmatprep.subr.mxu0 0.0
        %3809 = vmatpush1.msra.mxu0 0.0
        %3810 = vmatprep.subr.mxu0 0.0
        %3811 = vmatpush1.msra.mxu0 0.0
        %3812 = vmatprep.subr.mxu0 0.0
        %3813 = vmatpush1.msra.mxu0 0.0
        %3814 = vmatprep.subr.mxu0 0.0
        %3815 = vmatpush1.msra.mxu0 0.0
        %3816 = vmatprep.subr.mxu0 0.0
        %3817 = vmatpush1.msra.mxu0 0.0
        %3818 = vmatprep.subr.mxu0 0.0
        %3819 = vmatpush1.msra.mxu0 0.0
        %3820 = vmatprep.subr.mxu0 0.0
        %3821 = vmatpush1.msra.mxu0 0.0
        %3822 = vmatprep.subr.mxu0 0.0
        %3823 = vmatpush1.msra.mxu0 0.0
        %3824 = vmatprep.subr.mxu0 0.0
        %3825 = vmatpush1.msra.mxu0 0.0
        %3826 = vmatprep.subr.mxu0 0.0
        %3827 = vmatpush1.msra.mxu0 0.0
        %3828 = vmatprep.subr.mxu0 0.0
        %3829 = vmatpush1.msra.mxu0 0.0
        %3830 = vmatprep.subr.mxu0 0.0
        %3831 = vmatpush1.msra.mxu0 0.0
        %3832 = vmatprep.subr.mxu0 0.0
        %3833 = vmatpush1.msra.mxu0 0.0
        %3834 = vmatprep.subr.mxu0 0.0
        %3835 = vmatpush1.msra.mxu0 0.0
        %3836 = vmatprep.subr.mxu0 0.0
        %3837 = vmatpush1.msra.mxu0 0.0
        %3838 = vmatprep.subr.mxu0 0.0
        %3839 = vmatpush1.msra.mxu0 0.0
        %3840 = vmatprep.subr.mxu0 0.0
        %3841 = vmatpush1.msra.mxu0 0.0
        %3842 = vmatprep.subr.mxu0 0.0
        %3843 = vmatpush1.msra.mxu0 0.0
        %3844 = vmatprep.subr.mxu0 0.0
        %3845 = vmatpush1.msra.mxu0 0.0
        %3846 = vmatprep.subr.mxu0 0.0
        %3847 = vmatpush1.msra.mxu0 0.0
        %3848 = vmatprep.subr.mxu0 0.0
        %3849 = vmatpush1.msra.mxu0 0.0
        %3850 = vmatprep.subr.mxu0 0.0
        %3851 = vmatpush1.msra.mxu0 0.0
        %3852 = vmatprep.subr.mxu0 0.0
        %3853 = vmatpush1.msra.mxu0 0.0
        %3854 = vmatprep.subr.mxu0 0.0
        %3855 = vmatpush1.msra.mxu0 0.0
        %3856 = vmatprep.subr.mxu0 0.0
        %3857 = vmatpush1.msra.mxu0 0.0
        %3858 = vmatprep.subr.mxu0 0.0
        %3859 = vmatpush1.msra.mxu0 0.0
        %3860 = vmatprep.subr.mxu0 0.0
        %3861 = vmatpush1.msra.mxu0 0.0
        %3862 = vmatprep.subr.mxu0 0.0
        %3863 = vmatpush1.msra.mxu0 0.0
        %3864 = vmatprep.mubr.f32.mxu0 0.0
        %v3865 = vand.u32 %v3479, 4294901760
        %3866 = vmatmul.mubr.f32.gmra.mrb[0].mxu0 %v3865
        %v3867 = vpop.f32.mrb[0].mxu0
        %v3868 = vadd.f32 %v3790, %v3867
        %v3869 = vpop.f32.mrb[0].mxu0
        %v3870 = vadd.f32 %v3792, %v3869
        %3871 = vdwg.mxu0
        %v3872 = vand.u32 %v3472, 4294901760
        %3873 = vmatprep.subr.mxu0 %v3872
        %v3874 = vand.u32 %v3471, 4294901760
        %3875 = vmatpush1.msra.mxu0 %v3874
        %3876 = vmatprep.subr.mxu0 0.0
        %3877 = vmatpush1.msra.mxu0 0.0
        %3878 = vmatprep.subr.mxu0 0.0
        %3879 = vmatpush1.msra.mxu0 0.0
        %3880 = vmatprep.subr.mxu0 0.0
        %3881 = vmatpush1.msra.mxu0 0.0
        %3882 = vmatprep.subr.mxu0 0.0
        %3883 = vmatpush1.msra.mxu0 0.0
        %3884 = vmatprep.subr.mxu0 0.0
        %3885 = vmatpush1.msra.mxu0 0.0
        %3886 = vmatprep.subr.mxu0 0.0
        %3887 = vmatpush1.msra.mxu0 0.0
        %3888 = vmatprep.subr.mxu0 0.0
        %3889 = vmatpush1.msra.mxu0 0.0
        %3890 = vmatprep.subr.mxu0 0.0
        %3891 = vmatpush1.msra.mxu0 0.0
        %3892 = vmatprep.subr.mxu0 0.0
        %3893 = vmatpush1.msra.mxu0 0.0
        %3894 = vmatprep.subr.mxu0 0.0
        %3895 = vmatpush1.msra.mxu0 0.0
        %3896 = vmatprep.subr.mxu0 0.0
        %3897 = vmatpush1.msra.mxu0 0.0
        %3898 = vmatprep.subr.mxu0 0.0
        %3899 = vmatpush1.msra.mxu0 0.0
        %3900 = vmatprep.subr.mxu0 0.0
        %3901 = vmatpush1.msra.mxu0 0.0
        %3902 = vmatprep.subr.mxu0 0.0
        %3903 = vmatpush1.msra.mxu0 0.0
        %3904 = vmatprep.subr.mxu0 0.0
        %3905 = vmatpush1.msra.mxu0 0.0
        %3906 = vmatprep.subr.mxu0 0.0
        %3907 = vmatpush1.msra.mxu0 0.0
        %3908 = vmatprep.subr.mxu0 0.0
        %3909 = vmatpush1.msra.mxu0 0.0
        %3910 = vmatprep.subr.mxu0 0.0
        %3911 = vmatpush1.msra.mxu0 0.0
        %3912 = vmatprep.subr.mxu0 0.0
        %3913 = vmatpush1.msra.mxu0 0.0
        %3914 = vmatprep.subr.mxu0 0.0
        %3915 = vmatpush1.msra.mxu0 0.0
        %3916 = vmatprep.subr.mxu0 0.0
        %3917 = vmatpush1.msra.mxu0 0.0
        %3918 = vmatprep.subr.mxu0 0.0
        %3919 = vmatpush1.msra.mxu0 0.0
        %3920 = vmatprep.subr.mxu0 0.0
        %3921 = vmatpush1.msra.mxu0 0.0
        %3922 = vmatprep.subr.mxu0 0.0
        %3923 = vmatpush1.msra.mxu0 0.0
        %3924 = vmatprep.subr.mxu0 0.0
        %3925 = vmatpush1.msra.mxu0 0.0
        %3926 = vmatprep.subr.mxu0 0.0
        %3927 = vmatpush1.msra.mxu0 0.0
        %3928 = vmatprep.subr.mxu0 0.0
        %3929 = vmatpush1.msra.mxu0 0.0
        %3930 = vmatprep.subr.mxu0 0.0
        %3931 = vmatpush1.msra.mxu0 0.0
        %3932 = vmatprep.subr.mxu0 0.0
        %3933 = vmatpush1.msra.mxu0 0.0
        %3934 = vmatprep.subr.mxu0 0.0
        %3935 = vmatpush1.msra.mxu0 0.0
        %3936 = vmatprep.subr.mxu0 0.0
        %3937 = vmatpush1.msra.mxu0 0.0
        %3938 = vmatprep.mubr.f32.mxu0 0.0
        %v3939 = vand.u32 %v3479, 4294901760
        %3940 = vmatmul.mubr.f32.gmra.mrb[0].mxu0 %v3939
        %v3941 = vpop.f32.mrb[0].mxu0
        %v3942 = vadd.f32 %v3868, %v3941
        %v3943 = vpop.f32.mrb[0].mxu0
        %v3944 = vadd.f32 %v3870, %v3943
        %3945 = vdwg.mxu0
        %v3946 = vxor.u32 %v3942, 2147483648
        %v3947 = vxor.u32 %v3944, 2147483648
        %v3948 = vmul.f32 %v3946, 1.442695
        %v3949 = vpow.pop %v3948
        %v3950 = vmul.f32 %v3947, 1.442695
        %v3951 = vpow.pop %v3950
        %v3952 = vadd.f32 %v3949, 1.0
        %v3953 = vadd.f32 %v3951, 1.0
        %v3954 = vrcp.pop %v3952
        %v3955 = vmul.f32 1.0, %v3954
        %v3956 = vrcp.pop %v3953
        %v3957 = vmul.f32 1.0, %v3956
        %v3958 = vpack.c.bf16 %v1867, %v1867
        %v3959 = vpack.c.bf16 %v1869, %v1869
        %v3962 = vunpack.c.l.b16 %v3958
        %v3963 = vunpack.c.l.b16 %v3959
        %v3964 = vpack.c.b16 %v3963, %v3962
        %3966 = vst [vmem:[%s238] sm:$0x77] %v3964
        %v3967 = vpack.c.bf16 %v3955, %v3955
        %v3968 = vpack.c.bf16 %v3957, %v3957
        %v3971 = vunpack.c.l.b16 %v3967
        %v3972 = vunpack.c.l.b16 %v3968
        %v3973 = vpack.c.b16 %v3972, %v3971
        %v3974 = vrot.slane %v3973, 5
        %v3975 = vrot.slane %v3974, 4
        %3978 = vst [vmem:[%s238] sm:$0x88] %v3974
        %3979 = vst [vmem:[%s238 + $0x8] sm:$0x11] %v3975
        %s3980 = sand.u32 %s104, 1
        %s3981 = scalar_lea.sflag [#allocation4], %s3980
        %s3982 = sand.u32 %s104, 1
        %s3983 = smul.addr %s3982, 16
        %s3984 = scalar_lea.vmem [#allocation8], %s3983
        // Predicated region
        $region45: #{tpu_custom_call.1} parent=31 // pred_check
          %p3985 = pneg %p114
        $region46: #{tpu_custom_call.1} parent=31 // pred_check_branch
          %3987 = sbr.rel (%p3985) target = $region48
        $region47: #{tpu_custom_call.1} parent=31 // pred_region
          %s3988 = smul.u32 2, %s23
          %s3990 = ssub.s32 256, 256
          %3991 = vsyncadd %s3981, %s3990
          %s3992 = smul.addr %s3988, 64
          %s3993 = scalar_lea.hbm %s3, %s3992
          %s3994 = sshll.u32 %s3984, 4
          %s3995 = int_to_ptr.vmem [resolvable:$true] %s3994
          %4000 = dma.vmem_to_hbm [thread:$0]  %s3995, 256, %s3993, %s3981, 128, 256, 8
        $region48: #{tpu_custom_call.1} parent=31 // pred_fallthru
          _
      $region32: #{tpu_custom_call.1} parent=5 // pred_fallthru
        _
      %p4001 = scmp.le.s32.totalorder 2, %s18
      // Predicated region
      $region49: #{tpu_custom_call.1} parent=5 // pred_check
        %p4002 = pneg %p4001
      $region50: #{tpu_custom_call.1} parent=5 // pred_check_branch
        %4004 = sbr.rel (%p4002) target = $region52
      $region51: #{tpu_custom_call.1} parent=5 // pred_region
        %s4005 = ssub.s32 %s18, 2
        // Predicated region
        $region53: #{tpu_custom_call.1} parent=51 // pred_check
          %p4006 = pneg %p120
        $region54: #{tpu_custom_call.1} parent=51 // pred_check_branch
          %4008 = sbr.rel (%p4006) target = $region56
        $region55: #{tpu_custom_call.1} parent=51 // pred_region
          %s4009 = sand.u32 %s105, 1
          %s4010 = scalar_lea.sflag [#allocation4], %s4009
          %s4011 = sand.u32 %s105, 1
          %s4012 = smul.addr %s4011, 16
          %s4013 = scalar_lea.vmem [#allocation8], %s4012
          %4014 = dma.done %s4010, 256
        $region56: #{tpu_custom_call.1} parent=51 // pred_fallthru
          _
      $region52: #{tpu_custom_call.1} parent=5 // pred_fallthru
        _
    $region6: #{tpu_custom_call.1} parent=1 // loop_footer
      %s22 = sadd.s32 1, %s18
    $region7: #{tpu_custom_call.1} parent=1 // loop_footer_branch
      %17 = sbr.rel target = $region3
    $region8: #{tpu_custom_call.1} parent=1 // loop_exit
      _
    %4015 = vsyncpa [#allocation3], 1
    %s4016 = scalar_lea.sflag [#allocation3], 1
    %4017 = vsyncpa %s4016, 1
    %4018 = vsyncpa [#allocation6], 1
    %s4019 = scalar_lea.sflag [#allocation6], 1
    %4020 = vsyncpa %s4019, 1
    %4021 = vsyncpa [#allocation4], 1
    %s4022 = scalar_lea.sflag [#allocation4], 1
    %4023 = vsyncpa %s4022, 1

</llo_original>
